<compile_context>
chip_gen: v6e
topology: v6e:2x2x1
jax: 0.10.0
libtpu: 0.0.40
codegen_flags: <defaults>
</compile_context>

<pallas_src>
import functools
import math

import jax
import jax.numpy as jnp
from jax.experimental import pallas as pl
from jax.experimental.pallas import tpu as pltpu

# ------------------------- config -------------------------
DIM = 256
N_HEADS = 4
HEAD_DIM = DIM // N_HEADS            # 64
N_KV_HEADS = 2
N_KV_HEAD_REP = N_HEADS // N_KV_HEADS
FFN_DIM = 512
MAX_BATCH_SIZE = 2
MAX_SEQ_LEN = 16
NORM_EPS = 1e-5

QD = N_HEADS * HEAD_DIM              # 256
KD = N_KV_HEADS * HEAD_DIM           # 128


# ------------------------- helpers -------------------------
def _rmsnorm_f32(x, w):
    # x: (S, D) f32, w: (1, D)
    ms = jnp.mean(x * x, axis=-1, keepdims=True)
    return x * jax.lax.rsqrt(ms + NORM_EPS) * w


def _rope(x, cos_f, sin_signed):
    # x: (S, n*HEAD_DIM), interleaved (real, imag) pairs along lanes.
    # cos_f: cos repeated per pair; sin_signed: sin with (-,+) sign folded in.
    lane = jax.lax.broadcasted_iota(jnp.int32, x.shape, 1)
    even = (lane % 2) == 0
    n = x.shape[1]
    # even lanes take the lane to the right, odd lanes the lane to the left
    # (circular rolls; wraparound lanes are never selected by the parity mask).
    swapped = jnp.where(even, pltpu.roll(x, n - 1, axis=1), pltpu.roll(x, 1, axis=1))
    return x * cos_f + swapped * sin_signed


def _bf16(x):
    return x.astype(jnp.bfloat16)


# ------------------------- fused kernel -------------------------
def transformer_block_kernel(start_pos_ref,
                             x_ref, kc_in_ref, vc_in_ref, mask_ref,
                             attn_nw_ref, wqkv_ref, cos_ref, sin_ref,
                             wo_ref, ffn_nw_ref, w13_ref, w2_ref,
                             o_ref, kc_out_ref, vc_out_ref):
    # x_ref: (1,S,D)         kc/vc_in_ref: (1,Lmax,KD)   mask_ref: (S,Lmax)
    # attn_nw/ffn_nw: (1,D)  wqkv: (D,QD+2KD) bf16       cos/sin: (S,QD)
    # wo: (QD,D) bf16        w13: (D,2F) bf16            w2: (F,D) bf16
    S = x_ref.shape[1]
    sp = start_pos_ref[0]
    scale = 1.0 / math.sqrt(HEAD_DIM)

    # ---- RMSNorm + fused QKV projection + RoPE (kept in VMEM/registers) ----
    x = x_ref[0].astype(jnp.float32)                              # (S, D)
    xn = _rmsnorm_f32(x, attn_nw_ref[...])
    qkv = jnp.dot(_bf16(xn), wqkv_ref[...],
                  preferred_element_type=jnp.float32)             # (S, QD+2KD)
    cos_q = cos_ref[...]
    sin_q = sin_ref[...]
    q = _rope(qkv[:, :QD], cos_q, sin_q)                          # (S, QD)
    k = _rope(qkv[:, QD:QD + KD], cos_q[:, :KD], sin_q[:, :KD])   # (S, KD)
    v = qkv[:, QD + KD:]                                          # (S, KD)

    # ---- in-kernel KV-cache update (dynamic start_pos from SMEM) ----
    kc_out_ref[0] = kc_in_ref[0]
    vc_out_ref[0] = vc_in_ref[0]
    kc_out_ref[0, pl.ds(sp, S), :] = k
    vc_out_ref[0, pl.ds(sp, S), :] = v
    k_all = kc_out_ref[0]                                         # (Lmax, KD)
    v_all = vc_out_ref[0]

    # ---- attention over the fixed-length (masked) cache; GQA via slicing ----
    mask = mask_ref[...]                                          # (S, Lmax)
    heads = []
    for h in range(N_HEADS):
        kv = h // N_KV_HEAD_REP
        qh = q[:, h * HEAD_DIM:(h + 1) * HEAD_DIM]                # (S, HD)
        kh = k_all[:, kv * HEAD_DIM:(kv + 1) * HEAD_DIM]          # (Lmax, HD)
        vh = v_all[:, kv * HEAD_DIM:(kv + 1) * HEAD_DIM]          # (Lmax, HD)
        s = jax.lax.dot_general(_bf16(qh), _bf16(kh),
                                (((1,), (1,)), ((), ())),
                                preferred_element_type=jnp.float32) * scale
        s = s + mask                                              # f32 scores
        s = s - jnp.max(s, axis=-1, keepdims=True)
        p = jnp.exp(s)                                            # masked cols -> 0
        p = p * pl.reciprocal(jnp.sum(p, axis=-1, keepdims=True), approx=True)
        heads.append(jnp.dot(_bf16(p), _bf16(vh),
                             preferred_element_type=jnp.float32))  # (S, HD)
    attn = jnp.concatenate(heads, axis=-1)                        # (S, QD)

    # ---- single wide output projection + residual ----
    h_res = x + jnp.dot(_bf16(attn), wo_ref[...],
                        preferred_element_type=jnp.float32)

    # ---- fused RMSNorm + SwiGLU FFN + residual ----
    hn = _rmsnorm_f32(h_res, ffn_nw_ref[...])
    ab = jnp.dot(_bf16(hn), w13_ref[...],
                 preferred_element_type=jnp.float32)              # (S, 2F)
    a = ab[:, :FFN_DIM]
    b = ab[:, FFN_DIM:]
    g = a * pl.reciprocal(1.0 + jnp.exp(-a), approx=True)         # silu
    out = h_res + jnp.dot(_bf16(g * b), w2_ref[...],
                          preferred_element_type=jnp.float32)
    o_ref[0] = out.astype(o_ref.dtype)


# ------------------------- wrapper -------------------------
def _bcast(shape):
    # broadcast (replicated) operand: same block for every grid point
    return pl.BlockSpec(shape, lambda b, sp, _n=len(shape): (0,) * _n)


def transformer_block(x, start_pos, cos, sin, mask, params, cache_k, cache_v):
    """Single fused Pallas kernel; caches are explicit in/out arrays."""
    B, S, D = x.shape
    Lmax = cache_k.shape[1]
    assert B == MAX_BATCH_SIZE, "grid covers every cache row"

    # ---- host-side RoPE tables: interleave per pair + fold the sign in ----
    cos_hd = jnp.repeat(cos, 2, axis=1)                       # (S, HEAD_DIM)
    sin_hd = jnp.repeat(sin, 2, axis=1)
    sign = jnp.tile(jnp.array([-1.0, 1.0], jnp.float32), HEAD_DIM // 2)
    cos_q = jnp.tile(cos_hd, (1, N_HEADS))                    # (S, QD)
    sin_q = jnp.tile(sin_hd * sign[None, :], (1, N_HEADS))

    # pad additive mask to the full cache length (fixed shapes -> no recompile)
    pad = Lmax - mask.shape[1]
    mask_p = mask if pad == 0 else jnp.pad(
        mask, ((0, 0), (0, pad)), constant_values=-1e9)

    # flat, lane-dense KV-cache views (no GQA repeat materialized)
    kc = cache_k.reshape(MAX_BATCH_SIZE, Lmax, KD)
    vc = cache_v.reshape(MAX_BATCH_SIZE, Lmax, KD)

    start_arr = jnp.asarray([start_pos], dtype=jnp.int32)

    grid_spec = pltpu.PrefetchScalarGridSpec(
        num_scalar_prefetch=1,
        grid=(B,),
        in_specs=[
            pl.BlockSpec((1, S, D), lambda b, sp: (b, 0, 0)),        # x
            pl.BlockSpec((1, Lmax, KD), lambda b, sp: (b, 0, 0)),    # k cache in
            pl.BlockSpec((1, Lmax, KD), lambda b, sp: (b, 0, 0)),    # v cache in
            _bcast((S, Lmax)),                                        # mask
            _bcast((1, D)),                                           # attn norm w
            _bcast((D, QD + 2 * KD)),                                 # wqkv (bf16)
            _bcast((S, QD)),                                          # cos
            _bcast((S, QD)),                                          # sin (signed)
            _bcast((QD, D)),                                          # wo (bf16)
            _bcast((1, D)),                                           # ffn norm w
            _bcast((D, 2 * FFN_DIM)),                                 # w13 (bf16)
            _bcast((FFN_DIM, D)),                                     # w2 (bf16)
        ],
        out_specs=(
            pl.BlockSpec((1, S, D), lambda b, sp: (b, 0, 0)),
            pl.BlockSpec((1, Lmax, KD), lambda b, sp: (b, 0, 0)),
            pl.BlockSpec((1, Lmax, KD), lambda b, sp: (b, 0, 0)),
        ),
    )

    out, kc_new, vc_new = pl.pallas_call(
        transformer_block_kernel,
        grid_spec=grid_spec,
        out_shape=(jax.ShapeDtypeStruct((B, S, D), x.dtype),
                   jax.ShapeDtypeStruct((B, Lmax, KD), cache_k.dtype),
                   jax.ShapeDtypeStruct((B, Lmax, KD), cache_v.dtype)),
        compiler_params=pltpu.CompilerParams(
            dimension_semantics=("parallel",)),
    )(start_arr, x, kc, vc, mask_p,
      params["attn_norm_w"].reshape(1, D), params["wqkv_bf16"],
      cos_q, sin_q, params["wo_bf16"],
      params["ffn_norm_w"].reshape(1, D), params["w13_bf16"], params["w2_bf16"])

    # TODO(synk): use input_output_aliases to update the caches in place once
    # the caller donates the cache buffers (decode-loop setting).
    return (out,
            kc_new.reshape(cache_k.shape),
            vc_new.reshape(cache_v.shape))


# ------------------------- pure-JAX reference (f32) -------------------------
def ref_transformer_block(x, start_pos, cos, sin, mask, params, cache_k, cache_v):
    def rms(t, w):
        ms = jnp.mean(t.astype(jnp.float32) ** 2, axis=-1, keepdims=True)
        return t * jax.lax.rsqrt(ms + NORM_EPS) * w

    B, S, D = x.shape
    xn = rms(x, params["attn_norm_w"])
    q = (xn @ params["wq_t"]).reshape(B, S, N_HEADS, HEAD_DIM)
    k = (xn @ params["wk_t"]).reshape(B, S, N_KV_HEADS, HEAD_DIM)
    v = (xn @ params["wv_t"]).reshape(B, S, N_KV_HEADS, HEAD_DIM)

    def rope(t):
        tr = t.reshape(*t.shape[:-1], HEAD_DIM // 2, 2)
        tre, tim = tr[..., 0], tr[..., 1]
        c = cos[None, :, None, :]
        s = sin[None, :, None, :]
        return jnp.stack([tre * c - tim * s, tre * s + tim * c], axis=-1).reshape(t.shape)

    q, k = rope(q), rope(k)
    cache_k = jax.lax.dynamic_update_slice(cache_k, k, (0, start_pos, 0, 0))
    cache_v = jax.lax.dynamic_update_slice(cache_v, v, (0, start_pos, 0, 0))
    L = start_pos + S
    kf = jnp.repeat(cache_k[:B, :L], N_KV_HEAD_REP, axis=2)
    vf = jnp.repeat(cache_v[:B, :L], N_KV_HEAD_REP, axis=2)
    qt, kt, vt = (jnp.transpose(t, (0, 2, 1, 3)) for t in (q, kf, vf))
    scores = jnp.einsum("bhsd,bhld->bhsl", qt, kt) / math.sqrt(HEAD_DIM) + mask
    p = jax.nn.softmax(scores, axis=-1)
    o = jnp.einsum("bhsl,bhld->bhsd", p, vt)
    o = jnp.transpose(o, (0, 2, 1, 3)).reshape(B, S, -1)
    h = x + o @ params["wo_t"]
    hn = rms(h, params["ffn_norm_w"])
    a = hn @ params["w1_t"]
    b3 = hn @ params["w3_t"]
    return h + (a * jax.nn.sigmoid(a) * b3) @ params["w2_t"]


# ------------------------- main -------------------------
if __name__ == "__main__":
    B, S = 2, 8
    start_pos = 0
    L = start_pos + S

    key = jax.random.PRNGKey(0)
    keys = jax.random.split(key, 8)

    def w(k, shape):
        return jax.random.normal(k, shape, jnp.float32) * 0.02

    params = dict(
        wq_t=w(keys[0], (DIM, QD)),
        wk_t=w(keys[1], (DIM, KD)),
        wv_t=w(keys[2], (DIM, KD)),
        wo_t=w(keys[3], (QD, DIM)),
        w1_t=w(keys[4], (DIM, FFN_DIM)),
        w3_t=w(keys[5], (DIM, FFN_DIM)),
        w2_t=w(keys[6], (FFN_DIM, DIM)),
        attn_norm_w=jnp.ones((DIM,), jnp.float32),
        ffn_norm_w=jnp.ones((DIM,), jnp.float32),
    )
    # fused + pre-cast (bf16) weights for the Pallas kernel (one wide MXU
    # matmul each; halves weight DMA bytes vs f32)
    params["wqkv_bf16"] = jnp.concatenate(
        [params["wq_t"], params["wk_t"], params["wv_t"]], axis=1).astype(jnp.bfloat16)
    params["w13_bf16"] = jnp.concatenate(
        [params["w1_t"], params["w3_t"]], axis=1).astype(jnp.bfloat16)
    params["wo_bf16"] = params["wo_t"].astype(jnp.bfloat16)
    params["w2_bf16"] = params["w2_t"].astype(jnp.bfloat16)

    x = jax.random.normal(keys[7], (B, S, DIM), jnp.float32)

    # rotary frequencies for positions [start_pos, start_pos+S)
    inv_freq = 1.0 / (10000.0 ** (jnp.arange(0, HEAD_DIM, 2, dtype=jnp.float32) / HEAD_DIM))
    t = jnp.arange(start_pos, start_pos + S, dtype=jnp.float32)
    freqs = jnp.outer(t, inv_freq)                    # (S, HD//2)
    cos, sin = jnp.cos(freqs), jnp.sin(freqs)

    # additive causal mask (S, L)
    ii = jnp.arange(S)[:, None]
    jj = jnp.arange(L)[None, :]
    mask = jnp.where(jj <= ii + start_pos, 0.0, -1e9).astype(jnp.float32)

    cache_k = jnp.zeros((MAX_BATCH_SIZE, MAX_SEQ_LEN, N_KV_HEADS, HEAD_DIM), jnp.float32)
    cache_v = jnp.zeros((MAX_BATCH_SIZE, MAX_SEQ_LEN, N_KV_HEADS, HEAD_DIM), jnp.float32)

    out, _, _ = transformer_block(x, start_pos, cos, sin, mask, params,
                                  cache_k, cache_v)
    out = jax.block_until_ready(out)

    ref = ref_transformer_block(x, start_pos, cos, sin, mask, params,
                                cache_k, cache_v)
    ref = jax.block_until_ready(ref)

    # Looser tolerance than a pure-f32 comparison: the kernel feeds the MXU
    # bf16 operands (f32 accumulation) and uses EUP approx reciprocals.
    if not jnp.allclose(out, ref, atol=2e-2, rtol=2e-2):
        raise AssertionError(
            f"mismatch: max abs err {float(jnp.max(jnp.abs(out - ref)))}")
    print("KERNEL_OK")
</pallas_src>

<mosaic_0001>
module attributes {stable_mosaic.version = 11 : i64} {
  func.func @transformer_block_kernel(%arg0: i32, %arg1: memref<1xi32, #tpu.memory_space<smem>>, %arg2: memref<1x8x256xf32, #tpu.memory_space<vmem>>, %arg3: memref<1x16x128xf32, #tpu.memory_space<vmem>>, %arg4: memref<1x16x128xf32, #tpu.memory_space<vmem>>, %arg5: memref<8x16xf32, #tpu.memory_space<vmem>>, %arg6: memref<1x256xf32, #tpu.memory_space<vmem>>, %arg7: memref<256x512xbf16, #tpu.memory_space<vmem>>, %arg8: memref<8x256xf32, #tpu.memory_space<vmem>>, %arg9: memref<8x256xf32, #tpu.memory_space<vmem>>, %arg10: memref<256x256xbf16, #tpu.memory_space<vmem>>, %arg11: memref<1x256xf32, #tpu.memory_space<vmem>>, %arg12: memref<256x1024xbf16, #tpu.memory_space<vmem>>, %arg13: memref<512x256xbf16, #tpu.memory_space<vmem>>, %arg14: memref<1x8x256xf32, #tpu.memory_space<vmem>>, %arg15: memref<1x16x128xf32, #tpu.memory_space<vmem>>, %arg16: memref<1x16x128xf32, #tpu.memory_space<vmem>>) attributes {dimension_semantics = [#tpu.dimension_semantics<parallel>], iteration_bounds = array<i64: 2>, scalar_prefetch = 1 : i64, scratch_operands = 0 : i64, tpu.core_type = #tpu.core_type<tc>, window_params = [{transform_indices = @transform_0, window_bounds = array<i64: 1, 8, 256>}, {transform_indices = @transform_1, window_bounds = array<i64: 1, 16, 128>}, {transform_indices = @transform_2, window_bounds = array<i64: 1, 16, 128>}, {pipeline_mode = #tpu.pipeline_mode<synchronous>, transform_indices = @transform_3, window_bounds = array<i64: 8, 16>}, {pipeline_mode = #tpu.pipeline_mode<synchronous>, transform_indices = @transform_4, window_bounds = array<i64: 1, 256>}, {pipeline_mode = #tpu.pipeline_mode<synchronous>, transform_indices = @transform_5, window_bounds = array<i64: 256, 512>}, {pipeline_mode = #tpu.pipeline_mode<synchronous>, transform_indices = @transform_6, window_bounds = array<i64: 8, 256>}, {pipeline_mode = #tpu.pipeline_mode<synchronous>, transform_indices = @transform_7, window_bounds = array<i64: 8, 256>}, {pipeline_mode = #tpu.pipeline_mode<synchronous>, transform_indices = @transform_8, window_bounds = array<i64: 256, 256>}, {pipeline_mode = #tpu.pipeline_mode<synchronous>, transform_indices = @transform_9, window_bounds = array<i64: 1, 256>}, {pipeline_mode = #tpu.pipeline_mode<synchronous>, transform_indices = @transform_10, window_bounds = array<i64: 256, 1024>}, {pipeline_mode = #tpu.pipeline_mode<synchronous>, transform_indices = @transform_11, window_bounds = array<i64: 512, 256>}, {transform_indices = @transform_12, window_bounds = array<i64: 1, 8, 256>}, {transform_indices = @transform_13, window_bounds = array<i64: 1, 16, 128>}, {transform_indices = @transform_14, window_bounds = array<i64: 1, 16, 128>}]} {
    %c0 = arith.constant 0 : index
    %0 = memref.load %arg1[%c0] : memref<1xi32, #tpu.memory_space<smem>>
    %c0_0 = arith.constant 0 : index
    %c0_1 = arith.constant 0 : index
    %c0_2 = arith.constant 0 : index
    %1 = vector.load %arg2[%c0_0, %c0_1, %c0_2] : memref<1x8x256xf32, #tpu.memory_space<vmem>>, vector<1x8x256xf32>
    %2 = vector.shape_cast %1 : vector<1x8x256xf32> to vector<8x256xf32>
    %c0_3 = arith.constant 0 : index
    %c0_4 = arith.constant 0 : index
    %3 = vector.load %arg6[%c0_3, %c0_4] : memref<1x256xf32, #tpu.memory_space<vmem>>, vector<1x256xf32>
    %4 = arith.mulf %2, %2 : vector<8x256xf32>
    %cst = arith.constant dense<0.000000e+00> : vector<8xf32>
    %5 = vector.multi_reduction <add>, %4, %cst [1] : vector<8x256xf32> to vector<8xf32>
    %6 = vector.shape_cast %5 : vector<8xf32> to vector<8x1xf32>
    %cst_5 = arith.constant 2.560000e+02 : f32
    %7 = vector.broadcast %cst_5 : f32 to vector<8x1xf32>
    %8 = arith.divf %6, %7 : vector<8x1xf32>
    %cst_6 = arith.constant 9.99999974E-6 : f32
    %9 = vector.broadcast %cst_6 : f32 to vector<8x1xf32>
    %10 = arith.addf %8, %9 : vector<8x1xf32>
    %11 = math.rsqrt %10 : vector<8x1xf32>
    %12 = vector.broadcast %11 : vector<8x1xf32> to vector<8x256xf32>
    %13 = arith.mulf %2, %12 : vector<8x256xf32>
    %14 = vector.broadcast %3 : vector<1x256xf32> to vector<8x256xf32>
    %15 = arith.mulf %13, %14 : vector<8x256xf32>
    %16 = arith.truncf %15 : vector<8x256xf32> to vector<8x256xbf16>
    %c0_7 = arith.constant 0 : index
    %c0_8 = arith.constant 0 : index
    %17 = vector.load %arg7[%c0_7, %c0_8] : memref<256x512xbf16, #tpu.memory_space<vmem>>, vector<256x512xbf16>
    %cst_9 = arith.constant dense<0.000000e+00> : vector<8x512xf32>
    %18 = tpu.matmul %16, %17, %cst_9 {dimension_numbers = #tpu.dot_dimension_numbers<[1], [0], [0], [1], [0, 0, 1, 1], [], []>} : vector<8x256xbf16>, vector<256x512xbf16>, vector<8x512xf32> -> vector<8x512xf32>
    %c0_10 = arith.constant 0 : index
    %c0_11 = arith.constant 0 : index
    %19 = vector.load %arg8[%c0_10, %c0_11] : memref<8x256xf32, #tpu.memory_space<vmem>>, vector<8x256xf32>
    %c0_12 = arith.constant 0 : index
    %c0_13 = arith.constant 0 : index
    %20 = vector.load %arg9[%c0_12, %c0_13] : memref<8x256xf32, #tpu.memory_space<vmem>>, vector<8x256xf32>
    %21 = vector.extract_strided_slice %18 {offsets = [0, 0], sizes = [8, 256], strides = [1, 1]} : vector<8x512xf32> to vector<8x256xf32>
    %22 = tpu.iota {dimensions = array<i32: 1>} : vector<8x256xi32>
    %c2_i32 = arith.constant 2 : i32
    %c0_i32 = arith.constant 0 : i32
    %23 = arith.cmpi eq, %c2_i32, %c0_i32 : i32
    %c1_i32 = arith.constant 1 : i32
    %24 = arith.select %23, %c1_i32, %c2_i32 : i32
    %25 = vector.broadcast %24 : i32 to vector<8x256xi32>
    %26 = arith.remsi %22, %25 : vector<8x256xi32>
    %c0_i32_14 = arith.constant 0 : i32
    %27 = vector.broadcast %c0_i32_14 : i32 to vector<8x256xi32>
    %28 = arith.cmpi ne, %26, %27 : vector<8x256xi32>
    %c0_i32_15 = arith.constant 0 : i32
    %29 = vector.broadcast %c0_i32_15 : i32 to vector<8x256xi32>
    %30 = arith.cmpi slt, %26, %29 : vector<8x256xi32>
    %c0_i32_16 = arith.constant 0 : i32
    %31 = arith.cmpi slt, %24, %c0_i32_16 : i32
    %32 = vector.broadcast %31 : i1 to vector<8x256xi1>
    %33 = vector.broadcast %32 : vector<8x256xi1> to vector<8x256xi1>
    %34 = arith.xori %30, %33 : vector<8x256xi1>
    %35 = arith.andi %34, %28 : vector<8x256xi1>
    %36 = vector.broadcast %24 : i32 to vector<8x256xi32>
    %37 = arith.addi %26, %36 : vector<8x256xi32>
    %38 = arith.select %35, %37, %26 : vector<8x256xi1>, vector<8x256xi32>
    %c0_i32_17 = arith.constant 0 : i32
    %39 = vector.broadcast %c0_i32_17 : i32 to vector<8x256xi32>
    %40 = arith.cmpi eq, %38, %39 : vector<8x256xi32>
    %c255_i32 = arith.constant 255 : i32
    %41 = tpu.dynamic_rotate %21 by %c255_i32 dim 1 : vector<8x256xf32>, i32 -> vector<8x256xf32>
    %c1_i32_18 = arith.constant 1 : i32
    %42 = tpu.dynamic_rotate %21 by %c1_i32_18 dim 1 : vector<8x256xf32>, i32 -> vector<8x256xf32>
    %43 = arith.select %40, %41, %42 : vector<8x256xi1>, vector<8x256xf32>
    %44 = arith.mulf %21, %19 : vector<8x256xf32>
    %45 = arith.mulf %43, %20 : vector<8x256xf32>
    %46 = arith.addf %44, %45 : vector<8x256xf32>
    %47 = vector.extract_strided_slice %18 {offsets = [0, 256], sizes = [8, 128], strides = [1, 1]} : vector<8x512xf32> to vector<8x128xf32>
    %48 = vector.extract_strided_slice %19 {offsets = [0, 0], sizes = [8, 128], strides = [1, 1]} : vector<8x256xf32> to vector<8x128xf32>
    %49 = vector.extract_strided_slice %20 {offsets = [0, 0], sizes = [8, 128], strides = [1, 1]} : vector<8x256xf32> to vector<8x128xf32>
    %50 = tpu.iota {dimensions = array<i32: 1>} : vector<8x128xi32>
    %c2_i32_19 = arith.constant 2 : i32
    %c0_i32_20 = arith.constant 0 : i32
    %51 = arith.cmpi eq, %c2_i32_19, %c0_i32_20 : i32
    %c1_i32_21 = arith.constant 1 : i32
    %52 = arith.select %51, %c1_i32_21, %c2_i32_19 : i32
    %53 = vector.broadcast %52 : i32 to vector<8x128xi32>
    %54 = arith.remsi %50, %53 : vector<8x128xi32>
    %c0_i32_22 = arith.constant 0 : i32
    %55 = vector.broadcast %c0_i32_22 : i32 to vector<8x128xi32>
    %56 = arith.cmpi ne, %54, %55 : vector<8x128xi32>
    %c0_i32_23 = arith.constant 0 : i32
    %57 = vector.broadcast %c0_i32_23 : i32 to vector<8x128xi32>
    %58 = arith.cmpi slt, %54, %57 : vector<8x128xi32>
    %c0_i32_24 = arith.constant 0 : i32
    %59 = arith.cmpi slt, %52, %c0_i32_24 : i32
    %60 = vector.broadcast %59 : i1 to vector<8x128xi1>
    %61 = vector.broadcast %60 : vector<8x128xi1> to vector<8x128xi1>
    %62 = arith.xori %58, %61 : vector<8x128xi1>
    %63 = arith.andi %62, %56 : vector<8x128xi1>
    %64 = vector.broadcast %52 : i32 to vector<8x128xi32>
    %65 = arith.addi %54, %64 : vector<8x128xi32>
    %66 = arith.select %63, %65, %54 : vector<8x128xi1>, vector<8x128xi32>
    %c0_i32_25 = arith.constant 0 : i32
    %67 = vector.broadcast %c0_i32_25 : i32 to vector<8x128xi32>
    %68 = arith.cmpi eq, %66, %67 : vector<8x128xi32>
    %c127_i32 = arith.constant 127 : i32
    %69 = tpu.dynamic_rotate %47 by %c127_i32 dim 1 : vector<8x128xf32>, i32 -> vector<8x128xf32>
    %c1_i32_26 = arith.constant 1 : i32
    %70 = tpu.dynamic_rotate %47 by %c1_i32_26 dim 1 : vector<8x128xf32>, i32 -> vector<8x128xf32>
    %71 = arith.select %68, %69, %70 : vector<8x128xi1>, vector<8x128xf32>
    %72 = arith.mulf %47, %48 : vector<8x128xf32>
    %73 = arith.mulf %71, %49 : vector<8x128xf32>
    %74 = arith.addf %72, %73 : vector<8x128xf32>
    %75 = vector.extract_strided_slice %18 {offsets = [0, 384], sizes = [8, 128], strides = [1, 1]} : vector<8x512xf32> to vector<8x128xf32>
    %c0_27 = arith.constant 0 : index
    %c0_28 = arith.constant 0 : index
    %c0_29 = arith.constant 0 : index
    %76 = vector.load %arg3[%c0_27, %c0_28, %c0_29] : memref<1x16x128xf32, #tpu.memory_space<vmem>>, vector<1x16x128xf32>
    %77 = vector.shape_cast %76 : vector<1x16x128xf32> to vector<16x128xf32>
    %c0_30 = arith.constant 0 : index
    %c0_31 = arith.constant 0 : index
    %c0_32 = arith.constant 0 : index
    %78 = vector.load %arg15[%c0_30, %c0_31, %c0_32] : memref<1x16x128xf32, #tpu.memory_space<vmem>>, vector<1x16x128xf32>
    %79 = vector.shape_cast %78 : vector<1x16x128xf32> to vector<16x128xf32>
    %80 = vector.shape_cast %77 : vector<16x128xf32> to vector<1x16x128xf32>
    tpu.vector_store %arg15[%c0_30, %c0_31, %c0_32], %80 {strides = array<i32>} : memref<1x16x128xf32, #tpu.memory_space<vmem>>, vector<1x16x128xf32>,
    %c0_33 = arith.constant 0 : index
    %c0_34 = arith.constant 0 : index
    %c0_35 = arith.constant 0 : index
    %81 = vector.load %arg4[%c0_33, %c0_34, %c0_35] : memref<1x16x128xf32, #tpu.memory_space<vmem>>, vector<1x16x128xf32>
    %82 = vector.shape_cast %81 : vector<1x16x128xf32> to vector<16x128xf32>
    %c0_36 = arith.constant 0 : index
    %c0_37 = arith.constant 0 : index
    %c0_38 = arith.constant 0 : index
    %83 = vector.load %arg16[%c0_36, %c0_37, %c0_38] : memref<1x16x128xf32, #tpu.memory_space<vmem>>, vector<1x16x128xf32>
    %84 = vector.shape_cast %83 : vector<1x16x128xf32> to vector<16x128xf32>
    %85 = vector.shape_cast %82 : vector<16x128xf32> to vector<1x16x128xf32>
    tpu.vector_store %arg16[%c0_36, %c0_37, %c0_38], %85 {strides = array<i32>} : memref<1x16x128xf32, #tpu.memory_space<vmem>>, vector<1x16x128xf32>,
    %c0_39 = arith.constant 0 : index
    %86 = arith.index_cast %0 : i32 to index
    %c0_40 = arith.constant 0 : index
    %87 = vector.load %arg15[%c0_39, %86, %c0_40] : memref<1x16x128xf32, #tpu.memory_space<vmem>>, vector<1x8x128xf32>
    %88 = vector.shape_cast %87 : vector<1x8x128xf32> to vector<8x128xf32>
    %89 = vector.shape_cast %74 : vector<8x128xf32> to vector<1x8x128xf32>
    tpu.vector_store %arg15[%c0_39, %86, %c0_40], %89 {strides = array<i32>} : memref<1x16x128xf32, #tpu.memory_space<vmem>>, vector<1x8x128xf32>,
    %c0_41 = arith.constant 0 : index
    %90 = arith.index_cast %0 : i32 to index
    %c0_42 = arith.constant 0 : index
    %91 = vector.load %arg16[%c0_41, %90, %c0_42] : memref<1x16x128xf32, #tpu.memory_space<vmem>>, vector<1x8x128xf32>
    %92 = vector.shape_cast %91 : vector<1x8x128xf32> to vector<8x128xf32>
    %93 = vector.shape_cast %75 : vector<8x128xf32> to vector<1x8x128xf32>
    tpu.vector_store %arg16[%c0_41, %90, %c0_42], %93 {strides = array<i32>} : memref<1x16x128xf32, #tpu.memory_space<vmem>>, vector<1x8x128xf32>,
    %c0_43 = arith.constant 0 : index
    %c0_44 = arith.constant 0 : index
    %c0_45 = arith.constant 0 : index
    %94 = vector.load %arg15[%c0_43, %c0_44, %c0_45] : memref<1x16x128xf32, #tpu.memory_space<vmem>>, vector<1x16x128xf32>
    %95 = vector.shape_cast %94 : vector<1x16x128xf32> to vector<16x128xf32>
    %c0_46 = arith.constant 0 : index
    %c0_47 = arith.constant 0 : index
    %c0_48 = arith.constant 0 : index
    %96 = vector.load %arg16[%c0_46, %c0_47, %c0_48] : memref<1x16x128xf32, #tpu.memory_space<vmem>>, vector<1x16x128xf32>
    %97 = vector.shape_cast %96 : vector<1x16x128xf32> to vector<16x128xf32>
    %c0_49 = arith.constant 0 : index
    %c0_50 = arith.constant 0 : index
    %98 = vector.load %arg5[%c0_49, %c0_50] : memref<8x16xf32, #tpu.memory_space<vmem>>, vector<8x16xf32>
    %99 = vector.extract_strided_slice %46 {offsets = [0, 0], sizes = [8, 64], strides = [1, 1]} : vector<8x256xf32> to vector<8x64xf32>
    %100 = vector.extract_strided_slice %95 {offsets = [0, 0], sizes = [16, 64], strides = [1, 1]} : vector<16x128xf32> to vector<16x64xf32>
    %101 = vector.extract_strided_slice %97 {offsets = [0, 0], sizes = [16, 64], strides = [1, 1]} : vector<16x128xf32> to vector<16x64xf32>
    %102 = arith.truncf %99 : vector<8x64xf32> to vector<8x64xbf16>
    %103 = arith.truncf %100 : vector<16x64xf32> to vector<16x64xbf16>
    %cst_51 = arith.constant dense<0.000000e+00> : vector<8x16xf32>
    %104 = tpu.matmul %102, %103, %cst_51 {dimension_numbers = #tpu.dot_dimension_numbers<[1], [1], [0], [0], [0, 0, 1, 0], [], []>} : vector<8x64xbf16>, vector<16x64xbf16>, vector<8x16xf32> -> vector<8x16xf32>
    %cst_52 = arith.constant 1.250000e-01 : f32
    %105 = vector.broadcast %cst_52 : f32 to vector<8x16xf32>
    %106 = arith.mulf %104, %105 : vector<8x16xf32>
    %107 = arith.addf %106, %98 : vector<8x16xf32>
    %cst_53 = arith.constant dense<0xFF800000> : vector<8xf32>
    %108 = vector.multi_reduction <maximumf>, %107, %cst_53 [1] : vector<8x16xf32> to vector<8xf32>
    %109 = vector.shape_cast %108 : vector<8xf32> to vector<8x1xf32>
    %110 = vector.broadcast %109 : vector<8x1xf32> to vector<8x16xf32>
    %111 = arith.subf %107, %110 : vector<8x16xf32>
    %112 = math.exp %111 : vector<8x16xf32>
    %cst_54 = arith.constant dense<0.000000e+00> : vector<8xf32>
    %113 = vector.multi_reduction <add>, %112, %cst_54 [1] : vector<8x16xf32> to vector<8xf32>
    %114 = vector.shape_cast %113 : vector<8xf32> to vector<8x1xf32>
    %115 = tpu.reciprocal %114 {approx = true} : vector<8x1xf32> -> vector<8x1xf32>
    %116 = vector.broadcast %115 : vector<8x1xf32> to vector<8x16xf32>
    %117 = arith.mulf %112, %116 : vector<8x16xf32>
    %118 = arith.truncf %117 : vector<8x16xf32> to vector<8x16xbf16>
    %119 = arith.truncf %101 : vector<16x64xf32> to vector<16x64xbf16>
    %cst_55 = arith.constant dense<0.000000e+00> : vector<8x64xf32>
    %120 = tpu.matmul %118, %119, %cst_55 {dimension_numbers = #tpu.dot_dimension_numbers<[1], [0], [0], [1], [0, 0, 1, 1], [], []>} : vector<8x16xbf16>, vector<16x64xbf16>, vector<8x64xf32> -> vector<8x64xf32>
    %121 = vector.extract_strided_slice %46 {offsets = [0, 64], sizes = [8, 64], strides = [1, 1]} : vector<8x256xf32> to vector<8x64xf32>
    %122 = vector.extract_strided_slice %95 {offsets = [0, 0], sizes = [16, 64], strides = [1, 1]} : vector<16x128xf32> to vector<16x64xf32>
    %123 = vector.extract_strided_slice %97 {offsets = [0, 0], sizes = [16, 64], strides = [1, 1]} : vector<16x128xf32> to vector<16x64xf32>
    %124 = arith.truncf %121 : vector<8x64xf32> to vector<8x64xbf16>
    %125 = arith.truncf %122 : vector<16x64xf32> to vector<16x64xbf16>
    %cst_56 = arith.constant dense<0.000000e+00> : vector<8x16xf32>
    %126 = tpu.matmul %124, %125, %cst_56 {dimension_numbers = #tpu.dot_dimension_numbers<[1], [1], [0], [0], [0, 0, 1, 0], [], []>} : vector<8x64xbf16>, vector<16x64xbf16>, vector<8x16xf32> -> vector<8x16xf32>
    %cst_57 = arith.constant 1.250000e-01 : f32
    %127 = vector.broadcast %cst_57 : f32 to vector<8x16xf32>
    %128 = arith.mulf %126, %127 : vector<8x16xf32>
    %129 = arith.addf %128, %98 : vector<8x16xf32>
    %cst_58 = arith.constant dense<0xFF800000> : vector<8xf32>
    %130 = vector.multi_reduction <maximumf>, %129, %cst_58 [1] : vector<8x16xf32> to vector<8xf32>
    %131 = vector.shape_cast %130 : vector<8xf32> to vector<8x1xf32>
    %132 = vector.broadcast %131 : vector<8x1xf32> to vector<8x16xf32>
    %133 = arith.subf %129, %132 : vector<8x16xf32>
    %134 = math.exp %133 : vector<8x16xf32>
    %cst_59 = arith.constant dense<0.000000e+00> : vector<8xf32>
    %135 = vector.multi_reduction <add>, %134, %cst_59 [1] : vector<8x16xf32> to vector<8xf32>
    %136 = vector.shape_cast %135 : vector<8xf32> to vector<8x1xf32>
    %137 = tpu.reciprocal %136 {approx = true} : vector<8x1xf32> -> vector<8x1xf32>
    %138 = vector.broadcast %137 : vector<8x1xf32> to vector<8x16xf32>
    %139 = arith.mulf %134, %138 : vector<8x16xf32>
    %140 = arith.truncf %139 : vector<8x16xf32> to vector<8x16xbf16>
    %141 = arith.truncf %123 : vector<16x64xf32> to vector<16x64xbf16>
    %cst_60 = arith.constant dense<0.000000e+00> : vector<8x64xf32>
    %142 = tpu.matmul %140, %141, %cst_60 {dimension_numbers = #tpu.dot_dimension_numbers<[1], [0], [0], [1], [0, 0, 1, 1], [], []>} : vector<8x16xbf16>, vector<16x64xbf16>, vector<8x64xf32> -> vector<8x64xf32>
    %143 = vector.extract_strided_slice %46 {offsets = [0, 128], sizes = [8, 64], strides = [1, 1]} : vector<8x256xf32> to vector<8x64xf32>
    %144 = vector.extract_strided_slice %95 {offsets = [0, 64], sizes = [16, 64], strides = [1, 1]} : vector<16x128xf32> to vector<16x64xf32>
    %145 = vector.extract_strided_slice %97 {offsets = [0, 64], sizes = [16, 64], strides = [1, 1]} : vector<16x128xf32> to vector<16x64xf32>
    %146 = arith.truncf %143 : vector<8x64xf32> to vector<8x64xbf16>
    %147 = arith.truncf %144 : vector<16x64xf32> to vector<16x64xbf16>
    %cst_61 = arith.constant dense<0.000000e+00> : vector<8x16xf32>
    %148 = tpu.matmul %146, %147, %cst_61 {dimension_numbers = #tpu.dot_dimension_numbers<[1], [1], [0], [0], [0, 0, 1, 0], [], []>} : vector<8x64xbf16>, vector<16x64xbf16>, vector<8x16xf32> -> vector<8x16xf32>
    %cst_62 = arith.constant 1.250000e-01 : f32
    %149 = vector.broadcast %cst_62 : f32 to vector<8x16xf32>
    %150 = arith.mulf %148, %149 : vector<8x16xf32>
    %151 = arith.addf %150, %98 : vector<8x16xf32>
    %cst_63 = arith.constant dense<0xFF800000> : vector<8xf32>
    %152 = vector.multi_reduction <maximumf>, %151, %cst_63 [1] : vector<8x16xf32> to vector<8xf32>
    %153 = vector.shape_cast %152 : vector<8xf32> to vector<8x1xf32>
    %154 = vector.broadcast %153 : vector<8x1xf32> to vector<8x16xf32>
    %155 = arith.subf %151, %154 : vector<8x16xf32>
    %156 = math.exp %155 : vector<8x16xf32>
    %cst_64 = arith.constant dense<0.000000e+00> : vector<8xf32>
    %157 = vector.multi_reduction <add>, %156, %cst_64 [1] : vector<8x16xf32> to vector<8xf32>
    %158 = vector.shape_cast %157 : vector<8xf32> to vector<8x1xf32>
    %159 = tpu.reciprocal %158 {approx = true} : vector<8x1xf32> -> vector<8x1xf32>
    %160 = vector.broadcast %159 : vector<8x1xf32> to vector<8x16xf32>
    %161 = arith.mulf %156, %160 : vector<8x16xf32>
    %162 = arith.truncf %161 : vector<8x16xf32> to vector<8x16xbf16>
    %163 = arith.truncf %145 : vector<16x64xf32> to vector<16x64xbf16>
    %cst_65 = arith.constant dense<0.000000e+00> : vector<8x64xf32>
    %164 = tpu.matmul %162, %163, %cst_65 {dimension_numbers = #tpu.dot_dimension_numbers<[1], [0], [0], [1], [0, 0, 1, 1], [], []>} : vector<8x16xbf16>, vector<16x64xbf16>, vector<8x64xf32> -> vector<8x64xf32>
    %165 = vector.extract_strided_slice %46 {offsets = [0, 192], sizes = [8, 64], strides = [1, 1]} : vector<8x256xf32> to vector<8x64xf32>
    %166 = vector.extract_strided_slice %95 {offsets = [0, 64], sizes = [16, 64], strides = [1, 1]} : vector<16x128xf32> to vector<16x64xf32>
    %167 = vector.extract_strided_slice %97 {offsets = [0, 64], sizes = [16, 64], strides = [1, 1]} : vector<16x128xf32> to vector<16x64xf32>
    %168 = arith.truncf %165 : vector<8x64xf32> to vector<8x64xbf16>
    %169 = arith.truncf %166 : vector<16x64xf32> to vector<16x64xbf16>
    %cst_66 = arith.constant dense<0.000000e+00> : vector<8x16xf32>
    %170 = tpu.matmul %168, %169, %cst_66 {dimension_numbers = #tpu.dot_dimension_numbers<[1], [1], [0], [0], [0, 0, 1, 0], [], []>} : vector<8x64xbf16>, vector<16x64xbf16>, vector<8x16xf32> -> vector<8x16xf32>
    %cst_67 = arith.constant 1.250000e-01 : f32
    %171 = vector.broadcast %cst_67 : f32 to vector<8x16xf32>
    %172 = arith.mulf %170, %171 : vector<8x16xf32>
    %173 = arith.addf %172, %98 : vector<8x16xf32>
    %cst_68 = arith.constant dense<0xFF800000> : vector<8xf32>
    %174 = vector.multi_reduction <maximumf>, %173, %cst_68 [1] : vector<8x16xf32> to vector<8xf32>
    %175 = vector.shape_cast %174 : vector<8xf32> to vector<8x1xf32>
    %176 = vector.broadcast %175 : vector<8x1xf32> to vector<8x16xf32>
    %177 = arith.subf %173, %176 : vector<8x16xf32>
    %178 = math.exp %177 : vector<8x16xf32>
    %cst_69 = arith.constant dense<0.000000e+00> : vector<8xf32>
    %179 = vector.multi_reduction <add>, %178, %cst_69 [1] : vector<8x16xf32> to vector<8xf32>
    %180 = vector.shape_cast %179 : vector<8xf32> to vector<8x1xf32>
    %181 = tpu.reciprocal %180 {approx = true} : vector<8x1xf32> -> vector<8x1xf32>
    %182 = vector.broadcast %181 : vector<8x1xf32> to vector<8x16xf32>
    %183 = arith.mulf %178, %182 : vector<8x16xf32>
    %184 = arith.truncf %183 : vector<8x16xf32> to vector<8x16xbf16>
    %185 = arith.truncf %167 : vector<16x64xf32> to vector<16x64xbf16>
    %cst_70 = arith.constant dense<0.000000e+00> : vector<8x64xf32>
    %186 = tpu.matmul %184, %185, %cst_70 {dimension_numbers = #tpu.dot_dimension_numbers<[1], [0], [0], [1], [0, 0, 1, 1], [], []>} : vector<8x16xbf16>, vector<16x64xbf16>, vector<8x64xf32> -> vector<8x64xf32>
    %187 = tpu.concatenate %120, %142, %164, %186 in 1 : vector<8x64xf32>, vector<8x64xf32>, vector<8x64xf32>, vector<8x64xf32> -> vector<8x256xf32>
    %188 = arith.truncf %187 : vector<8x256xf32> to vector<8x256xbf16>
    %c0_71 = arith.constant 0 : index
    %c0_72 = arith.constant 0 : index
    %189 = vector.load %arg10[%c0_71, %c0_72] : memref<256x256xbf16, #tpu.memory_space<vmem>>, vector<256x256xbf16>
    %cst_73 = arith.constant dense<0.000000e+00> : vector<8x256xf32>
    %190 = tpu.matmul %188, %189, %cst_73 {dimension_numbers = #tpu.dot_dimension_numbers<[1], [0], [0], [1], [0, 0, 1, 1], [], []>} : vector<8x256xbf16>, vector<256x256xbf16>, vector<8x256xf32> -> vector<8x256xf32>
    %191 = arith.addf %2, %190 : vector<8x256xf32>
    %c0_74 = arith.constant 0 : index
    %c0_75 = arith.constant 0 : index
    %192 = vector.load %arg11[%c0_74, %c0_75] : memref<1x256xf32, #tpu.memory_space<vmem>>, vector<1x256xf32>
    %193 = arith.mulf %191, %191 : vector<8x256xf32>
    %cst_76 = arith.constant dense<0.000000e+00> : vector<8xf32>
    %194 = vector.multi_reduction <add>, %193, %cst_76 [1] : vector<8x256xf32> to vector<8xf32>
    %195 = vector.shape_cast %194 : vector<8xf32> to vector<8x1xf32>
    %cst_77 = arith.constant 2.560000e+02 : f32
    %196 = vector.broadcast %cst_77 : f32 to vector<8x1xf32>
    %197 = arith.divf %195, %196 : vector<8x1xf32>
    %cst_78 = arith.constant 9.99999974E-6 : f32
    %198 = vector.broadcast %cst_78 : f32 to vector<8x1xf32>
    %199 = arith.addf %197, %198 : vector<8x1xf32>
    %200 = math.rsqrt %199 : vector<8x1xf32>
    %201 = vector.broadcast %200 : vector<8x1xf32> to vector<8x256xf32>
    %202 = arith.mulf %191, %201 : vector<8x256xf32>
    %203 = vector.broadcast %192 : vector<1x256xf32> to vector<8x256xf32>
    %204 = arith.mulf %202, %203 : vector<8x256xf32>
    %205 = arith.truncf %204 : vector<8x256xf32> to vector<8x256xbf16>
    %c0_79 = arith.constant 0 : index
    %c0_80 = arith.constant 0 : index
    %206 = vector.load %arg12[%c0_79, %c0_80] : memref<256x1024xbf16, #tpu.memory_space<vmem>>, vector<256x1024xbf16>
    %cst_81 = arith.constant dense<0.000000e+00> : vector<8x1024xf32>
    %207 = tpu.matmul %205, %206, %cst_81 {dimension_numbers = #tpu.dot_dimension_numbers<[1], [0], [0], [1], [0, 0, 1, 1], [], []>} : vector<8x256xbf16>, vector<256x1024xbf16>, vector<8x1024xf32> -> vector<8x1024xf32>
    %208 = vector.extract_strided_slice %207 {offsets = [0, 0], sizes = [8, 512], strides = [1, 1]} : vector<8x1024xf32> to vector<8x512xf32>
    %209 = vector.extract_strided_slice %207 {offsets = [0, 512], sizes = [8, 512], strides = [1, 1]} : vector<8x1024xf32> to vector<8x512xf32>
    %cst_82 = arith.constant 0.000000e+00 : f32
    %210 = vector.broadcast %cst_82 : f32 to vector<8x512xf32>
    %211 = arith.subf %210, %208 : vector<8x512xf32>
    %212 = math.exp %211 : vector<8x512xf32>
    %cst_83 = arith.constant 1.000000e+00 : f32
    %213 = vector.broadcast %cst_83 : f32 to vector<8x512xf32>
    %214 = arith.addf %213, %212 : vector<8x512xf32>
    %215 = tpu.reciprocal %214 {approx = true} : vector<8x512xf32> -> vector<8x512xf32>
    %216 = arith.mulf %208, %215 : vector<8x512xf32>
    %217 = arith.mulf %216, %209 : vector<8x512xf32>
    %218 = arith.truncf %217 : vector<8x512xf32> to vector<8x512xbf16>
    %c0_84 = arith.constant 0 : index
    %c0_85 = arith.constant 0 : index
    %219 = vector.load %arg13[%c0_84, %c0_85] : memref<512x256xbf16, #tpu.memory_space<vmem>>, vector<512x256xbf16>
    %cst_86 = arith.constant dense<0.000000e+00> : vector<8x256xf32>
    %220 = tpu.matmul %218, %219, %cst_86 {dimension_numbers = #tpu.dot_dimension_numbers<[1], [0], [0], [1], [0, 0, 1, 1], [], []>} : vector<8x512xbf16>, vector<512x256xbf16>, vector<8x256xf32> -> vector<8x256xf32>
    %221 = arith.addf %191, %220 : vector<8x256xf32>
    %c0_87 = arith.constant 0 : index
    %c0_88 = arith.constant 0 : index
    %c0_89 = arith.constant 0 : index
    %222 = vector.load %arg14[%c0_87, %c0_88, %c0_89] : memref<1x8x256xf32, #tpu.memory_space<vmem>>, vector<1x8x256xf32>
    %223 = vector.shape_cast %222 : vector<1x8x256xf32> to vector<8x256xf32>
    %224 = vector.shape_cast %221 : vector<8x256xf32> to vector<1x8x256xf32>
    tpu.vector_store %arg14[%c0_87, %c0_88, %c0_89], %224 {strides = array<i32>} : memref<1x8x256xf32, #tpu.memory_space<vmem>>, vector<1x8x256xf32>,
    return
  }
  func.func @transform_0(%arg0: i32, %arg1: memref<1xi32, #tpu.memory_space<smem>>) -> (i32, i32, i32) {
    %c0_i32 = arith.constant 0 : i32
    %c0_i32_0 = arith.constant 0 : i32
    %c0_i32_1 = arith.constant 0 : i32
    return %arg0, %c0_i32, %c0_i32_0 : i32, i32, i32
  }
  func.func @transform_1(%arg0: i32, %arg1: memref<1xi32, #tpu.memory_space<smem>>) -> (i32, i32, i32) {
    %c0_i32 = arith.constant 0 : i32
    %c0_i32_0 = arith.constant 0 : i32
    %c0_i32_1 = arith.constant 0 : i32
    return %arg0, %c0_i32, %c0_i32_0 : i32, i32, i32
  }
  func.func @transform_2(%arg0: i32, %arg1: memref<1xi32, #tpu.memory_space<smem>>) -> (i32, i32, i32) {
    %c0_i32 = arith.constant 0 : i32
    %c0_i32_0 = arith.constant 0 : i32
    %c0_i32_1 = arith.constant 0 : i32
    return %arg0, %c0_i32, %c0_i32_0 : i32, i32, i32
  }
  func.func @transform_3(%arg0: i32, %arg1: memref<1xi32, #tpu.memory_space<smem>>) -> (i32, i32) {
    %c0_i32 = arith.constant 0 : i32
    %c0_i32_0 = arith.constant 0 : i32
    %c0_i32_1 = arith.constant 0 : i32
    return %c0_i32, %c0_i32_0 : i32, i32
  }
  func.func @transform_4(%arg0: i32, %arg1: memref<1xi32, #tpu.memory_space<smem>>) -> (i32, i32) {
    %c0_i32 = arith.constant 0 : i32
    %c0_i32_0 = arith.constant 0 : i32
    %c0_i32_1 = arith.constant 0 : i32
    return %c0_i32, %c0_i32_0 : i32, i32
  }
  func.func @transform_5(%arg0: i32, %arg1: memref<1xi32, #tpu.memory_space<smem>>) -> (i32, i32) {
    %c0_i32 = arith.constant 0 : i32
    %c0_i32_0 = arith.constant 0 : i32
    %c0_i32_1 = arith.constant 0 : i32
    return %c0_i32, %c0_i32_0 : i32, i32
  }
  func.func @transform_6(%arg0: i32, %arg1: memref<1xi32, #tpu.memory_space<smem>>) -> (i32, i32) {
    %c0_i32 = arith.constant 0 : i32
    %c0_i32_0 = arith.constant 0 : i32
    %c0_i32_1 = arith.constant 0 : i32
    return %c0_i32, %c0_i32_0 : i32, i32
  }
  func.func @transform_7(%arg0: i32, %arg1: memref<1xi32, #tpu.memory_space<smem>>) -> (i32, i32) {
    %c0_i32 = arith.constant 0 : i32
    %c0_i32_0 = arith.constant 0 : i32
    %c0_i32_1 = arith.constant 0 : i32
    return %c0_i32, %c0_i32_0 : i32, i32
  }
  func.func @transform_8(%arg0: i32, %arg1: memref<1xi32, #tpu.memory_space<smem>>) -> (i32, i32) {
    %c0_i32 = arith.constant 0 : i32
    %c0_i32_0 = arith.constant 0 : i32
    %c0_i32_1 = arith.constant 0 : i32
    return %c0_i32, %c0_i32_0 : i32, i32
  }
  func.func @transform_9(%arg0: i32, %arg1: memref<1xi32, #tpu.memory_space<smem>>) -> (i32, i32) {
    %c0_i32 = arith.constant 0 : i32
    %c0_i32_0 = arith.constant 0 : i32
    %c0_i32_1 = arith.constant 0 : i32
    return %c0_i32, %c0_i32_0 : i32, i32
  }
  func.func @transform_10(%arg0: i32, %arg1: memref<1xi32, #tpu.memory_space<smem>>) -> (i32, i32) {
    %c0_i32 = arith.constant 0 : i32
    %c0_i32_0 = arith.constant 0 : i32
    %c0_i32_1 = arith.constant 0 : i32
    return %c0_i32, %c0_i32_0 : i32, i32
  }
  func.func @transform_11(%arg0: i32, %arg1: memref<1xi32, #tpu.memory_space<smem>>) -> (i32, i32) {
    %c0_i32 = arith.constant 0 : i32
    %c0_i32_0 = arith.constant 0 : i32
    %c0_i32_1 = arith.constant 0 : i32
    return %c0_i32, %c0_i32_0 : i32, i32
  }
  func.func @transform_12(%arg0: i32, %arg1: memref<1xi32, #tpu.memory_space<smem>>) -> (i32, i32, i32) {
    %c0_i32 = arith.constant 0 : i32
    %c0_i32_0 = arith.constant 0 : i32
    %c0_i32_1 = arith.constant 0 : i32
    return %arg0, %c0_i32, %c0_i32_0 : i32, i32, i32
  }
  func.func @transform_13(%arg0: i32, %arg1: memref<1xi32, #tpu.memory_space<smem>>) -> (i32, i32, i32) {
    %c0_i32 = arith.constant 0 : i32
    %c0_i32_0 = arith.constant 0 : i32
    %c0_i32_1 = arith.constant 0 : i32
    return %arg0, %c0_i32, %c0_i32_0 : i32, i32, i32
  }
  func.func @transform_14(%arg0: i32, %arg1: memref<1xi32, #tpu.memory_space<smem>>) -> (i32, i32, i32) {
    %c0_i32 = arith.constant 0 : i32
    %c0_i32_0 = arith.constant 0 : i32
    %c0_i32_1 = arith.constant 0 : i32
    return %arg0, %c0_i32, %c0_i32_0 : i32, i32, i32
  }
}

</mosaic_0001>

<llo_original>
// kernel: tpu_custom_call.1
$region0: #{tpu_custom_call.1}
  #allocation0 [shape = 'u32[]', space=smem, size = 0x4, offset = 0x4, fixed_abs, tag = 'smem constant byte address 0x4 - core index']
  #allocation1 [shape = 'u32[144,128]{1,0:T(1,128)}', space=vmem, size = 0x12000, scoped, tag = 'internal scratch']
  #allocation2 [shape = 's32[1]{0}', space=sflag, size = 0x4, scoped, tag = 'scoped memory for tpu_custom_call.1']
  #allocation3 [shape = 's32[1]{0:T(128)S(6)}', space=smem, size = 0x200, scoped, tag = 'prefetched SMEM operand 0']
  %s0 = inlined_call_operand.<no memory space> [shape: s32[1], index: 0, kind: input, shape index: {}]
  %s1 = inlined_call_operand.hbm [shape: f32[2,8,256], index: 1, kind: input, shape index: {}]
  %s2 = inlined_call_operand.hbm [shape: f32[2,16,128], index: 2, kind: input, shape index: {}]
  %s3 = inlined_call_operand.hbm [shape: f32[2,16,128], index: 3, kind: input, shape index: {}]
  %s4 = inlined_call_operand.hbm [shape: f32[8,16], index: 4, kind: input, shape index: {}]
  %s5 = inlined_call_operand.vmem [shape: f32[1,256], index: 5, kind: input, shape index: {}]
  %s6 = inlined_call_operand.hbm [shape: bf16[256,512], index: 6, kind: input, shape index: {}]
  %s7 = inlined_call_operand.hbm [shape: f32[8,256], index: 7, kind: input, shape index: {}]
  %s8 = inlined_call_operand.hbm [shape: f32[8,256], index: 8, kind: input, shape index: {}]
  %s9 = inlined_call_operand.hbm [shape: bf16[256,256], index: 9, kind: input, shape index: {}]
  %s10 = inlined_call_operand.vmem [shape: f32[1,256], index: 10, kind: input, shape index: {}]
  %s11 = inlined_call_operand.hbm [shape: bf16[256,1024], index: 11, kind: input, shape index: {}]
  %s12 = inlined_call_operand.hbm [shape: bf16[512,256], index: 12, kind: input, shape index: {}]
  %s13 = inlined_call_operand.hbm [shape: f32[2,8,256], index: 13, kind: output, shape index: {0}]
  %s14 = inlined_call_operand.hbm [shape: f32[2,16,128], index: 14, kind: output, shape index: {1}]
  %s15 = inlined_call_operand.hbm [shape: f32[2,16,128], index: 15, kind: output, shape index: {2}]
  %16 = xla_tuple %s13, %s14, %s15
  %s17 = sld [smem:[#allocation0]]
  $region137: #{tpu_custom_call.1} parent=0
    _
  %s19 = ssub.s32 1, %s17
  %s20 = scalar_select 0, %s19, %s17
  %21 = sst [smem:[#allocation3]] %s0
  $region1: #{tpu_custom_call.1} parent=0
    #allocation4 [shape = 'u8[16384]{0}', space=vmem, size = 0x4000, scoped, tag = 'input window, operand 1']
    #allocation5 [shape = 's32[2]{0}', space=sflag, size = 0x8, scoped, tag = 'scoped memory for tpu_custom_call.1']
    #allocation6 [shape = 's32[2]{0}', space=sflag, size = 0x8, scoped, tag = 'scoped memory for tpu_custom_call.1']
    #allocation7 [shape = 'u8[16384]{0}', space=vmem, size = 0x4000, scoped, tag = 'input window, operand 2']
    #allocation8 [shape = 's32[2]{0}', space=sflag, size = 0x8, scoped, tag = 'scoped memory for tpu_custom_call.1']
    #allocation9 [shape = 'u8[16384]{0}', space=vmem, size = 0x4000, scoped, tag = 'input window, operand 3']
    #allocation10 [shape = 'u8[4096]{0}', space=vmem, size = 0x1000, scoped, tag = 'input window, operand 4, single buffered']
    #allocation11 [shape = 's32[1]{0}', space=sflag, size = 0x4, scoped, tag = 'scoped memory for tpu_custom_call.1']
    #allocation12 [shape = 'u8[262144]{0}', space=vmem, size = 0x40000, scoped, tag = 'input window, operand 6, single buffered']
    #allocation13 [shape = 'u8[8192]{0}', space=vmem, size = 0x2000, scoped, tag = 'input window, operand 7, single buffered']
    #allocation14 [shape = 's32[1]{0}', space=sflag, size = 0x4, scoped, tag = 'scoped memory for tpu_custom_call.1']
    #allocation15 [shape = 'u8[8192]{0}', space=vmem, size = 0x2000, scoped, tag = 'input window, operand 8, single buffered']
    #allocation16 [shape = 'u8[131072]{0}', space=vmem, size = 0x20000, scoped, tag = 'input window, operand 9, single buffered']
    #allocation17 [shape = 's32[1]{0}', space=sflag, size = 0x4, scoped, tag = 'scoped memory for tpu_custom_call.1']
    #allocation18 [shape = 'u8[524288]{0}', space=vmem, size = 0x80000, scoped, tag = 'input window, operand 11, single buffered']
    #allocation19 [shape = 'u8[262144]{0}', space=vmem, size = 0x40000, scoped, tag = 'input window, operand 12, single buffered']
    #allocation20 [shape = 's32[1]{0}', space=sflag, size = 0x4, scoped, tag = 'scoped memory for tpu_custom_call.1']
    #allocation21 [shape = 'u8[16384]{0}', space=vmem, size = 0x4000, scoped, tag = 'output window, operand 0']
    #allocation22 [shape = 'u8[16384]{0}', space=vmem, size = 0x4000, scoped, tag = 'output window, operand 1']
    #allocation23 [shape = 's32[2]{0}', space=sflag, size = 0x8, scoped, tag = 'scoped memory for tpu_custom_call.1']
    #allocation24 [shape = 'u8[16384]{0}', space=vmem, size = 0x4000, scoped, tag = 'output window, operand 2']
    %22 = vsyncpa [#allocation5], 0
    %s23 = scalar_lea.sflag [#allocation5], 1
    %24 = vsyncpa %s23, 0
    %25 = vsyncpa [#allocation8], 0
    %s26 = scalar_lea.sflag [#allocation8], 1
    %27 = vsyncpa %s26, 0
    %28 = vsyncpa [#allocation11], 0
    %29 = vsyncpa [#allocation14], 0
    %30 = vsyncpa [#allocation17], 0
    %31 = vsyncpa [#allocation20], 0
    %32 = vsyncpa [#allocation6], 0
    %s33 = scalar_lea.sflag [#allocation6], 1
    %34 = vsyncpa %s33, 0
    %35 = vsyncpa [#allocation23], 0
    %s36 = scalar_lea.sflag [#allocation23], 1
    %37 = vsyncpa %s36, 0
    loop: start=0, step=1, limit=4
    $region2: #{tpu_custom_call.1} parent=1 // loop_pre_header
      _
    $region3: #{tpu_custom_call.1} parent=1 // loop_header
      %s39 = sphi 0, %s43
      %p40 = scmp.ge.s32.totalorder %s39, 4
      %s49 = sphi 0, %s51
      %s52 = sphi 0, %s49
      %s53 = sphi 0, %s52
      %s69 = sphi 0, %s53
      %s75 = sphi 0, %s77
      %s78 = sphi 0, %s75
      %s79 = sphi 0, %s78
      %s95 = sphi 0, %s79
      %s101 = sphi 0, %s103
      %s104 = sphi 0, %s101
      %s105 = sphi 0, %s104
      %s121 = sphi 0, %s105
      %s125 = sphi 0, %s125
      %s127 = sphi 0, %s125
      %s128 = sphi 0, %s127
      %s142 = sphi 0, %s128
      %s146 = sphi 0, %s146
      %s148 = sphi 0, %s146
      %s149 = sphi 0, %s148
      %s163 = sphi 0, %s149
      %s167 = sphi 0, %s167
      %s169 = sphi 0, %s167
      %s170 = sphi 0, %s169
      %s184 = sphi 0, %s170
      %s188 = sphi 0, %s188
      %s190 = sphi 0, %s188
      %s191 = sphi 0, %s190
      %s205 = sphi 0, %s191
      %s209 = sphi 0, %s209
      %s211 = sphi 0, %s209
      %s212 = sphi 0, %s211
      %s226 = sphi 0, %s212
      %s230 = sphi 0, %s230
      %s232 = sphi 0, %s230
      %s233 = sphi 0, %s232
      %s247 = sphi 0, %s233
      %s251 = sphi 0, %s251
      %s253 = sphi 0, %s251
      %s254 = sphi 0, %s253
      %s268 = sphi 0, %s254
      %s272 = sphi 0, %s272
      %s274 = sphi 0, %s272
      %s275 = sphi 0, %s274
      %s289 = sphi 0, %s275
      %s293 = sphi 0, %s293
      %s295 = sphi 0, %s293
      %s296 = sphi 0, %s295
      %s310 = sphi 0, %s296
      %s316 = sphi 0, %s318
      %s319 = sphi 0, %s316
      %s320 = sphi 0, %s319
      %s336 = sphi 0, %s320
      %s342 = sphi 0, %s344
      %s345 = sphi 0, %s342
      %s346 = sphi 0, %s345
      %s362 = sphi 0, %s346
      %s368 = sphi 0, %s370
      %s371 = sphi 0, %s368
      %s372 = sphi 0, %s371
      %s388 = sphi 0, %s372
    $region4: #{tpu_custom_call.1} parent=1 // loop_header_branch
      %42 = sbr.rel (%p40) target = $region8
    $region5: #{tpu_custom_call.1} parent=1 // loop_body
      %s44 = ssub.s32 %s39, 1
      %s45 = ssub.s32 %s39, 2
      %s46 = sadd.s32 %s39, 1
      %s47 = ssub.s32 %s39, %s46
      %p48 = scmp.eq.s32.totalorder %s47, 0
      %s50 = sadd.s32 %s49, 1
      %s51 = scalar_select %p48, %s49, %s50
      %p54 = pneg %p48
      %p55 = scmp.eq.s32.totalorder %s39, 1
      %p56 = por %p54, %p55
      %p57 = scmp.ne.s32.totalorder %s49, %s52
      %p58 = scmp.eq.s32.totalorder %s39, 0
      %p59 = por %p57, %p58
      %p60 = scmp.ne.s32.totalorder %s49, %s52
      %p61 = scmp.eq.s32.totalorder %s44, 1
      %p62 = por %p60, %p61
      %p63 = scmp.ne.s32.totalorder %s52, %s53
      %p64 = scmp.eq.s32.totalorder %s44, 0
      %p65 = por %p63, %p64
      %p66 = scmp.ne.s32.totalorder %s52, %s53
      %p67 = scmp.eq.s32.totalorder %s45, 1
      %p68 = por %p66, %p67
      %p70 = scmp.ne.s32.totalorder %s53, %s69
      %p71 = scmp.eq.s32.totalorder %s45, 0
      %p72 = por %p70, %p71
      %s73 = ssub.s32 %s39, %s46
      %p74 = scmp.eq.s32.totalorder %s73, 0
      %s76 = sadd.s32 %s75, 1
      %s77 = scalar_select %p74, %s75, %s76
      %p80 = pneg %p74
      %p81 = scmp.eq.s32.totalorder %s39, 1
      %p82 = por %p80, %p81
      %p83 = scmp.ne.s32.totalorder %s75, %s78
      %p84 = scmp.eq.s32.totalorder %s39, 0
      %p85 = por %p83, %p84
      %p86 = scmp.ne.s32.totalorder %s75, %s78
      %p87 = scmp.eq.s32.totalorder %s44, 1
      %p88 = por %p86, %p87
      %p89 = scmp.ne.s32.totalorder %s78, %s79
      %p90 = scmp.eq.s32.totalorder %s44, 0
      %p91 = por %p89, %p90
      %p92 = scmp.ne.s32.totalorder %s78, %s79
      %p93 = scmp.eq.s32.totalorder %s45, 1
      %p94 = por %p92, %p93
      %p96 = scmp.ne.s32.totalorder %s79, %s95
      %p97 = scmp.eq.s32.totalorder %s45, 0
      %p98 = por %p96, %p97
      %s99 = ssub.s32 %s39, %s46
      %p100 = scmp.eq.s32.totalorder %s99, 0
      %s102 = sadd.s32 %s101, 1
      %s103 = scalar_select %p100, %s101, %s102
      %p106 = pneg %p100
      %p107 = scmp.eq.s32.totalorder %s39, 1
      %p108 = por %p106, %p107
      %p109 = scmp.ne.s32.totalorder %s101, %s104
      %p110 = scmp.eq.s32.totalorder %s39, 0
      %p111 = por %p109, %p110
      %p112 = scmp.ne.s32.totalorder %s101, %s104
      %p113 = scmp.eq.s32.totalorder %s44, 1
      %p114 = por %p112, %p113
      %p115 = scmp.ne.s32.totalorder %s104, %s105
      %p116 = scmp.eq.s32.totalorder %s44, 0
      %p117 = por %p115, %p116
      %p118 = scmp.ne.s32.totalorder %s104, %s105
      %p119 = scmp.eq.s32.totalorder %s45, 1
      %p120 = por %p118, %p119
      %p122 = scmp.ne.s32.totalorder %s105, %s121
      %p123 = scmp.eq.s32.totalorder %s45, 0
      %p124 = por %p122, %p123
      %s126 = sadd.s32 %s125, 1
      %p129 = scmp.eq.s32.totalorder %s39, 1
      %p130 = scmp.ne.s32.totalorder %s125, %s127
      %p131 = scmp.eq.s32.totalorder %s39, 0
      %p132 = por %p130, %p131
      %p133 = scmp.ne.s32.totalorder %s125, %s127
      %p134 = scmp.eq.s32.totalorder %s44, 1
      %p135 = por %p133, %p134
      %p136 = scmp.ne.s32.totalorder %s127, %s128
      %p137 = scmp.eq.s32.totalorder %s44, 0
      %p138 = por %p136, %p137
      %p139 = scmp.ne.s32.totalorder %s127, %s128
      %p140 = scmp.eq.s32.totalorder %s45, 1
      %p141 = por %p139, %p140
      %p143 = scmp.ne.s32.totalorder %s128, %s142
      %p144 = scmp.eq.s32.totalorder %s45, 0
      %p145 = por %p143, %p144
      %s147 = sadd.s32 %s146, 1
      %p150 = scmp.eq.s32.totalorder %s39, 1
      %p151 = scmp.ne.s32.totalorder %s146, %s148
      %p152 = scmp.eq.s32.totalorder %s39, 0
      %p153 = por %p151, %p152
      %p154 = scmp.ne.s32.totalorder %s146, %s148
      %p155 = scmp.eq.s32.totalorder %s44, 1
      %p156 = por %p154, %p155
      %p157 = scmp.ne.s32.totalorder %s148, %s149
      %p158 = scmp.eq.s32.totalorder %s44, 0
      %p159 = por %p157, %p158
      %p160 = scmp.ne.s32.totalorder %s148, %s149
      %p161 = scmp.eq.s32.totalorder %s45, 1
      %p162 = por %p160, %p161
      %p164 = scmp.ne.s32.totalorder %s149, %s163
      %p165 = scmp.eq.s32.totalorder %s45, 0
      %p166 = por %p164, %p165
      %s168 = sadd.s32 %s167, 1
      %p171 = scmp.eq.s32.totalorder %s39, 1
      %p172 = scmp.ne.s32.totalorder %s167, %s169
      %p173 = scmp.eq.s32.totalorder %s39, 0
      %p174 = por %p172, %p173
      %p175 = scmp.ne.s32.totalorder %s167, %s169
      %p176 = scmp.eq.s32.totalorder %s44, 1
      %p177 = por %p175, %p176
      %p178 = scmp.ne.s32.totalorder %s169, %s170
      %p179 = scmp.eq.s32.totalorder %s44, 0
      %p180 = por %p178, %p179
      %p181 = scmp.ne.s32.totalorder %s169, %s170
      %p182 = scmp.eq.s32.totalorder %s45, 1
      %p183 = por %p181, %p182
      %p185 = scmp.ne.s32.totalorder %s170, %s184
      %p186 = scmp.eq.s32.totalorder %s45, 0
      %p187 = por %p185, %p186
      %s189 = sadd.s32 %s188, 1
      %p192 = scmp.eq.s32.totalorder %s39, 1
      %p193 = scmp.ne.s32.totalorder %s188, %s190
      %p194 = scmp.eq.s32.totalorder %s39, 0
      %p195 = por %p193, %p194
      %p196 = scmp.ne.s32.totalorder %s188, %s190
      %p197 = scmp.eq.s32.totalorder %s44, 1
      %p198 = por %p196, %p197
      %p199 = scmp.ne.s32.totalorder %s190, %s191
      %p200 = scmp.eq.s32.totalorder %s44, 0
      %p201 = por %p199, %p200
      %p202 = scmp.ne.s32.totalorder %s190, %s191
      %p203 = scmp.eq.s32.totalorder %s45, 1
      %p204 = por %p202, %p203
      %p206 = scmp.ne.s32.totalorder %s191, %s205
      %p207 = scmp.eq.s32.totalorder %s45, 0
      %p208 = por %p206, %p207
      %s210 = sadd.s32 %s209, 1
      %p213 = scmp.eq.s32.totalorder %s39, 1
      %p214 = scmp.ne.s32.totalorder %s209, %s211
      %p215 = scmp.eq.s32.totalorder %s39, 0
      %p216 = por %p214, %p215
      %p217 = scmp.ne.s32.totalorder %s209, %s211
      %p218 = scmp.eq.s32.totalorder %s44, 1
      %p219 = por %p217, %p218
      %p220 = scmp.ne.s32.totalorder %s211, %s212
      %p221 = scmp.eq.s32.totalorder %s44, 0
      %p222 = por %p220, %p221
      %p223 = scmp.ne.s32.totalorder %s211, %s212
      %p224 = scmp.eq.s32.totalorder %s45, 1
      %p225 = por %p223, %p224
      %p227 = scmp.ne.s32.totalorder %s212, %s226
      %p228 = scmp.eq.s32.totalorder %s45, 0
      %p229 = por %p227, %p228
      %s231 = sadd.s32 %s230, 1
      %p234 = scmp.eq.s32.totalorder %s39, 1
      %p235 = scmp.ne.s32.totalorder %s230, %s232
      %p236 = scmp.eq.s32.totalorder %s39, 0
      %p237 = por %p235, %p236
      %p238 = scmp.ne.s32.totalorder %s230, %s232
      %p239 = scmp.eq.s32.totalorder %s44, 1
      %p240 = por %p238, %p239
      %p241 = scmp.ne.s32.totalorder %s232, %s233
      %p242 = scmp.eq.s32.totalorder %s44, 0
      %p243 = por %p241, %p242
      %p244 = scmp.ne.s32.totalorder %s232, %s233
      %p245 = scmp.eq.s32.totalorder %s45, 1
      %p246 = por %p244, %p245
      %p248 = scmp.ne.s32.totalorder %s233, %s247
      %p249 = scmp.eq.s32.totalorder %s45, 0
      %p250 = por %p248, %p249
      %s252 = sadd.s32 %s251, 1
      %p255 = scmp.eq.s32.totalorder %s39, 1
      %p256 = scmp.ne.s32.totalorder %s251, %s253
      %p257 = scmp.eq.s32.totalorder %s39, 0
      %p258 = por %p256, %p257
      %p259 = scmp.ne.s32.totalorder %s251, %s253
      %p260 = scmp.eq.s32.totalorder %s44, 1
      %p261 = por %p259, %p260
      %p262 = scmp.ne.s32.totalorder %s253, %s254
      %p263 = scmp.eq.s32.totalorder %s44, 0
      %p264 = por %p262, %p263
      %p265 = scmp.ne.s32.totalorder %s253, %s254
      %p266 = scmp.eq.s32.totalorder %s45, 1
      %p267 = por %p265, %p266
      %p269 = scmp.ne.s32.totalorder %s254, %s268
      %p270 = scmp.eq.s32.totalorder %s45, 0
      %p271 = por %p269, %p270
      %s273 = sadd.s32 %s272, 1
      %p276 = scmp.eq.s32.totalorder %s39, 1
      %p277 = scmp.ne.s32.totalorder %s272, %s274
      %p278 = scmp.eq.s32.totalorder %s39, 0
      %p279 = por %p277, %p278
      %p280 = scmp.ne.s32.totalorder %s272, %s274
      %p281 = scmp.eq.s32.totalorder %s44, 1
      %p282 = por %p280, %p281
      %p283 = scmp.ne.s32.totalorder %s274, %s275
      %p284 = scmp.eq.s32.totalorder %s44, 0
      %p285 = por %p283, %p284
      %p286 = scmp.ne.s32.totalorder %s274, %s275
      %p287 = scmp.eq.s32.totalorder %s45, 1
      %p288 = por %p286, %p287
      %p290 = scmp.ne.s32.totalorder %s275, %s289
      %p291 = scmp.eq.s32.totalorder %s45, 0
      %p292 = por %p290, %p291
      %s294 = sadd.s32 %s293, 1
      %p297 = scmp.eq.s32.totalorder %s39, 1
      %p298 = scmp.ne.s32.totalorder %s293, %s295
      %p299 = scmp.eq.s32.totalorder %s39, 0
      %p300 = por %p298, %p299
      %p301 = scmp.ne.s32.totalorder %s293, %s295
      %p302 = scmp.eq.s32.totalorder %s44, 1
      %p303 = por %p301, %p302
      %p304 = scmp.ne.s32.totalorder %s295, %s296
      %p305 = scmp.eq.s32.totalorder %s44, 0
      %p306 = por %p304, %p305
      %p307 = scmp.ne.s32.totalorder %s295, %s296
      %p308 = scmp.eq.s32.totalorder %s45, 1
      %p309 = por %p307, %p308
      %p311 = scmp.ne.s32.totalorder %s296, %s310
      %p312 = scmp.eq.s32.totalorder %s45, 0
      %p313 = por %p311, %p312
      %s314 = ssub.s32 %s39, %s46
      %p315 = scmp.eq.s32.totalorder %s314, 0
      %s317 = sadd.s32 %s316, 1
      %s318 = scalar_select %p315, %s316, %s317
      %p321 = pneg %p315
      %p322 = scmp.eq.s32.totalorder %s39, 1
      %p323 = por %p321, %p322
      %p324 = scmp.ne.s32.totalorder %s316, %s319
      %p325 = scmp.eq.s32.totalorder %s39, 0
      %p326 = por %p324, %p325
      %p327 = scmp.ne.s32.totalorder %s316, %s319
      %p328 = scmp.eq.s32.totalorder %s44, 1
      %p329 = por %p327, %p328
      %p330 = scmp.ne.s32.totalorder %s319, %s320
      %p331 = scmp.eq.s32.totalorder %s44, 0
      %p332 = por %p330, %p331
      %p333 = scmp.ne.s32.totalorder %s319, %s320
      %p334 = scmp.eq.s32.totalorder %s45, 1
      %p335 = por %p333, %p334
      %p337 = scmp.ne.s32.totalorder %s320, %s336
      %p338 = scmp.eq.s32.totalorder %s45, 0
      %p339 = por %p337, %p338
      %s340 = ssub.s32 %s39, %s46
      %p341 = scmp.eq.s32.totalorder %s340, 0
      %s343 = sadd.s32 %s342, 1
      %s344 = scalar_select %p341, %s342, %s343
      %p347 = pneg %p341
      %p348 = scmp.eq.s32.totalorder %s39, 1
      %p349 = por %p347, %p348
      %p350 = scmp.ne.s32.totalorder %s342, %s345
      %p351 = scmp.eq.s32.totalorder %s39, 0
      %p352 = por %p350, %p351
      %p353 = scmp.ne.s32.totalorder %s342, %s345
      %p354 = scmp.eq.s32.totalorder %s44, 1
      %p355 = por %p353, %p354
      %p356 = scmp.ne.s32.totalorder %s345, %s346
      %p357 = scmp.eq.s32.totalorder %s44, 0
      %p358 = por %p356, %p357
      %p359 = scmp.ne.s32.totalorder %s345, %s346
      %p360 = scmp.eq.s32.totalorder %s45, 1
      %p361 = por %p359, %p360
      %p363 = scmp.ne.s32.totalorder %s346, %s362
      %p364 = scmp.eq.s32.totalorder %s45, 0
      %p365 = por %p363, %p364
      %s366 = ssub.s32 %s39, %s46
      %p367 = scmp.eq.s32.totalorder %s366, 0
      %s369 = sadd.s32 %s368, 1
      %s370 = scalar_select %p367, %s368, %s369
      %p373 = pneg %p367
      %p374 = scmp.eq.s32.totalorder %s39, 1
      %p375 = por %p373, %p374
      %p376 = scmp.ne.s32.totalorder %s368, %s371
      %p377 = scmp.eq.s32.totalorder %s39, 0
      %p378 = por %p376, %p377
      %p379 = scmp.ne.s32.totalorder %s368, %s371
      %p380 = scmp.eq.s32.totalorder %s44, 1
      %p381 = por %p379, %p380
      %p382 = scmp.ne.s32.totalorder %s371, %s372
      %p383 = scmp.eq.s32.totalorder %s44, 0
      %p384 = por %p382, %p383
      %p385 = scmp.ne.s32.totalorder %s371, %s372
      %p386 = scmp.eq.s32.totalorder %s45, 1
      %p387 = por %p385, %p386
      %p389 = scmp.ne.s32.totalorder %s372, %s388
      %p390 = scmp.eq.s32.totalorder %s45, 0
      %p391 = por %p389, %p390
      %p392 = scmp.le.s32.totalorder 1, %s39
      %p393 = scmp.lt.s32.totalorder %s39, 3
      %p394 = pnand %p392, %p393
      %p395 = pneg %p394
      // Predicated region
      $region9: #{tpu_custom_call.1} parent=5 // pred_check
        _
      $region10: #{tpu_custom_call.1} parent=5 // pred_check_branch
        %397 = sbr.rel (%p394) target = $region12
      $region11: #{tpu_custom_call.1} parent=5 // pred_region
        %s398 = ssub.s32 %s39, 1
        // Predicated region
        $region13: #{tpu_custom_call.1} parent=11 // pred_check
          %p399 = pneg %p138
        $region14: #{tpu_custom_call.1} parent=11 // pred_check_branch
          %401 = sbr.rel (%p399) target = $region16
        $region15: #{tpu_custom_call.1} parent=11 // pred_region
          %s403 = ssub.s32 128, 128
          %404 = vsyncadd [#allocation11], %s403
          %s406 = sshll.u32 [#allocation10], 4
          %s407 = int_to_ptr.vmem [resolvable:$true] %s406
          %409 = dma.hbm_to_vmem [thread:$0]  %s4, 128, %s407, [#allocation11]
        $region16: #{tpu_custom_call.1} parent=11 // pred_fallthru
          _
        // Predicated region
        $region17: #{tpu_custom_call.1} parent=11 // pred_check
          %p410 = pneg %p159
        $region18: #{tpu_custom_call.1} parent=11 // pred_check_branch
          %412 = sbr.rel (%p410) target = $region20
        $region19: #{tpu_custom_call.1} parent=11 // pred_region
          _
        $region20: #{tpu_custom_call.1} parent=11 // pred_fallthru
          _
        // Predicated region
        $region21: #{tpu_custom_call.1} parent=11 // pred_check
          %p413 = pneg %p180
        $region22: #{tpu_custom_call.1} parent=11 // pred_check_branch
          %415 = sbr.rel (%p413) target = $region24
        $region23: #{tpu_custom_call.1} parent=11 // pred_region
          %s417 = ssub.s32 8192, 8192
          %418 = vsyncadd [#allocation11], %s417
          %s419 = sshll.u32 [#allocation12], 4
          %s420 = int_to_ptr.vmem [resolvable:$true] %s419
          %425 = dma.hbm_to_vmem [thread:$0]  %s6, 8192, %s420, [#allocation11], 256, 256, 16
        $region24: #{tpu_custom_call.1} parent=11 // pred_fallthru
          _
        // Predicated region
        $region25: #{tpu_custom_call.1} parent=11 // pred_check
          %p426 = pneg %p201
        $region26: #{tpu_custom_call.1} parent=11 // pred_check_branch
          %428 = sbr.rel (%p426) target = $region28
        $region27: #{tpu_custom_call.1} parent=11 // pred_region
          %s430 = ssub.s32 256, 256
          %431 = vsyncadd [#allocation14], %s430
          %s433 = sshll.u32 [#allocation13], 4
          %s434 = int_to_ptr.vmem [resolvable:$true] %s433
          %436 = dma.hbm_to_vmem [thread:$0]  %s7, 256, %s434, [#allocation14]
        $region28: #{tpu_custom_call.1} parent=11 // pred_fallthru
          _
        // Predicated region
        $region29: #{tpu_custom_call.1} parent=11 // pred_check
          %p437 = pneg %p222
        $region30: #{tpu_custom_call.1} parent=11 // pred_check_branch
          %439 = sbr.rel (%p437) target = $region32
        $region31: #{tpu_custom_call.1} parent=11 // pred_region
          %s441 = ssub.s32 256, 256
          %442 = vsyncadd [#allocation14], %s441
          %s444 = sshll.u32 [#allocation15], 4
          %s445 = int_to_ptr.vmem [resolvable:$true] %s444
          %447 = dma.hbm_to_vmem [thread:$0]  %s8, 256, %s445, [#allocation14]
        $region32: #{tpu_custom_call.1} parent=11 // pred_fallthru
          _
        // Predicated region
        $region33: #{tpu_custom_call.1} parent=11 // pred_check
          %p448 = pneg %p243
        $region34: #{tpu_custom_call.1} parent=11 // pred_check_branch
          %450 = sbr.rel (%p448) target = $region36
        $region35: #{tpu_custom_call.1} parent=11 // pred_region
          %s452 = ssub.s32 4096, 4096
          %453 = vsyncadd [#allocation17], %s452
          %s454 = sshll.u32 [#allocation16], 4
          %s455 = int_to_ptr.vmem [resolvable:$true] %s454
          %460 = dma.hbm_to_vmem [thread:$0]  %s9, 4096, %s455, [#allocation17], 128, 128, 8
        $region36: #{tpu_custom_call.1} parent=11 // pred_fallthru
          _
        // Predicated region
        $region37: #{tpu_custom_call.1} parent=11 // pred_check
          %p461 = pneg %p264
        $region38: #{tpu_custom_call.1} parent=11 // pred_check_branch
          %463 = sbr.rel (%p461) target = $region40
        $region39: #{tpu_custom_call.1} parent=11 // pred_region
          _
        $region40: #{tpu_custom_call.1} parent=11 // pred_fallthru
          _
        // Predicated region
        $region41: #{tpu_custom_call.1} parent=11 // pred_check
          %p464 = pneg %p285
        $region42: #{tpu_custom_call.1} parent=11 // pred_check_branch
          %466 = sbr.rel (%p464) target = $region44
        $region43: #{tpu_custom_call.1} parent=11 // pred_region
          %s468 = ssub.s32 16384, 16384
          %469 = vsyncadd [#allocation17], %s468
          %s470 = sshll.u32 [#allocation18], 4
          %s471 = int_to_ptr.vmem [resolvable:$true] %s470
          %476 = dma.hbm_to_vmem [thread:$0]  %s11, 16384, %s471, [#allocation17], 512, 512, 32
        $region44: #{tpu_custom_call.1} parent=11 // pred_fallthru
          _
        // Predicated region
        $region45: #{tpu_custom_call.1} parent=11 // pred_check
          %p477 = pneg %p306
        $region46: #{tpu_custom_call.1} parent=11 // pred_check_branch
          %479 = sbr.rel (%p477) target = $region48
        $region47: #{tpu_custom_call.1} parent=11 // pred_region
          %s481 = ssub.s32 8192, 8192
          %482 = vsyncadd [#allocation20], %s481
          %s483 = sshll.u32 [#allocation19], 4
          %s484 = int_to_ptr.vmem [resolvable:$true] %s483
          %489 = dma.hbm_to_vmem [thread:$0]  %s12, 8192, %s484, [#allocation20], 128, 128, 8
        $region48: #{tpu_custom_call.1} parent=11 // pred_fallthru
          _
      $region12: #{tpu_custom_call.1} parent=5 // pred_fallthru
        _
      %p490 = scmp.lt.s32.totalorder %s39, 2
      // Predicated region
      $region49: #{tpu_custom_call.1} parent=5 // pred_check
        %p491 = pneg %p490
      $region50: #{tpu_custom_call.1} parent=5 // pred_check_branch
        %493 = sbr.rel (%p491) target = $region52
      $region51: #{tpu_custom_call.1} parent=5 // pred_region
        // Predicated region
        $region53: #{tpu_custom_call.1} parent=51 // pred_check
          %p494 = pneg %p59
        $region54: #{tpu_custom_call.1} parent=51 // pred_check_branch
          %496 = sbr.rel (%p494) target = $region56
        $region55: #{tpu_custom_call.1} parent=51 // pred_region
          %s497 = sand.u32 %s49, 1
          %s498 = scalar_lea.sflag [#allocation5], %s497
          %s499 = sand.u32 %s49, 1
          %s500 = smul.addr %s499, 16
          %s501 = scalar_lea.vmem [#allocation4], %s500
          %s503 = ssub.s32 256, 256
          %504 = vsyncadd %s498, %s503
          %s505 = smul.addr %s39, 2
          %s506 = smul.addr %s505, 128
          %s507 = scalar_lea.hbm %s1, %s506
          %s509 = sshll.u32 %s501, 4
          %s510 = int_to_ptr.vmem [resolvable:$true] %s509
          %512 = dma.hbm_to_vmem [thread:$0]  %s507, 256, %s510, %s498
        $region56: #{tpu_custom_call.1} parent=51 // pred_fallthru
          _
        // Predicated region
        $region57: #{tpu_custom_call.1} parent=51 // pred_check
          %p513 = pneg %p85
        $region58: #{tpu_custom_call.1} parent=51 // pred_check_branch
          %515 = sbr.rel (%p513) target = $region60
        $region59: #{tpu_custom_call.1} parent=51 // pred_region
          %s516 = sand.u32 %s39, 1
          %s517 = scalar_lea.sflag [#allocation8], %s516
          %s518 = sand.u32 %s75, 1
          %s519 = smul.addr %s518, 16
          %s520 = scalar_lea.vmem [#allocation7], %s519
          %s522 = ssub.s32 256, 256
          %523 = vsyncadd %s517, %s522
          %s524 = smul.addr %s39, 2
          %s525 = smul.addr %s524, 128
          %s526 = scalar_lea.hbm %s2, %s525
          %s527 = sshll.u32 %s520, 4
          %s528 = int_to_ptr.vmem [resolvable:$true] %s527
          %533 = dma.hbm_to_vmem [thread:$0]  %s526, 256, %s528, %s517, 128, 128, 8
        $region60: #{tpu_custom_call.1} parent=51 // pred_fallthru
          _
        // Predicated region
        $region61: #{tpu_custom_call.1} parent=51 // pred_check
          %p534 = pneg %p111
        $region62: #{tpu_custom_call.1} parent=51 // pred_check_branch
          %536 = sbr.rel (%p534) target = $region64
        $region63: #{tpu_custom_call.1} parent=51 // pred_region
          %s537 = sand.u32 %s39, 1
          %s538 = scalar_lea.sflag [#allocation8], %s537
          %s539 = sand.u32 %s101, 1
          %s540 = smul.addr %s539, 16
          %s541 = scalar_lea.vmem [#allocation9], %s540
          %s543 = ssub.s32 256, 256
          %544 = vsyncadd %s538, %s543
          %s545 = smul.addr %s39, 2
          %s546 = smul.addr %s545, 128
          %s547 = scalar_lea.hbm %s3, %s546
          %s548 = sshll.u32 %s541, 4
          %s549 = int_to_ptr.vmem [resolvable:$true] %s548
          %554 = dma.hbm_to_vmem [thread:$0]  %s547, 256, %s549, %s538, 128, 128, 8
        $region64: #{tpu_custom_call.1} parent=51 // pred_fallthru
          _
      $region52: #{tpu_custom_call.1} parent=5 // pred_fallthru
        _
      %p555 = scmp.le.s32.totalorder 1, %s39
      %p556 = scmp.lt.s32.totalorder %s39, 3
      %p557 = pnand %p555, %p556
      %p558 = pneg %p557
      // Predicated region
      $region65: #{tpu_custom_call.1} parent=5 // pred_check
        _
      $region66: #{tpu_custom_call.1} parent=5 // pred_check_branch
        %560 = sbr.rel (%p557) target = $region68
      $region67: #{tpu_custom_call.1} parent=5 // pred_region
        %s561 = ssub.s32 %s39, 1
        %s562 = sand.u32 %s52, 1
        %s563 = scalar_lea.sflag [#allocation5], %s562
        %s564 = sand.u32 %s52, 1
        %s565 = smul.addr %s564, 16
        %s566 = scalar_lea.vmem [#allocation4], %s565
        // Predicated region
        $region69: #{tpu_custom_call.1} parent=67 // pred_check
          %p567 = pneg %p65
        $region70: #{tpu_custom_call.1} parent=67 // pred_check_branch
          %569 = sbr.rel (%p567) target = $region72
        $region71: #{tpu_custom_call.1} parent=67 // pred_region
          %570 = dma.done %s563, 256
        $region72: #{tpu_custom_call.1} parent=67 // pred_fallthru
          _
        %s571 = sand.u32 %s44, 1
        %s572 = scalar_lea.sflag [#allocation8], %s571
        %s573 = sand.u32 %s78, 1
        %s574 = smul.addr %s573, 16
        %s575 = scalar_lea.vmem [#allocation7], %s574
        // Predicated region
        $region73: #{tpu_custom_call.1} parent=67 // pred_check
          %p576 = pneg %p91
        $region74: #{tpu_custom_call.1} parent=67 // pred_check_branch
          %578 = sbr.rel (%p576) target = $region76
        $region75: #{tpu_custom_call.1} parent=67 // pred_region
          %579 = dma.done %s572, 256
        $region76: #{tpu_custom_call.1} parent=67 // pred_fallthru
          _
        %s580 = sand.u32 %s44, 1
        %s581 = scalar_lea.sflag [#allocation8], %s580
        %s582 = sand.u32 %s104, 1
        %s583 = smul.addr %s582, 16
        %s584 = scalar_lea.vmem [#allocation9], %s583
        // Predicated region
        $region77: #{tpu_custom_call.1} parent=67 // pred_check
          %p585 = pneg %p117
        $region78: #{tpu_custom_call.1} parent=67 // pred_check_branch
          %587 = sbr.rel (%p585) target = $region80
        $region79: #{tpu_custom_call.1} parent=67 // pred_region
          %588 = dma.done %s581, 256
        $region80: #{tpu_custom_call.1} parent=67 // pred_fallthru
          _
        // Predicated region
        $region81: #{tpu_custom_call.1} parent=67 // pred_check
          %p589 = pneg %p138
        $region82: #{tpu_custom_call.1} parent=67 // pred_check_branch
          %591 = sbr.rel (%p589) target = $region84
        $region83: #{tpu_custom_call.1} parent=67 // pred_region
          %592 = dma.done [#allocation11], 128
        $region84: #{tpu_custom_call.1} parent=67 // pred_fallthru
          _
        // Predicated region
        $region85: #{tpu_custom_call.1} parent=67 // pred_check
          %p593 = pneg %p180
        $region86: #{tpu_custom_call.1} parent=67 // pred_check_branch
          %595 = sbr.rel (%p593) target = $region88
        $region87: #{tpu_custom_call.1} parent=67 // pred_region
          %596 = dma.done [#allocation11], 8192
        $region88: #{tpu_custom_call.1} parent=67 // pred_fallthru
          _
        // Predicated region
        $region89: #{tpu_custom_call.1} parent=67 // pred_check
          %p597 = pneg %p201
        $region90: #{tpu_custom_call.1} parent=67 // pred_check_branch
          %599 = sbr.rel (%p597) target = $region92
        $region91: #{tpu_custom_call.1} parent=67 // pred_region
          %600 = dma.done [#allocation14], 256
        $region92: #{tpu_custom_call.1} parent=67 // pred_fallthru
          _
        // Predicated region
        $region93: #{tpu_custom_call.1} parent=67 // pred_check
          %p601 = pneg %p222
        $region94: #{tpu_custom_call.1} parent=67 // pred_check_branch
          %603 = sbr.rel (%p601) target = $region96
        $region95: #{tpu_custom_call.1} parent=67 // pred_region
          %604 = dma.done [#allocation14], 256
        $region96: #{tpu_custom_call.1} parent=67 // pred_fallthru
          _
        // Predicated region
        $region97: #{tpu_custom_call.1} parent=67 // pred_check
          %p605 = pneg %p243
        $region98: #{tpu_custom_call.1} parent=67 // pred_check_branch
          %607 = sbr.rel (%p605) target = $region100
        $region99: #{tpu_custom_call.1} parent=67 // pred_region
          %608 = dma.done [#allocation17], 4096
        $region100: #{tpu_custom_call.1} parent=67 // pred_fallthru
          _
        // Predicated region
        $region101: #{tpu_custom_call.1} parent=67 // pred_check
          %p609 = pneg %p285
        $region102: #{tpu_custom_call.1} parent=67 // pred_check_branch
          %611 = sbr.rel (%p609) target = $region104
        $region103: #{tpu_custom_call.1} parent=67 // pred_region
          %612 = dma.done [#allocation17], 16384
        $region104: #{tpu_custom_call.1} parent=67 // pred_fallthru
          _
        // Predicated region
        $region105: #{tpu_custom_call.1} parent=67 // pred_check
          %p613 = pneg %p306
        $region106: #{tpu_custom_call.1} parent=67 // pred_check_branch
          %615 = sbr.rel (%p613) target = $region108
        $region107: #{tpu_custom_call.1} parent=67 // pred_region
          %616 = dma.done [#allocation20], 8192
        $region108: #{tpu_custom_call.1} parent=67 // pred_fallthru
          _
        %s617 = sand.u32 %s52, 1
        %s618 = scalar_lea.sflag [#allocation5], %s617
        %s619 = sand.u32 %s52, 1
        %s620 = smul.addr %s619, 16
        %s621 = scalar_lea.vmem [#allocation4], %s620
        %p622 = pneg %p65
        %p623 = pneg %p62
        %s624 = sand.u32 %s44, 1
        %s625 = scalar_lea.sflag [#allocation8], %s624
        %s626 = sand.u32 %s78, 1
        %s627 = smul.addr %s626, 16
        %s628 = scalar_lea.vmem [#allocation7], %s627
        %p629 = pneg %p91
        %p630 = pneg %p88
        %s631 = sand.u32 %s44, 1
        %s632 = scalar_lea.sflag [#allocation8], %s631
        %s633 = sand.u32 %s104, 1
        %s634 = smul.addr %s633, 16
        %s635 = scalar_lea.vmem [#allocation9], %s634
        %p636 = pneg %p117
        %p637 = pneg %p114
        %p638 = pneg %p138
        %p639 = pneg %p135
        %p640 = pneg %p159
        %p641 = pneg %p156
        %p642 = pneg %p180
        %p643 = pneg %p177
        %p644 = pneg %p201
        %p645 = pneg %p198
        %p646 = pneg %p222
        %p647 = pneg %p219
        %p648 = pneg %p243
        %p649 = pneg %p240
        %p650 = pneg %p264
        %p651 = pneg %p261
        %p652 = pneg %p285
        %p653 = pneg %p282
        %p654 = pneg %p306
        %p655 = pneg %p303
        %p656 = pneg %p332
        %p657 = pneg %p329
        %s658 = sand.u32 %s319, 1
        %s659 = scalar_lea.sflag [#allocation6], %s658
        %s660 = sand.u32 %s319, 1
        %s661 = smul.addr %s660, 16
        %s662 = scalar_lea.vmem [#allocation21], %s661
        %p663 = pneg %p358
        %p664 = pneg %p355
        %s665 = sand.u32 %s44, 1
        %s666 = scalar_lea.sflag [#allocation23], %s665
        %s667 = sand.u32 %s345, 1
        %s668 = smul.addr %s667, 16
        %s669 = scalar_lea.vmem [#allocation22], %s668
        %p670 = pneg %p384
        %p671 = pneg %p381
        %s672 = sand.u32 %s44, 1
        %s673 = scalar_lea.sflag [#allocation23], %s672
        %s674 = sand.u32 %s371, 1
        %s675 = smul.addr %s674, 16
        %s676 = scalar_lea.vmem [#allocation24], %s675
        %s678 = sld [smem:[#allocation3]]
        %v679 = vld [vmem:[%s566] sm:$0xff]
        %v680 = vld [vmem:[%s566 + $0x8] sm:$0xff]
        %v681 = vld [vmem:[%s5] sm:$0x3]
        %v682 = vmul.f32 %v679, %v679
        %v683 = vmul.f32 %v680, %v680
        %v684 = vadd.f32 %v682, %v683
        %685 = vadd.xlane.f32.xlu0 %v684
        %v686 = vpop.xlane.xlu0 %685
        %v687 = vrcp.pop 256.0
        %v688 = vmul.f32 %v686, %v687
        %v689 = vadd.f32 %v688, 1e-05
        %v690 = vrsqrt.pop %v689
        %v691 = vmul.f32 %v679, %v690
        %v692 = vmul.f32 %v680, %v690
        %v694 = vlaneseq
        %v695 = vshrl.u32 %v694, 7
        %v696 = vsub.s32 0, %v695
        %v697 = vrot.slane %v681, %v696
        %v698 = vlaneseq
        %v699 = vshrl.u32 %v698, 7
        %v700 = vsub.s32 1, %v699
        %v701 = vrot.slane %v681, %v700
        %v704 = vmul.f32 %v691, %v697
        %v705 = vmul.f32 %v692, %v701
        %v706 = vpack.c.bf16 %v704, %v704
        %v707 = vpack.c.bf16 %v705, %v705
        %v708 = vld [vmem:[#allocation12] sm:$0xff]
        %v709 = vld [vmem:[#allocation12 + $0x8] sm:$0xff]
        %v710 = vld [vmem:[#allocation12 + $0x10] sm:$0xff]
        %v711 = vld [vmem:[#allocation12 + $0x18] sm:$0xff]
        %v712 = vld [vmem:[#allocation12 + $0x20] sm:$0xff]
        %v713 = vld [vmem:[#allocation12 + $0x28] sm:$0xff]
        %v714 = vld [vmem:[#allocation12 + $0x30] sm:$0xff]
        %v715 = vld [vmem:[#allocation12 + $0x38] sm:$0xff]
        %v716 = vld [vmem:[#allocation12 + $0x40] sm:$0xff]
        %v717 = vld [vmem:[#allocation12 + $0x48] sm:$0xff]
        %v718 = vld [vmem:[#allocation12 + $0x50] sm:$0xff]
        %v719 = vld [vmem:[#allocation12 + $0x58] sm:$0xff]
        %v720 = vld [vmem:[#allocation12 + $0x60] sm:$0xff]
        %v721 = vld [vmem:[#allocation12 + $0x68] sm:$0xff]
        %v722 = vld [vmem:[#allocation12 + $0x70] sm:$0xff]
        %v723 = vld [vmem:[#allocation12 + $0x78] sm:$0xff]
        %v724 = vld [vmem:[#allocation12 + $0x80] sm:$0xff]
        %v725 = vld [vmem:[#allocation12 + $0x88] sm:$0xff]
        %v726 = vld [vmem:[#allocation12 + $0x90] sm:$0xff]
        %v727 = vld [vmem:[#allocation12 + $0x98] sm:$0xff]
        %v728 = vld [vmem:[#allocation12 + $0xa0] sm:$0xff]
        %v729 = vld [vmem:[#allocation12 + $0xa8] sm:$0xff]
        %v730 = vld [vmem:[#allocation12 + $0xb0] sm:$0xff]
        %v731 = vld [vmem:[#allocation12 + $0xb8] sm:$0xff]
        %v732 = vld [vmem:[#allocation12 + $0xc0] sm:$0xff]
        %v733 = vld [vmem:[#allocation12 + $0xc8] sm:$0xff]
        %v734 = vld [vmem:[#allocation12 + $0xd0] sm:$0xff]
        %v735 = vld [vmem:[#allocation12 + $0xd8] sm:$0xff]
        %v736 = vld [vmem:[#allocation12 + $0xe0] sm:$0xff]
        %v737 = vld [vmem:[#allocation12 + $0xe8] sm:$0xff]
        %v738 = vld [vmem:[#allocation12 + $0xf0] sm:$0xff]
        %v739 = vld [vmem:[#allocation12 + $0xf8] sm:$0xff]
        %v740 = vld [vmem:[#allocation12 + $0x100] sm:$0xff]
        %v741 = vld [vmem:[#allocation12 + $0x108] sm:$0xff]
        %v742 = vld [vmem:[#allocation12 + $0x110] sm:$0xff]
        %v743 = vld [vmem:[#allocation12 + $0x118] sm:$0xff]
        %v744 = vld [vmem:[#allocation12 + $0x120] sm:$0xff]
        %v745 = vld [vmem:[#allocation12 + $0x128] sm:$0xff]
        %v746 = vld [vmem:[#allocation12 + $0x130] sm:$0xff]
        %v747 = vld [vmem:[#allocation12 + $0x138] sm:$0xff]
        %v748 = vld [vmem:[#allocation12 + $0x140] sm:$0xff]
        %v749 = vld [vmem:[#allocation12 + $0x148] sm:$0xff]
        %v750 = vld [vmem:[#allocation12 + $0x150] sm:$0xff]
        %v751 = vld [vmem:[#allocation12 + $0x158] sm:$0xff]
        %v752 = vld [vmem:[#allocation12 + $0x160] sm:$0xff]
        %v753 = vld [vmem:[#allocation12 + $0x168] sm:$0xff]
        %v754 = vld [vmem:[#allocation12 + $0x170] sm:$0xff]
        %v755 = vld [vmem:[#allocation12 + $0x178] sm:$0xff]
        %v756 = vld [vmem:[#allocation12 + $0x180] sm:$0xff]
        %v757 = vld [vmem:[#allocation12 + $0x188] sm:$0xff]
        %v758 = vld [vmem:[#allocation12 + $0x190] sm:$0xff]
        %v759 = vld [vmem:[#allocation12 + $0x198] sm:$0xff]
        %v760 = vld [vmem:[#allocation12 + $0x1a0] sm:$0xff]
        %v761 = vld [vmem:[#allocation12 + $0x1a8] sm:$0xff]
        %v762 = vld [vmem:[#allocation12 + $0x1b0] sm:$0xff]
        %v763 = vld [vmem:[#allocation12 + $0x1b8] sm:$0xff]
        %v764 = vld [vmem:[#allocation12 + $0x1c0] sm:$0xff]
        %v765 = vld [vmem:[#allocation12 + $0x1c8] sm:$0xff]
        %v766 = vld [vmem:[#allocation12 + $0x1d0] sm:$0xff]
        %v767 = vld [vmem:[#allocation12 + $0x1d8] sm:$0xff]
        %v768 = vld [vmem:[#allocation12 + $0x1e0] sm:$0xff]
        %v769 = vld [vmem:[#allocation12 + $0x1e8] sm:$0xff]
        %v770 = vld [vmem:[#allocation12 + $0x1f0] sm:$0xff]
        %v771 = vld [vmem:[#allocation12 + $0x1f8] sm:$0xff]
        %v836 = vunpack.c.l.b16 %v708
        %v837 = vunpack.c.h.b16 %v708
        %v838 = vunpack.c.l.b16 %v709
        %v839 = vunpack.c.h.b16 %v709
        %v840 = vunpack.c.l.b16 %v710
        %v841 = vunpack.c.h.b16 %v710
        %v842 = vunpack.c.l.b16 %v711
        %v843 = vunpack.c.h.b16 %v711
        %v844 = vunpack.c.l.b16 %v712
        %v845 = vunpack.c.h.b16 %v712
        %v846 = vunpack.c.l.b16 %v713
        %v847 = vunpack.c.h.b16 %v713
        %v848 = vunpack.c.l.b16 %v714
        %v849 = vunpack.c.h.b16 %v714
        %v850 = vunpack.c.l.b16 %v715
        %v851 = vunpack.c.h.b16 %v715
        %v852 = vunpack.c.l.b16 %v716
        %v853 = vunpack.c.h.b16 %v716
        %v854 = vunpack.c.l.b16 %v717
        %v855 = vunpack.c.h.b16 %v717
        %v856 = vunpack.c.l.b16 %v718
        %v857 = vunpack.c.h.b16 %v718
        %v858 = vunpack.c.l.b16 %v719
        %v859 = vunpack.c.h.b16 %v719
        %v860 = vunpack.c.l.b16 %v720
        %v861 = vunpack.c.h.b16 %v720
        %v862 = vunpack.c.l.b16 %v721
        %v863 = vunpack.c.h.b16 %v721
        %v864 = vunpack.c.l.b16 %v722
        %v865 = vunpack.c.h.b16 %v722
        %v866 = vunpack.c.l.b16 %v723
        %v867 = vunpack.c.h.b16 %v723
        %v868 = vunpack.c.l.b16 %v724
        %v869 = vunpack.c.h.b16 %v724
        %v870 = vunpack.c.l.b16 %v725
        %v871 = vunpack.c.h.b16 %v725
        %v872 = vunpack.c.l.b16 %v726
        %v873 = vunpack.c.h.b16 %v726
        %v874 = vunpack.c.l.b16 %v727
        %v875 = vunpack.c.h.b16 %v727
        %v876 = vunpack.c.l.b16 %v728
        %v877 = vunpack.c.h.b16 %v728
        %v878 = vunpack.c.l.b16 %v729
        %v879 = vunpack.c.h.b16 %v729
        %v880 = vunpack.c.l.b16 %v730
        %v881 = vunpack.c.h.b16 %v730
        %v882 = vunpack.c.l.b16 %v731
        %v883 = vunpack.c.h.b16 %v731
        %v884 = vunpack.c.l.b16 %v732
        %v885 = vunpack.c.h.b16 %v732
        %v886 = vunpack.c.l.b16 %v733
        %v887 = vunpack.c.h.b16 %v733
        %v888 = vunpack.c.l.b16 %v734
        %v889 = vunpack.c.h.b16 %v734
        %v890 = vunpack.c.l.b16 %v735
        %v891 = vunpack.c.h.b16 %v735
        %v892 = vunpack.c.l.b16 %v736
        %v893 = vunpack.c.h.b16 %v736
        %v894 = vunpack.c.l.b16 %v737
        %v895 = vunpack.c.h.b16 %v737
        %v896 = vunpack.c.l.b16 %v738
        %v897 = vunpack.c.h.b16 %v738
        %v898 = vunpack.c.l.b16 %v739
        %v899 = vunpack.c.h.b16 %v739
        %v900 = vunpack.c.l.b16 %v740
        %v901 = vunpack.c.h.b16 %v740
        %v902 = vunpack.c.l.b16 %v741
        %v903 = vunpack.c.h.b16 %v741
        %v904 = vunpack.c.l.b16 %v742
        %v905 = vunpack.c.h.b16 %v742
        %v906 = vunpack.c.l.b16 %v743
        %v907 = vunpack.c.h.b16 %v743
        %v908 = vunpack.c.l.b16 %v744
        %v909 = vunpack.c.h.b16 %v744
        %v910 = vunpack.c.l.b16 %v745
        %v911 = vunpack.c.h.b16 %v745
        %v912 = vunpack.c.l.b16 %v746
        %v913 = vunpack.c.h.b16 %v746
        %v914 = vunpack.c.l.b16 %v747
        %v915 = vunpack.c.h.b16 %v747
        %v916 = vunpack.c.l.b16 %v748
        %v917 = vunpack.c.h.b16 %v748
        %v918 = vunpack.c.l.b16 %v749
        %v919 = vunpack.c.h.b16 %v749
        %v920 = vunpack.c.l.b16 %v750
        %v921 = vunpack.c.h.b16 %v750
        %v922 = vunpack.c.l.b16 %v751
        %v923 = vunpack.c.h.b16 %v751
        %v924 = vunpack.c.l.b16 %v752
        %v925 = vunpack.c.h.b16 %v752
        %v926 = vunpack.c.l.b16 %v753
        %v927 = vunpack.c.h.b16 %v753
        %v928 = vunpack.c.l.b16 %v754
        %v929 = vunpack.c.h.b16 %v754
        %v930 = vunpack.c.l.b16 %v755
        %v931 = vunpack.c.h.b16 %v755
        %v932 = vunpack.c.l.b16 %v756
        %v933 = vunpack.c.h.b16 %v756
        %v934 = vunpack.c.l.b16 %v757
        %v935 = vunpack.c.h.b16 %v757
        %v936 = vunpack.c.l.b16 %v758
        %v937 = vunpack.c.h.b16 %v758
        %v938 = vunpack.c.l.b16 %v759
        %v939 = vunpack.c.h.b16 %v759
        %v940 = vunpack.c.l.b16 %v760
        %v941 = vunpack.c.h.b16 %v760
        %v942 = vunpack.c.l.b16 %v761
        %v943 = vunpack.c.h.b16 %v761
        %v944 = vunpack.c.l.b16 %v762
        %v945 = vunpack.c.h.b16 %v762
        %v946 = vunpack.c.l.b16 %v763
        %v947 = vunpack.c.h.b16 %v763
        %v948 = vunpack.c.l.b16 %v764
        %v949 = vunpack.c.h.b16 %v764
        %v950 = vunpack.c.l.b16 %v765
        %v951 = vunpack.c.h.b16 %v765
        %v952 = vunpack.c.l.b16 %v766
        %v953 = vunpack.c.h.b16 %v766
        %v954 = vunpack.c.l.b16 %v767
        %v955 = vunpack.c.h.b16 %v767
        %v956 = vunpack.c.l.b16 %v768
        %v957 = vunpack.c.h.b16 %v768
        %v958 = vunpack.c.l.b16 %v769
        %v959 = vunpack.c.h.b16 %v769
        %v960 = vunpack.c.l.b16 %v770
        %v961 = vunpack.c.h.b16 %v770
        %v962 = vunpack.c.l.b16 %v771
        %v963 = vunpack.c.h.b16 %v771
        %v964 = vpack.c.b16 %v840, %v836
        %v965 = vpack.c.b16 %v841, %v837
        %v966 = vpack.c.b16 %v842, %v838
        %v967 = vpack.c.b16 %v843, %v839
        %v968 = vpack.c.b16 %v848, %v844
        %v969 = vpack.c.b16 %v849, %v845
        %v970 = vpack.c.b16 %v850, %v846
        %v971 = vpack.c.b16 %v851, %v847
        %v972 = vpack.c.b16 %v856, %v852
        %v973 = vpack.c.b16 %v857, %v853
        %v974 = vpack.c.b16 %v858, %v854
        %v975 = vpack.c.b16 %v859, %v855
        %v976 = vpack.c.b16 %v864, %v860
        %v977 = vpack.c.b16 %v865, %v861
        %v978 = vpack.c.b16 %v866, %v862
        %v979 = vpack.c.b16 %v867, %v863
        %v980 = vpack.c.b16 %v872, %v868
        %v981 = vpack.c.b16 %v873, %v869
        %v982 = vpack.c.b16 %v874, %v870
        %v983 = vpack.c.b16 %v875, %v871
        %v984 = vpack.c.b16 %v880, %v876
        %v985 = vpack.c.b16 %v881, %v877
        %v986 = vpack.c.b16 %v882, %v878
        %v987 = vpack.c.b16 %v883, %v879
        %v988 = vpack.c.b16 %v888, %v884
        %v989 = vpack.c.b16 %v889, %v885
        %v990 = vpack.c.b16 %v890, %v886
        %v991 = vpack.c.b16 %v891, %v887
        %v992 = vpack.c.b16 %v896, %v892
        %v993 = vpack.c.b16 %v897, %v893
        %v994 = vpack.c.b16 %v898, %v894
        %v995 = vpack.c.b16 %v899, %v895
        %v996 = vpack.c.b16 %v904, %v900
        %v997 = vpack.c.b16 %v905, %v901
        %v998 = vpack.c.b16 %v906, %v902
        %v999 = vpack.c.b16 %v907, %v903
        %v1000 = vpack.c.b16 %v912, %v908
        %v1001 = vpack.c.b16 %v913, %v909
        %v1002 = vpack.c.b16 %v914, %v910
        %v1003 = vpack.c.b16 %v915, %v911
        %v1004 = vpack.c.b16 %v920, %v916
        %v1005 = vpack.c.b16 %v921, %v917
        %v1006 = vpack.c.b16 %v922, %v918
        %v1007 = vpack.c.b16 %v923, %v919
        %v1008 = vpack.c.b16 %v928, %v924
        %v1009 = vpack.c.b16 %v929, %v925
        %v1010 = vpack.c.b16 %v930, %v926
        %v1011 = vpack.c.b16 %v931, %v927
        %v1012 = vpack.c.b16 %v936, %v932
        %v1013 = vpack.c.b16 %v937, %v933
        %v1014 = vpack.c.b16 %v938, %v934
        %v1015 = vpack.c.b16 %v939, %v935
        %v1016 = vpack.c.b16 %v944, %v940
        %v1017 = vpack.c.b16 %v945, %v941
        %v1018 = vpack.c.b16 %v946, %v942
        %v1019 = vpack.c.b16 %v947, %v943
        %v1020 = vpack.c.b16 %v952, %v948
        %v1021 = vpack.c.b16 %v953, %v949
        %v1022 = vpack.c.b16 %v954, %v950
        %v1023 = vpack.c.b16 %v955, %v951
        %v1024 = vpack.c.b16 %v960, %v956
        %v1025 = vpack.c.b16 %v961, %v957
        %v1026 = vpack.c.b16 %v962, %v958
        %v1027 = vpack.c.b16 %v963, %v959
        %1092 = vmatprep.subr.bf16.mxu0 %v993
        %1093 = vmatpush1.bf16.msra.mxu0 %v992
        %1094 = vmatprep.subr.bf16.mxu0 %v989
        %1095 = vmatpush1.bf16.msra.mxu0 %v988
        %1096 = vmatprep.subr.bf16.mxu0 %v985
        %1097 = vmatpush1.bf16.msra.mxu0 %v984
        %1098 = vmatprep.subr.bf16.mxu0 %v981
        %1099 = vmatpush1.bf16.msra.mxu0 %v980
        %1100 = vmatprep.subr.bf16.mxu0 %v977
        %1101 = vmatpush1.bf16.msra.mxu0 %v976
        %1102 = vmatprep.subr.bf16.mxu0 %v973
        %1103 = vmatpush1.bf16.msra.mxu0 %v972
        %1104 = vmatprep.subr.bf16.mxu0 %v969
        %1105 = vmatpush1.bf16.msra.mxu0 %v968
        %1106 = vmatprep.subr.bf16.mxu0 %v965
        %1107 = vmatpush1.bf16.msra.mxu0 %v964
        %1108 = vmatprep.subr.bf16.mxu0 %v1025
        %1109 = vmatpush2.bf16.msra.mxu0 %v1024
        %1110 = vmatprep.subr.bf16.mxu0 %v1021
        %1111 = vmatpush2.bf16.msra.mxu0 %v1020
        %1112 = vmatprep.subr.bf16.mxu0 %v1017
        %1113 = vmatpush2.bf16.msra.mxu0 %v1016
        %1114 = vmatprep.subr.bf16.mxu0 %v1013
        %1115 = vmatpush2.bf16.msra.mxu0 %v1012
        %1116 = vmatprep.subr.bf16.mxu0 %v1009
        %1117 = vmatpush2.bf16.msra.mxu0 %v1008
        %1118 = vmatprep.subr.bf16.mxu0 %v1005
        %1119 = vmatpush2.bf16.msra.mxu0 %v1004
        %1120 = vmatprep.subr.bf16.mxu0 %v1001
        %1121 = vmatpush2.bf16.msra.mxu0 %v1000
        %1122 = vmatprep.subr.bf16.mxu0 %v997
        %1123 = vmatpush2.bf16.msra.mxu0 %v996
        %1124 = vmatprep.mubr.bf16.mxu0 %v707
        %1125 = vmatmul.mubr.bf16.gmra.mxu0 %v706
        %v1126 = vpop.f32.mrf.mxu0
        %v1127 = vadd.f32 0.0, %v1126
        %v1128 = vpop.f32.mrf.mxu0
        %v1129 = vadd.f32 0.0, %v1128
        %v1130 = vpop.f32.mrf.mxu0
        %v1131 = vpop.f32.mrf.mxu0
        %1132 = vdwg.mxu0
        %1133 = vmatprep.subr.bf16.mxu0 %v995
        %1134 = vmatpush1.bf16.msra.mxu0 %v994
        %1135 = vmatprep.subr.bf16.mxu0 %v991
        %1136 = vmatpush1.bf16.msra.mxu0 %v990
        %1137 = vmatprep.subr.bf16.mxu0 %v987
        %1138 = vmatpush1.bf16.msra.mxu0 %v986
        %1139 = vmatprep.subr.bf16.mxu0 %v983
        %1140 = vmatpush1.bf16.msra.mxu0 %v982
        %1141 = vmatprep.subr.bf16.mxu0 %v979
        %1142 = vmatpush1.bf16.msra.mxu0 %v978
        %1143 = vmatprep.subr.bf16.mxu0 %v975
        %1144 = vmatpush1.bf16.msra.mxu0 %v974
        %1145 = vmatprep.subr.bf16.mxu0 %v971
        %1146 = vmatpush1.bf16.msra.mxu0 %v970
        %1147 = vmatprep.subr.bf16.mxu0 %v967
        %1148 = vmatpush1.bf16.msra.mxu0 %v966
        %1149 = vmatprep.subr.bf16.mxu0 %v1027
        %1150 = vmatpush2.bf16.msra.mxu0 %v1026
        %1151 = vmatprep.subr.bf16.mxu0 %v1023
        %1152 = vmatpush2.bf16.msra.mxu0 %v1022
        %1153 = vmatprep.subr.bf16.mxu0 %v1019
        %1154 = vmatpush2.bf16.msra.mxu0 %v1018
        %1155 = vmatprep.subr.bf16.mxu0 %v1015
        %1156 = vmatpush2.bf16.msra.mxu0 %v1014
        %1157 = vmatprep.subr.bf16.mxu0 %v1011
        %1158 = vmatpush2.bf16.msra.mxu0 %v1010
        %1159 = vmatprep.subr.bf16.mxu0 %v1007
        %1160 = vmatpush2.bf16.msra.mxu0 %v1006
        %1161 = vmatprep.subr.bf16.mxu0 %v1003
        %1162 = vmatpush2.bf16.msra.mxu0 %v1002
        %1163 = vmatprep.subr.bf16.mxu0 %v999
        %1164 = vmatpush2.bf16.msra.mxu0 %v998
        %1165 = vmatprep.mubr.bf16.mxu0 %v707
        %1166 = vmatmul.mubr.bf16.gmra.mxu0 %v706
        %v1167 = vpop.f32.mrf.mxu0
        %v1168 = vadd.f32 0.0, %v1167
        %v1169 = vpop.f32.mrf.mxu0
        %v1170 = vadd.f32 0.0, %v1169
        %v1171 = vpop.f32.mrf.mxu0
        %v1172 = vpop.f32.mrf.mxu0
        %1173 = vdwg.mxu0
        %v1174 = vld [vmem:[#allocation13] sm:$0xff]
        %v1175 = vld [vmem:[#allocation13 + $0x8] sm:$0xff]
        %v1176 = vld [vmem:[#allocation15] sm:$0xff]
        %v1177 = vld [vmem:[#allocation15 + $0x8] sm:$0xff]
        %v1178 = vlaneseq
        %v1179 = vand.u32 %v1178, 127
        %v1180 = vadd.s32 %v1179, 128
        %vm1181 = vcmp.lt.s32.totalorder %v1179, 0
        %v1182 = vsub.s32 0, %v1179
        %v1183 = vsel %vm1181, %v1182, %v1179
        %v1184 = vshrl.u32 %v1183, 1
        %v1185 = vand.u32 %v1183, 1
        %v1186 = vsub.s32 0, %v1185
        %v1187 = vsel %vm1181, %v1186, %v1185
        %vm1188 = vcmp.lt.s32.totalorder %v1180, 0
        %v1189 = vsub.s32 0, %v1180
        %v1190 = vsel %vm1188, %v1189, %v1180
        %v1191 = vshrl.u32 %v1190, 1
        %v1192 = vand.u32 %v1190, 1
        %v1193 = vsub.s32 0, %v1192
        %v1194 = vsel %vm1188, %v1193, %v1192
        %vm1195 = vcmp.ne.s32.totalorder %v1187, 0
        %vm1196 = vcmp.ne.s32.totalorder %v1194, 0
        %vm1197 = vcmp.lt.s32.totalorder %v1187, 0
        %vm1198 = vcmp.lt.s32.totalorder %v1194, 0
        %vm1199 = vmand %vm1197, %vm1195
        %vm1200 = vmand %vm1198, %vm1196
        %v1201 = vadd.s32 %v1187, 2
        %v1202 = vadd.s32 %v1194, 2
        %v1203 = vsel %vm1199, %v1201, %v1187
        %v1204 = vsel %vm1200, %v1202, %v1194
        %vm1205 = vcmp.eq.s32.totalorder %v1203, 0
        %vm1206 = vcmp.eq.s32.totalorder %v1204, 0
        %1207 = vrot.lane.b32.xlu0 %v1127, 127
        %v1208 = vpop.permute.xlu0 %1207
        %1209 = vrot.lane.b32.xlu0 %v1129, 127
        %v1210 = vpop.permute.xlu0 %1209
        %vm1211 = vcmp.lt.s32.totalorder %v1179, 127
        %v1212 = vsel %vm1211, %v1208, %v1210
        %v1213 = vsel %vm1211, %v1210, %v1208
        %1214 = vrot.lane.b32.xlu0 %v1127, 1
        %v1215 = vpop.permute.xlu0 %1214
        %1216 = vrot.lane.b32.xlu0 %v1129, 1
        %v1217 = vpop.permute.xlu0 %1216
        %vm1218 = vcmp.lt.s32.totalorder %v1179, 1
        %v1219 = vsel %vm1218, %v1215, %v1217
        %v1220 = vsel %vm1218, %v1217, %v1215
        %v1221 = vsel %vm1205, %v1212, %v1220
        %v1222 = vsel %vm1206, %v1213, %v1219
        %v1223 = vmul.f32 %v1127, %v1174
        %v1224 = vmul.f32 %v1129, %v1175
        %v1225 = vmul.f32 %v1221, %v1176
        %v1226 = vmul.f32 %v1222, %v1177
        %v1227 = vadd.f32 %v1223, %v1225
        %v1228 = vadd.f32 %v1224, %v1226
        %1229 = vrot.lane.b32.xlu0 %v1168, 127
        %v1230 = vpop.permute.xlu0 %1229
        %1231 = vrot.lane.b32.xlu0 %v1168, 1
        %v1232 = vpop.permute.xlu0 %1231
        %v1233 = vsel %vm1205, %v1230, %v1232
        %v1234 = vmul.f32 %v1168, %v1174
        %v1235 = vmul.f32 %v1233, %v1176
        %v1236 = vadd.f32 %v1234, %v1235
        %v1237 = vld [vmem:[%s575] sm:$0xff]
        %v1238 = vld [vmem:[%s575 + $0x8] sm:$0xff]
        %1239 = vst [vmem:[%s669] sm:$0xff] %v1237
        %1240 = vst [vmem:[%s669 + $0x8] sm:$0xff] %v1238
        %v1241 = vld [vmem:[%s584] sm:$0xff]
        %v1242 = vld [vmem:[%s584 + $0x8] sm:$0xff]
        %1243 = vst [vmem:[%s676] sm:$0xff] %v1241
        %1244 = vst [vmem:[%s676 + $0x8] sm:$0xff] %v1242
        %s1245 = scalar_lea.vmem %s669, %s678 [#allocation22]
        %1246 = vst [vmem:[%s1245] sm:$0xff] %v1236
        %s1247 = scalar_lea.vmem %s676, %s678 [#allocation24]
        %1248 = vst [vmem:[%s1247] sm:$0xff] %v1170
        %v1249 = vld [vmem:[%s669] sm:$0xff]
        %v1250 = vld [vmem:[%s669 + $0x8] sm:$0xff]
        %v1251 = vld [vmem:[%s676] sm:$0xff]
        %v1252 = vld [vmem:[%s676 + $0x8] sm:$0xff]
        %v1253 = vld [vmem:[#allocation10] sm:$0xff]
        %v1254 = vpack.c.bf16 %v1227, %v1227
        %v1255 = vpack.c.bf16 %v1250, %v1249
        %vm1256 = vcmask 523264
        %v1258 = vsel %vm1256, %v1254, 0
        %v1261 = vsel %vm1256, %v1255, 0
        %1263 = vmatprep.subr.bf16.mxu0 0
        %1264 = vmatpush1.bf16.xpose.msra.mxu0 0
        %1265 = vmatprep.subr.bf16.mxu0 0
        %1266 = vmatpush1.bf16.xpose.msra.mxu0 0
        %1267 = vmatprep.subr.bf16.mxu0 0
        %1268 = vmatpush1.bf16.xpose.msra.mxu0 0
        %1269 = vmatprep.subr.bf16.mxu0 0
        %1270 = vmatpush1.bf16.xpose.msra.mxu0 0
        %1271 = vmatprep.subr.bf16.mxu0 0
        %1272 = vmatpush1.bf16.xpose.msra.mxu0 0
        %1273 = vmatprep.subr.bf16.mxu0 0
        %1274 = vmatpush1.bf16.xpose.msra.mxu0 0
        %1275 = vmatprep.subr.bf16.mxu0 0
        %1276 = vmatpush1.bf16.xpose.msra.mxu0 0
        %1277 = vmatprep.subr.bf16.mxu0 0
        %1278 = vmatpush1.bf16.xpose.msra.mxu0 %v1261
        %1279 = vmatprep.subr.bf16.mxu0 0
        %1280 = vmatpush2.bf16.xpose.msra.mxu0 0
        %1281 = vmatprep.subr.bf16.mxu0 0
        %1282 = vmatpush2.bf16.xpose.msra.mxu0 0
        %1283 = vmatprep.subr.bf16.mxu0 0
        %1284 = vmatpush2.bf16.xpose.msra.mxu0 0
        %1285 = vmatprep.subr.bf16.mxu0 0
        %1286 = vmatpush2.bf16.xpose.msra.mxu0 0
        %1287 = vmatprep.subr.bf16.mxu0 0
        %1288 = vmatpush2.bf16.xpose.msra.mxu0 0
        %1289 = vmatprep.subr.bf16.mxu0 0
        %1290 = vmatpush2.bf16.xpose.msra.mxu0 0
        %1291 = vmatprep.subr.bf16.mxu0 0
        %1292 = vmatpush2.bf16.xpose.msra.mxu0 0
        %1293 = vmatprep.subr.bf16.mxu0 0
        %1294 = vmatpush2.bf16.xpose.msra.mxu0 0
        %1295 = vmatprep.mubr.bf16.mxu0 0
        %1296 = vmatmul.mubr.bf16.gmra.mxu0 %v1258
        %v1297 = vpop.f32.mrf.mxu0
        %v1298 = vadd.f32 0.0, %v1297
        %v1299 = vpop.f32.mrf.mxu0
        %v1300 = vpop.f32.mrf.mxu0
        %v1301 = vpop.f32.mrf.mxu0
        %1302 = vdwg.mxu0
        %v1303 = vmul.f32 %v1298, 0.125
        %v1304 = vadd.f32 %v1303, %v1253
        %vm1305 = vcmask 130048
        %v1306 = vsel %vm1305, %v1304, -inf
        %1307 = vmax.xlane.f32.xlu0 %v1306
        %v1308 = vpop.xlane.xlu0 %1307
        %v1309 = vsub.f32 %v1304, %v1308
        %v1310 = vmul.f32 %v1309, 1.442695
        %v1311 = vpow.pop %v1310
        %v1312 = vsel %vm1305, %v1311, 0.0
        %1313 = vadd.xlane.f32.xlu0 %v1312
        %v1314 = vpop.xlane.xlu0 %1313
        %v1315 = vrcp.pop %v1314
        %v1316 = vmul.f32 %v1311, %v1315
        %v1317 = vpack.c.bf16 %v1316, %v1316
        %v1318 = vpack.c.bf16 %v1252, %v1251
        %v1320 = vsel %vm1305, %v1317, 0
        %1322 = vmatprep.subr.bf16.mxu0 0
        %1323 = vmatpush1.bf16.msra.mxu0 0
        %1324 = vmatprep.subr.bf16.mxu0 0
        %1325 = vmatpush1.bf16.msra.mxu0 0
        %1326 = vmatprep.subr.bf16.mxu0 0
        %1327 = vmatpush1.bf16.msra.mxu0 0
        %1328 = vmatprep.subr.bf16.mxu0 0
        %1329 = vmatpush1.bf16.msra.mxu0 0
        %1330 = vmatprep.subr.bf16.mxu0 0
        %1331 = vmatpush1.bf16.msra.mxu0 0
        %1332 = vmatprep.subr.bf16.mxu0 0
        %1333 = vmatpush1.bf16.msra.mxu0 0
        %1334 = vmatprep.subr.bf16.mxu0 0
        %1335 = vmatpush1.bf16.msra.mxu0 0
        %1336 = vmatprep.subr.bf16.mxu0 0
        %1337 = vmatpush1.bf16.msra.mxu0 %v1318
        %1338 = vmatprep.subr.bf16.mxu0 0
        %1339 = vmatpush2.bf16.msra.mxu0 0
        %1340 = vmatprep.subr.bf16.mxu0 0
        %1341 = vmatpush2.bf16.msra.mxu0 0
        %1342 = vmatprep.subr.bf16.mxu0 0
        %1343 = vmatpush2.bf16.msra.mxu0 0
        %1344 = vmatprep.subr.bf16.mxu0 0
        %1345 = vmatpush2.bf16.msra.mxu0 0
        %1346 = vmatprep.subr.bf16.mxu0 0
        %1347 = vmatpush2.bf16.msra.mxu0 0
        %1348 = vmatprep.subr.bf16.mxu0 0
        %1349 = vmatpush2.bf16.msra.mxu0 0
        %1350 = vmatprep.subr.bf16.mxu0 0
        %1351 = vmatpush2.bf16.msra.mxu0 0
        %1352 = vmatprep.subr.bf16.mxu0 0
        %1353 = vmatpush2.bf16.msra.mxu0 0
        %1354 = vmatprep.mubr.bf16.mxu0 0
        %1355 = vmatmul.mubr.bf16.gmra.mxu0 %v1320
        %v1356 = vpop.f32.mrf.mxu0
        %v1357 = vadd.f32 0.0, %v1356
        %v1358 = vpop.f32.mrf.mxu0
        %v1359 = vpop.f32.mrf.mxu0
        %v1360 = vpop.f32.mrf.mxu0
        %1361 = vdwg.mxu0
        %1363 = vrot.lane.b32.xlu0 %v1254, 64
        %v1364 = vpop.permute.xlu0 %1363
        %v1366 = vsel %vm1256, %v1364, 0
        %1368 = vmatprep.subr.bf16.mxu0 0
        %1369 = vmatpush1.bf16.xpose.msra.mxu0 0
        %1370 = vmatprep.subr.bf16.mxu0 0
        %1371 = vmatpush1.bf16.xpose.msra.mxu0 0
        %1372 = vmatprep.subr.bf16.mxu0 0
        %1373 = vmatpush1.bf16.xpose.msra.mxu0 0
        %1374 = vmatprep.subr.bf16.mxu0 0
        %1375 = vmatpush1.bf16.xpose.msra.mxu0 0
        %1376 = vmatprep.subr.bf16.mxu0 0
        %1377 = vmatpush1.bf16.xpose.msra.mxu0 0
        %1378 = vmatprep.subr.bf16.mxu0 0
        %1379 = vmatpush1.bf16.xpose.msra.mxu0 0
        %1380 = vmatprep.subr.bf16.mxu0 0
        %1381 = vmatpush1.bf16.xpose.msra.mxu0 0
        %1382 = vmatprep.subr.bf16.mxu0 0
        %1383 = vmatpush1.bf16.xpose.msra.mxu0 %v1261
        %1384 = vmatprep.subr.bf16.mxu0 0
        %1385 = vmatpush2.bf16.xpose.msra.mxu0 0
        %1386 = vmatprep.subr.bf16.mxu0 0
        %1387 = vmatpush2.bf16.xpose.msra.mxu0 0
        %1388 = vmatprep.subr.bf16.mxu0 0
        %1389 = vmatpush2.bf16.xpose.msra.mxu0 0
        %1390 = vmatprep.subr.bf16.mxu0 0
        %1391 = vmatpush2.bf16.xpose.msra.mxu0 0
        %1392 = vmatprep.subr.bf16.mxu0 0
        %1393 = vmatpush2.bf16.xpose.msra.mxu0 0
        %1394 = vmatprep.subr.bf16.mxu0 0
        %1395 = vmatpush2.bf16.xpose.msra.mxu0 0
        %1396 = vmatprep.subr.bf16.mxu0 0
        %1397 = vmatpush2.bf16.xpose.msra.mxu0 0
        %1398 = vmatprep.subr.bf16.mxu0 0
        %1399 = vmatpush2.bf16.xpose.msra.mxu0 0
        %1400 = vmatprep.mubr.bf16.mxu0 0
        %1401 = vmatmul.mubr.bf16.gmra.mxu0 %v1366
        %v1402 = vpop.f32.mrf.mxu0
        %v1403 = vadd.f32 0.0, %v1402
        %v1404 = vpop.f32.mrf.mxu0
        %v1405 = vpop.f32.mrf.mxu0
        %v1406 = vpop.f32.mrf.mxu0
        %1407 = vdwg.mxu0
        %v1408 = vmul.f32 %v1403, 0.125
        %v1409 = vadd.f32 %v1408, %v1253
        %v1410 = vsel %vm1305, %v1409, -inf
        %1411 = vmax.xlane.f32.xlu0 %v1410
        %v1412 = vpop.xlane.xlu0 %1411
        %v1413 = vsub.f32 %v1409, %v1412
        %v1414 = vmul.f32 %v1413, 1.442695
        %v1415 = vpow.pop %v1414
        %v1416 = vsel %vm1305, %v1415, 0.0
        %1417 = vadd.xlane.f32.xlu0 %v1416
        %v1418 = vpop.xlane.xlu0 %1417
        %v1419 = vrcp.pop %v1418
        %v1420 = vmul.f32 %v1415, %v1419
        %v1421 = vpack.c.bf16 %v1420, %v1420
        %v1423 = vsel %vm1305, %v1421, 0
        %1425 = vmatprep.subr.bf16.mxu0 0
        %1426 = vmatpush1.bf16.msra.mxu0 0
        %1427 = vmatprep.subr.bf16.mxu0 0
        %1428 = vmatpush1.bf16.msra.mxu0 0
        %1429 = vmatprep.subr.bf16.mxu0 0
        %1430 = vmatpush1.bf16.msra.mxu0 0
        %1431 = vmatprep.subr.bf16.mxu0 0
        %1432 = vmatpush1.bf16.msra.mxu0 0
        %1433 = vmatprep.subr.bf16.mxu0 0
        %1434 = vmatpush1.bf16.msra.mxu0 0
        %1435 = vmatprep.subr.bf16.mxu0 0
        %1436 = vmatpush1.bf16.msra.mxu0 0
        %1437 = vmatprep.subr.bf16.mxu0 0
        %1438 = vmatpush1.bf16.msra.mxu0 0
        %1439 = vmatprep.subr.bf16.mxu0 0
        %1440 = vmatpush1.bf16.msra.mxu0 %v1318
        %1441 = vmatprep.subr.bf16.mxu0 0
        %1442 = vmatpush2.bf16.msra.mxu0 0
        %1443 = vmatprep.subr.bf16.mxu0 0
        %1444 = vmatpush2.bf16.msra.mxu0 0
        %1445 = vmatprep.subr.bf16.mxu0 0
        %1446 = vmatpush2.bf16.msra.mxu0 0
        %1447 = vmatprep.subr.bf16.mxu0 0
        %1448 = vmatpush2.bf16.msra.mxu0 0
        %1449 = vmatprep.subr.bf16.mxu0 0
        %1450 = vmatpush2.bf16.msra.mxu0 0
        %1451 = vmatprep.subr.bf16.mxu0 0
        %1452 = vmatpush2.bf16.msra.mxu0 0
        %1453 = vmatprep.subr.bf16.mxu0 0
        %1454 = vmatpush2.bf16.msra.mxu0 0
        %1455 = vmatprep.subr.bf16.mxu0 0
        %1456 = vmatpush2.bf16.msra.mxu0 0
        %1457 = vmatprep.mubr.bf16.mxu0 0
        %1458 = vmatmul.mubr.bf16.gmra.mxu0 %v1423
        %v1459 = vpop.f32.mrf.mxu0
        %v1460 = vadd.f32 0.0, %v1459
        %v1461 = vpop.f32.mrf.mxu0
        %v1462 = vpop.f32.mrf.mxu0
        %v1463 = vpop.f32.mrf.mxu0
        %1464 = vdwg.mxu0
        %v1465 = vpack.c.bf16 %v1228, %v1228
        %1467 = vrot.lane.b32.xlu0 %v1255, 64
        %v1468 = vpop.permute.xlu0 %1467
        %v1470 = vsel %vm1256, %v1465, 0
        %v1473 = vsel %vm1256, %v1468, 0
        %1475 = vmatprep.subr.bf16.mxu0 0
        %1476 = vmatpush1.bf16.xpose.msra.mxu0 0
        %1477 = vmatprep.subr.bf16.mxu0 0
        %1478 = vmatpush1.bf16.xpose.msra.mxu0 0
        %1479 = vmatprep.subr.bf16.mxu0 0
        %1480 = vmatpush1.bf16.xpose.msra.mxu0 0
        %1481 = vmatprep.subr.bf16.mxu0 0
        %1482 = vmatpush1.bf16.xpose.msra.mxu0 0
        %1483 = vmatprep.subr.bf16.mxu0 0
        %1484 = vmatpush1.bf16.xpose.msra.mxu0 0
        %1485 = vmatprep.subr.bf16.mxu0 0
        %1486 = vmatpush1.bf16.xpose.msra.mxu0 0
        %1487 = vmatprep.subr.bf16.mxu0 0
        %1488 = vmatpush1.bf16.xpose.msra.mxu0 0
        %1489 = vmatprep.subr.bf16.mxu0 0
        %1490 = vmatpush1.bf16.xpose.msra.mxu0 %v1473
        %1491 = vmatprep.subr.bf16.mxu0 0
        %1492 = vmatpush2.bf16.xpose.msra.mxu0 0
        %1493 = vmatprep.subr.bf16.mxu0 0
        %1494 = vmatpush2.bf16.xpose.msra.mxu0 0
        %1495 = vmatprep.subr.bf16.mxu0 0
        %1496 = vmatpush2.bf16.xpose.msra.mxu0 0
        %1497 = vmatprep.subr.bf16.mxu0 0
        %1498 = vmatpush2.bf16.xpose.msra.mxu0 0
        %1499 = vmatprep.subr.bf16.mxu0 0
        %1500 = vmatpush2.bf16.xpose.msra.mxu0 0
        %1501 = vmatprep.subr.bf16.mxu0 0
        %1502 = vmatpush2.bf16.xpose.msra.mxu0 0
        %1503 = vmatprep.subr.bf16.mxu0 0
        %1504 = vmatpush2.bf16.xpose.msra.mxu0 0
        %1505 = vmatprep.subr.bf16.mxu0 0
        %1506 = vmatpush2.bf16.xpose.msra.mxu0 0
        %1507 = vmatprep.mubr.bf16.mxu0 0
        %1508 = vmatmul.mubr.bf16.gmra.mxu0 %v1470
        %v1509 = vpop.f32.mrf.mxu0
        %v1510 = vadd.f32 0.0, %v1509
        %v1511 = vpop.f32.mrf.mxu0
        %v1512 = vpop.f32.mrf.mxu0
        %v1513 = vpop.f32.mrf.mxu0
        %1514 = vdwg.mxu0
        %v1515 = vmul.f32 %v1510, 0.125
        %v1516 = vadd.f32 %v1515, %v1253
        %v1517 = vsel %vm1305, %v1516, -inf
        %1518 = vmax.xlane.f32.xlu0 %v1517
        %v1519 = vpop.xlane.xlu0 %1518
        %v1520 = vsub.f32 %v1516, %v1519
        %v1521 = vmul.f32 %v1520, 1.442695
        %v1522 = vpow.pop %v1521
        %v1523 = vsel %vm1305, %v1522, 0.0
        %1524 = vadd.xlane.f32.xlu0 %v1523
        %v1525 = vpop.xlane.xlu0 %1524
        %v1526 = vrcp.pop %v1525
        %v1527 = vmul.f32 %v1522, %v1526
        %v1528 = vpack.c.bf16 %v1527, %v1527
        %1530 = vrot.lane.b32.xlu0 %v1318, 64
        %v1531 = vpop.permute.xlu0 %1530
        %v1534 = vsel %vm1305, %v1528, 0
        %1536 = vmatprep.subr.bf16.mxu0 0
        %1537 = vmatpush1.bf16.msra.mxu0 0
        %1538 = vmatprep.subr.bf16.mxu0 0
        %1539 = vmatpush1.bf16.msra.mxu0 0
        %1540 = vmatprep.subr.bf16.mxu0 0
        %1541 = vmatpush1.bf16.msra.mxu0 0
        %1542 = vmatprep.subr.bf16.mxu0 0
        %1543 = vmatpush1.bf16.msra.mxu0 0
        %1544 = vmatprep.subr.bf16.mxu0 0
        %1545 = vmatpush1.bf16.msra.mxu0 0
        %1546 = vmatprep.subr.bf16.mxu0 0
        %1547 = vmatpush1.bf16.msra.mxu0 0
        %1548 = vmatprep.subr.bf16.mxu0 0
        %1549 = vmatpush1.bf16.msra.mxu0 0
        %1550 = vmatprep.subr.bf16.mxu0 0
        %1551 = vmatpush1.bf16.msra.mxu0 %v1531
        %1552 = vmatprep.subr.bf16.mxu0 0
        %1553 = vmatpush2.bf16.msra.mxu0 0
        %1554 = vmatprep.subr.bf16.mxu0 0
        %1555 = vmatpush2.bf16.msra.mxu0 0
        %1556 = vmatprep.subr.bf16.mxu0 0
        %1557 = vmatpush2.bf16.msra.mxu0 0
        %1558 = vmatprep.subr.bf16.mxu0 0
        %1559 = vmatpush2.bf16.msra.mxu0 0
        %1560 = vmatprep.subr.bf16.mxu0 0
        %1561 = vmatpush2.bf16.msra.mxu0 0
        %1562 = vmatprep.subr.bf16.mxu0 0
        %1563 = vmatpush2.bf16.msra.mxu0 0
        %1564 = vmatprep.subr.bf16.mxu0 0
        %1565 = vmatpush2.bf16.msra.mxu0 0
        %1566 = vmatprep.subr.bf16.mxu0 0
        %1567 = vmatpush2.bf16.msra.mxu0 0
        %1568 = vmatprep.mubr.bf16.mxu0 0
        %1569 = vmatmul.mubr.bf16.gmra.mxu0 %v1534
        %v1570 = vpop.f32.mrf.mxu0
        %v1571 = vadd.f32 0.0, %v1570
        %v1572 = vpop.f32.mrf.mxu0
        %v1573 = vpop.f32.mrf.mxu0
        %v1574 = vpop.f32.mrf.mxu0
        %1575 = vdwg.mxu0
        %1577 = vrot.lane.b32.xlu0 %v1465, 64
        %v1578 = vpop.permute.xlu0 %1577
        %v1580 = vsel %vm1256, %v1578, 0
        %1582 = vmatprep.subr.bf16.mxu0 0
        %1583 = vmatpush1.bf16.xpose.msra.mxu0 0
        %1584 = vmatprep.subr.bf16.mxu0 0
        %1585 = vmatpush1.bf16.xpose.msra.mxu0 0
        %1586 = vmatprep.subr.bf16.mxu0 0
        %1587 = vmatpush1.bf16.xpose.msra.mxu0 0
        %1588 = vmatprep.subr.bf16.mxu0 0
        %1589 = vmatpush1.bf16.xpose.msra.mxu0 0
        %1590 = vmatprep.subr.bf16.mxu0 0
        %1591 = vmatpush1.bf16.xpose.msra.mxu0 0
        %1592 = vmatprep.subr.bf16.mxu0 0
        %1593 = vmatpush1.bf16.xpose.msra.mxu0 0
        %1594 = vmatprep.subr.bf16.mxu0 0
        %1595 = vmatpush1.bf16.xpose.msra.mxu0 0
        %1596 = vmatprep.subr.bf16.mxu0 0
        %1597 = vmatpush1.bf16.xpose.msra.mxu0 %v1473
        %1598 = vmatprep.subr.bf16.mxu0 0
        %1599 = vmatpush2.bf16.xpose.msra.mxu0 0
        %1600 = vmatprep.subr.bf16.mxu0 0
        %1601 = vmatpush2.bf16.xpose.msra.mxu0 0
        %1602 = vmatprep.subr.bf16.mxu0 0
        %1603 = vmatpush2.bf16.xpose.msra.mxu0 0
        %1604 = vmatprep.subr.bf16.mxu0 0
        %1605 = vmatpush2.bf16.xpose.msra.mxu0 0
        %1606 = vmatprep.subr.bf16.mxu0 0
        %1607 = vmatpush2.bf16.xpose.msra.mxu0 0
        %1608 = vmatprep.subr.bf16.mxu0 0
        %1609 = vmatpush2.bf16.xpose.msra.mxu0 0
        %1610 = vmatprep.subr.bf16.mxu0 0
        %1611 = vmatpush2.bf16.xpose.msra.mxu0 0
        %1612 = vmatprep.subr.bf16.mxu0 0
        %1613 = vmatpush2.bf16.xpose.msra.mxu0 0
        %1614 = vmatprep.mubr.bf16.mxu0 0
        %1615 = vmatmul.mubr.bf16.gmra.mxu0 %v1580
        %v1616 = vpop.f32.mrf.mxu0
        %v1617 = vadd.f32 0.0, %v1616
        %v1618 = vpop.f32.mrf.mxu0
        %v1619 = vpop.f32.mrf.mxu0
        %v1620 = vpop.f32.mrf.mxu0
        %1621 = vdwg.mxu0
        %v1622 = vmul.f32 %v1617, 0.125
        %v1623 = vadd.f32 %v1622, %v1253
        %v1624 = vsel %vm1305, %v1623, -inf
        %1625 = vmax.xlane.f32.xlu0 %v1624
        %v1626 = vpop.xlane.xlu0 %1625
        %v1627 = vsub.f32 %v1623, %v1626
        %v1628 = vmul.f32 %v1627, 1.442695
        %v1629 = vpow.pop %v1628
        %v1630 = vsel %vm1305, %v1629, 0.0
        %1631 = vadd.xlane.f32.xlu0 %v1630
        %v1632 = vpop.xlane.xlu0 %1631
        %v1633 = vrcp.pop %v1632
        %v1634 = vmul.f32 %v1629, %v1633
        %v1635 = vpack.c.bf16 %v1634, %v1634
        %v1637 = vsel %vm1305, %v1635, 0
        %1639 = vmatprep.subr.bf16.mxu0 0
        %1640 = vmatpush1.bf16.msra.mxu0 0
        %1641 = vmatprep.subr.bf16.mxu0 0
        %1642 = vmatpush1.bf16.msra.mxu0 0
        %1643 = vmatprep.subr.bf16.mxu0 0
        %1644 = vmatpush1.bf16.msra.mxu0 0
        %1645 = vmatprep.subr.bf16.mxu0 0
        %1646 = vmatpush1.bf16.msra.mxu0 0
        %1647 = vmatprep.subr.bf16.mxu0 0
        %1648 = vmatpush1.bf16.msra.mxu0 0
        %1649 = vmatprep.subr.bf16.mxu0 0
        %1650 = vmatpush1.bf16.msra.mxu0 0
        %1651 = vmatprep.subr.bf16.mxu0 0
        %1652 = vmatpush1.bf16.msra.mxu0 0
        %1653 = vmatprep.subr.bf16.mxu0 0
        %1654 = vmatpush1.bf16.msra.mxu0 %v1531
        %1655 = vmatprep.subr.bf16.mxu0 0
        %1656 = vmatpush2.bf16.msra.mxu0 0
        %1657 = vmatprep.subr.bf16.mxu0 0
        %1658 = vmatpush2.bf16.msra.mxu0 0
        %1659 = vmatprep.subr.bf16.mxu0 0
        %1660 = vmatpush2.bf16.msra.mxu0 0
        %1661 = vmatprep.subr.bf16.mxu0 0
        %1662 = vmatpush2.bf16.msra.mxu0 0
        %1663 = vmatprep.subr.bf16.mxu0 0
        %1664 = vmatpush2.bf16.msra.mxu0 0
        %1665 = vmatprep.subr.bf16.mxu0 0
        %1666 = vmatpush2.bf16.msra.mxu0 0
        %1667 = vmatprep.subr.bf16.mxu0 0
        %1668 = vmatpush2.bf16.msra.mxu0 0
        %1669 = vmatprep.subr.bf16.mxu0 0
        %1670 = vmatpush2.bf16.msra.mxu0 0
        %1671 = vmatprep.mubr.bf16.mxu0 0
        %1672 = vmatmul.mubr.bf16.gmra.mxu0 %v1637
        %v1673 = vpop.f32.mrf.mxu0
        %v1674 = vadd.f32 0.0, %v1673
        %v1675 = vpop.f32.mrf.mxu0
        %v1676 = vpop.f32.mrf.mxu0
        %v1677 = vpop.f32.mrf.mxu0
        %1678 = vdwg.mxu0
        %1680 = vrot.lane.b32.xlu0 %v1460, 64
        %v1681 = vpop.permute.xlu0 %1680
        %1684 = vrot.lane.b32.xlu0 %v1674, 64
        %v1685 = vpop.permute.xlu0 %1684
        %v1687 = vsel %vm1256, %v1357, %v1681
        %v1688 = vsel %vm1256, %v1571, %v1685
        %v1689 = vpack.c.bf16 %v1687, %v1687
        %v1690 = vpack.c.bf16 %v1688, %v1688
        %v1691 = vld [vmem:[#allocation16] sm:$0xff]
        %v1692 = vld [vmem:[#allocation16 + $0x8] sm:$0xff]
        %v1693 = vld [vmem:[#allocation16 + $0x10] sm:$0xff]
        %v1694 = vld [vmem:[#allocation16 + $0x18] sm:$0xff]
        %v1695 = vld [vmem:[#allocation16 + $0x20] sm:$0xff]
        %v1696 = vld [vmem:[#allocation16 + $0x28] sm:$0xff]
        %v1697 = vld [vmem:[#allocation16 + $0x30] sm:$0xff]
        %v1698 = vld [vmem:[#allocation16 + $0x38] sm:$0xff]
        %v1699 = vld [vmem:[#allocation16 + $0x40] sm:$0xff]
        %v1700 = vld [vmem:[#allocation16 + $0x48] sm:$0xff]
        %v1701 = vld [vmem:[#allocation16 + $0x50] sm:$0xff]
        %v1702 = vld [vmem:[#allocation16 + $0x58] sm:$0xff]
        %v1703 = vld [vmem:[#allocation16 + $0x60] sm:$0xff]
        %v1704 = vld [vmem:[#allocation16 + $0x68] sm:$0xff]
        %v1705 = vld [vmem:[#allocation16 + $0x70] sm:$0xff]
        %v1706 = vld [vmem:[#allocation16 + $0x78] sm:$0xff]
        %v1707 = vld [vmem:[#allocation16 + $0x80] sm:$0xff]
        %v1708 = vld [vmem:[#allocation16 + $0x88] sm:$0xff]
        %v1709 = vld [vmem:[#allocation16 + $0x90] sm:$0xff]
        %v1710 = vld [vmem:[#allocation16 + $0x98] sm:$0xff]
        %v1711 = vld [vmem:[#allocation16 + $0xa0] sm:$0xff]
        %v1712 = vld [vmem:[#allocation16 + $0xa8] sm:$0xff]
        %v1713 = vld [vmem:[#allocation16 + $0xb0] sm:$0xff]
        %v1714 = vld [vmem:[#allocation16 + $0xb8] sm:$0xff]
        %v1715 = vld [vmem:[#allocation16 + $0xc0] sm:$0xff]
        %v1716 = vld [vmem:[#allocation16 + $0xc8] sm:$0xff]
        %v1717 = vld [vmem:[#allocation16 + $0xd0] sm:$0xff]
        %v1718 = vld [vmem:[#allocation16 + $0xd8] sm:$0xff]
        %v1719 = vld [vmem:[#allocation16 + $0xe0] sm:$0xff]
        %v1720 = vld [vmem:[#allocation16 + $0xe8] sm:$0xff]
        %v1721 = vld [vmem:[#allocation16 + $0xf0] sm:$0xff]
        %v1722 = vld [vmem:[#allocation16 + $0xf8] sm:$0xff]
        %v1755 = vunpack.c.l.b16 %v1691
        %v1756 = vunpack.c.h.b16 %v1691
        %v1757 = vunpack.c.l.b16 %v1692
        %v1758 = vunpack.c.h.b16 %v1692
        %v1759 = vunpack.c.l.b16 %v1693
        %v1760 = vunpack.c.h.b16 %v1693
        %v1761 = vunpack.c.l.b16 %v1694
        %v1762 = vunpack.c.h.b16 %v1694
        %v1763 = vunpack.c.l.b16 %v1695
        %v1764 = vunpack.c.h.b16 %v1695
        %v1765 = vunpack.c.l.b16 %v1696
        %v1766 = vunpack.c.h.b16 %v1696
        %v1767 = vunpack.c.l.b16 %v1697
        %v1768 = vunpack.c.h.b16 %v1697
        %v1769 = vunpack.c.l.b16 %v1698
        %v1770 = vunpack.c.h.b16 %v1698
        %v1771 = vunpack.c.l.b16 %v1699
        %v1772 = vunpack.c.h.b16 %v1699
        %v1773 = vunpack.c.l.b16 %v1700
        %v1774 = vunpack.c.h.b16 %v1700
        %v1775 = vunpack.c.l.b16 %v1701
        %v1776 = vunpack.c.h.b16 %v1701
        %v1777 = vunpack.c.l.b16 %v1702
        %v1778 = vunpack.c.h.b16 %v1702
        %v1779 = vunpack.c.l.b16 %v1703
        %v1780 = vunpack.c.h.b16 %v1703
        %v1781 = vunpack.c.l.b16 %v1704
        %v1782 = vunpack.c.h.b16 %v1704
        %v1783 = vunpack.c.l.b16 %v1705
        %v1784 = vunpack.c.h.b16 %v1705
        %v1785 = vunpack.c.l.b16 %v1706
        %v1786 = vunpack.c.h.b16 %v1706
        %v1787 = vunpack.c.l.b16 %v1707
        %v1788 = vunpack.c.h.b16 %v1707
        %v1789 = vunpack.c.l.b16 %v1708
        %v1790 = vunpack.c.h.b16 %v1708
        %v1791 = vunpack.c.l.b16 %v1709
        %v1792 = vunpack.c.h.b16 %v1709
        %v1793 = vunpack.c.l.b16 %v1710
        %v1794 = vunpack.c.h.b16 %v1710
        %v1795 = vunpack.c.l.b16 %v1711
        %v1796 = vunpack.c.h.b16 %v1711
        %v1797 = vunpack.c.l.b16 %v1712
        %v1798 = vunpack.c.h.b16 %v1712
        %v1799 = vunpack.c.l.b16 %v1713
        %v1800 = vunpack.c.h.b16 %v1713
        %v1801 = vunpack.c.l.b16 %v1714
        %v1802 = vunpack.c.h.b16 %v1714
        %v1803 = vunpack.c.l.b16 %v1715
        %v1804 = vunpack.c.h.b16 %v1715
        %v1805 = vunpack.c.l.b16 %v1716
        %v1806 = vunpack.c.h.b16 %v1716
        %v1807 = vunpack.c.l.b16 %v1717
        %v1808 = vunpack.c.h.b16 %v1717
        %v1809 = vunpack.c.l.b16 %v1718
        %v1810 = vunpack.c.h.b16 %v1718
        %v1811 = vunpack.c.l.b16 %v1719
        %v1812 = vunpack.c.h.b16 %v1719
        %v1813 = vunpack.c.l.b16 %v1720
        %v1814 = vunpack.c.h.b16 %v1720
        %v1815 = vunpack.c.l.b16 %v1721
        %v1816 = vunpack.c.h.b16 %v1721
        %v1817 = vunpack.c.l.b16 %v1722
        %v1818 = vunpack.c.h.b16 %v1722
        %v1819 = vpack.c.b16 %v1757, %v1755
        %v1820 = vpack.c.b16 %v1758, %v1756
        %v1821 = vpack.c.b16 %v1761, %v1759
        %v1822 = vpack.c.b16 %v1762, %v1760
        %v1823 = vpack.c.b16 %v1765, %v1763
        %v1824 = vpack.c.b16 %v1766, %v1764
        %v1825 = vpack.c.b16 %v1769, %v1767
        %v1826 = vpack.c.b16 %v1770, %v1768
        %v1827 = vpack.c.b16 %v1773, %v1771
        %v1828 = vpack.c.b16 %v1774, %v1772
        %v1829 = vpack.c.b16 %v1777, %v1775
        %v1830 = vpack.c.b16 %v1778, %v1776
        %v1831 = vpack.c.b16 %v1781, %v1779
        %v1832 = vpack.c.b16 %v1782, %v1780
        %v1833 = vpack.c.b16 %v1785, %v1783
        %v1834 = vpack.c.b16 %v1786, %v1784
        %v1835 = vpack.c.b16 %v1789, %v1787
        %v1836 = vpack.c.b16 %v1790, %v1788
        %v1837 = vpack.c.b16 %v1793, %v1791
        %v1838 = vpack.c.b16 %v1794, %v1792
        %v1839 = vpack.c.b16 %v1797, %v1795
        %v1840 = vpack.c.b16 %v1798, %v1796
        %v1841 = vpack.c.b16 %v1801, %v1799
        %v1842 = vpack.c.b16 %v1802, %v1800
        %v1843 = vpack.c.b16 %v1805, %v1803
        %v1844 = vpack.c.b16 %v1806, %v1804
        %v1845 = vpack.c.b16 %v1809, %v1807
        %v1846 = vpack.c.b16 %v1810, %v1808
        %v1847 = vpack.c.b16 %v1813, %v1811
        %v1848 = vpack.c.b16 %v1814, %v1812
        %v1849 = vpack.c.b16 %v1817, %v1815
        %v1850 = vpack.c.b16 %v1818, %v1816
        %1883 = vmatprep.subr.bf16.mxu0 %v1834
        %1884 = vmatpush1.bf16.msra.mxu0 %v1833
        %1885 = vmatprep.subr.bf16.mxu0 %v1832
        %1886 = vmatpush1.bf16.msra.mxu0 %v1831
        %1887 = vmatprep.subr.bf16.mxu0 %v1830
        %1888 = vmatpush1.bf16.msra.mxu0 %v1829
        %1889 = vmatprep.subr.bf16.mxu0 %v1828
        %1890 = vmatpush1.bf16.msra.mxu0 %v1827
        %1891 = vmatprep.subr.bf16.mxu0 %v1826
        %1892 = vmatpush1.bf16.msra.mxu0 %v1825
        %1893 = vmatprep.subr.bf16.mxu0 %v1824
        %1894 = vmatpush1.bf16.msra.mxu0 %v1823
        %1895 = vmatprep.subr.bf16.mxu0 %v1822
        %1896 = vmatpush1.bf16.msra.mxu0 %v1821
        %1897 = vmatprep.subr.bf16.mxu0 %v1820
        %1898 = vmatpush1.bf16.msra.mxu0 %v1819
        %1899 = vmatprep.subr.bf16.mxu0 %v1850
        %1900 = vmatpush2.bf16.msra.mxu0 %v1849
        %1901 = vmatprep.subr.bf16.mxu0 %v1848
        %1902 = vmatpush2.bf16.msra.mxu0 %v1847
        %1903 = vmatprep.subr.bf16.mxu0 %v1846
        %1904 = vmatpush2.bf16.msra.mxu0 %v1845
        %1905 = vmatprep.subr.bf16.mxu0 %v1844
        %1906 = vmatpush2.bf16.msra.mxu0 %v1843
        %1907 = vmatprep.subr.bf16.mxu0 %v1842
        %1908 = vmatpush2.bf16.msra.mxu0 %v1841
        %1909 = vmatprep.subr.bf16.mxu0 %v1840
        %1910 = vmatpush2.bf16.msra.mxu0 %v1839
        %1911 = vmatprep.subr.bf16.mxu0 %v1838
        %1912 = vmatpush2.bf16.msra.mxu0 %v1837
        %1913 = vmatprep.subr.bf16.mxu0 %v1836
        %1914 = vmatpush2.bf16.msra.mxu0 %v1835
        %1915 = vmatprep.mubr.bf16.mxu0 %v1690
        %1916 = vmatmul.mubr.bf16.gmra.mxu0 %v1689
        %v1917 = vpop.f32.mrf.mxu0
        %v1918 = vadd.f32 0.0, %v1917
        %v1919 = vpop.f32.mrf.mxu0
        %v1920 = vadd.f32 0.0, %v1919
        %v1921 = vpop.f32.mrf.mxu0
        %v1922 = vpop.f32.mrf.mxu0
        %1923 = vdwg.mxu0
        %v1924 = vadd.f32 %v679, %v1918
        %v1925 = vadd.f32 %v680, %v1920
        %v1926 = vld [vmem:[%s10] sm:$0x3]
        %v1927 = vmul.f32 %v1924, %v1924
        %v1928 = vmul.f32 %v1925, %v1925
        %v1929 = vadd.f32 %v1927, %v1928
        %1930 = vadd.xlane.f32.xlu0 %v1929
        %v1931 = vpop.xlane.xlu0 %1930
        %v1932 = vmul.f32 %v1931, %v687
        %v1933 = vadd.f32 %v1932, 1e-05
        %v1934 = vrsqrt.pop %v1933
        %v1935 = vmul.f32 %v1924, %v1934
        %v1936 = vmul.f32 %v1925, %v1934
        %v1938 = vlaneseq
        %v1939 = vshrl.u32 %v1938, 7
        %v1940 = vsub.s32 0, %v1939
        %v1941 = vrot.slane %v1926, %v1940
        %v1942 = vlaneseq
        %v1943 = vshrl.u32 %v1942, 7
        %v1944 = vsub.s32 1, %v1943
        %v1945 = vrot.slane %v1926, %v1944
        %v1948 = vmul.f32 %v1935, %v1941
        %v1949 = vmul.f32 %v1936, %v1945
        %v1950 = vpack.c.bf16 %v1948, %v1948
        %v1951 = vpack.c.bf16 %v1949, %v1949
        %v1952 = vld [vmem:[#allocation18] sm:$0xff]
        %v1953 = vld [vmem:[#allocation18 + $0x8] sm:$0xff]
        %v1954 = vld [vmem:[#allocation18 + $0x10] sm:$0xff]
        %v1955 = vld [vmem:[#allocation18 + $0x18] sm:$0xff]
        %v1956 = vld [vmem:[#allocation18 + $0x20] sm:$0xff]
        %v1957 = vld [vmem:[#allocation18 + $0x28] sm:$0xff]
        %v1958 = vld [vmem:[#allocation18 + $0x30] sm:$0xff]
        %v1959 = vld [vmem:[#allocation18 + $0x38] sm:$0xff]
        %v1960 = vld [vmem:[#allocation18 + $0x40] sm:$0xff]
        %v1961 = vld [vmem:[#allocation18 + $0x48] sm:$0xff]
        %v1962 = vld [vmem:[#allocation18 + $0x50] sm:$0xff]
        %v1963 = vld [vmem:[#allocation18 + $0x58] sm:$0xff]
        %v1964 = vld [vmem:[#allocation18 + $0x60] sm:$0xff]
        %v1965 = vld [vmem:[#allocation18 + $0x68] sm:$0xff]
        %v1966 = vld [vmem:[#allocation18 + $0x70] sm:$0xff]
        %v1967 = vld [vmem:[#allocation18 + $0x78] sm:$0xff]
        %v1968 = vld [vmem:[#allocation18 + $0x80] sm:$0xff]
        %v1969 = vld [vmem:[#allocation18 + $0x88] sm:$0xff]
        %v1970 = vld [vmem:[#allocation18 + $0x90] sm:$0xff]
        %v1971 = vld [vmem:[#allocation18 + $0x98] sm:$0xff]
        %v1972 = vld [vmem:[#allocation18 + $0xa0] sm:$0xff]
        %v1973 = vld [vmem:[#allocation18 + $0xa8] sm:$0xff]
        %v1974 = vld [vmem:[#allocation18 + $0xb0] sm:$0xff]
        %v1975 = vld [vmem:[#allocation18 + $0xb8] sm:$0xff]
        %v1976 = vld [vmem:[#allocation18 + $0xc0] sm:$0xff]
        %v1977 = vld [vmem:[#allocation18 + $0xc8] sm:$0xff]
        %v1978 = vld [vmem:[#allocation18 + $0xd0] sm:$0xff]
        %v1979 = vld [vmem:[#allocation18 + $0xd8] sm:$0xff]
        %v1980 = vld [vmem:[#allocation18 + $0xe0] sm:$0xff]
        %v1981 = vld [vmem:[#allocation18 + $0xe8] sm:$0xff]
        %v1982 = vld [vmem:[#allocation18 + $0xf0] sm:$0xff]
        %v1983 = vld [vmem:[#allocation18 + $0xf8] sm:$0xff]
        %v1984 = vld [vmem:[#allocation18 + $0x100] sm:$0xff]
        %v1985 = vld [vmem:[#allocation18 + $0x108] sm:$0xff]
        %v1986 = vld [vmem:[#allocation18 + $0x110] sm:$0xff]
        %v1987 = vld [vmem:[#allocation18 + $0x118] sm:$0xff]
        %v1988 = vld [vmem:[#allocation18 + $0x120] sm:$0xff]
        %v1989 = vld [vmem:[#allocation18 + $0x128] sm:$0xff]
        %v1990 = vld [vmem:[#allocation18 + $0x130] sm:$0xff]
        %v1991 = vld [vmem:[#allocation18 + $0x138] sm:$0xff]
        %v1992 = vld [vmem:[#allocation18 + $0x140] sm:$0xff]
        %v1993 = vld [vmem:[#allocation18 + $0x148] sm:$0xff]
        %v1994 = vld [vmem:[#allocation18 + $0x150] sm:$0xff]
        %v1995 = vld [vmem:[#allocation18 + $0x158] sm:$0xff]
        %v1996 = vld [vmem:[#allocation18 + $0x160] sm:$0xff]
        %v1997 = vld [vmem:[#allocation18 + $0x168] sm:$0xff]
        %v1998 = vld [vmem:[#allocation18 + $0x170] sm:$0xff]
        %v1999 = vld [vmem:[#allocation18 + $0x178] sm:$0xff]
        %v2000 = vld [vmem:[#allocation18 + $0x180] sm:$0xff]
        %v2001 = vld [vmem:[#allocation18 + $0x188] sm:$0xff]
        %v2002 = vld [vmem:[#allocation18 + $0x190] sm:$0xff]
        %v2003 = vld [vmem:[#allocation18 + $0x198] sm:$0xff]
        %v2004 = vld [vmem:[#allocation18 + $0x1a0] sm:$0xff]
        %v2005 = vld [vmem:[#allocation18 + $0x1a8] sm:$0xff]
        %v2006 = vld [vmem:[#allocation18 + $0x1b0] sm:$0xff]
        %v2007 = vld [vmem:[#allocation18 + $0x1b8] sm:$0xff]
        %v2008 = vld [vmem:[#allocation18 + $0x1c0] sm:$0xff]
        %v2009 = vld [vmem:[#allocation18 + $0x1c8] sm:$0xff]
        %v2010 = vld [vmem:[#allocation18 + $0x1d0] sm:$0xff]
        %v2011 = vld [vmem:[#allocation18 + $0x1d8] sm:$0xff]
        %v2012 = vld [vmem:[#allocation18 + $0x1e0] sm:$0xff]
        %v2013 = vld [vmem:[#allocation18 + $0x1e8] sm:$0xff]
        %v2014 = vld [vmem:[#allocation18 + $0x1f0] sm:$0xff]
        %v2015 = vld [vmem:[#allocation18 + $0x1f8] sm:$0xff]
        %v2016 = vld [vmem:[#allocation18 + $0x200] sm:$0xff]
        %v2017 = vld [vmem:[#allocation18 + $0x208] sm:$0xff]
        %v2018 = vld [vmem:[#allocation18 + $0x210] sm:$0xff]
        %v2019 = vld [vmem:[#allocation18 + $0x218] sm:$0xff]
        %v2020 = vld [vmem:[#allocation18 + $0x220] sm:$0xff]
        %v2021 = vld [vmem:[#allocation18 + $0x228] sm:$0xff]
        %v2022 = vld [vmem:[#allocation18 + $0x230] sm:$0xff]
        %v2023 = vld [vmem:[#allocation18 + $0x238] sm:$0xff]
        %v2024 = vld [vmem:[#allocation18 + $0x240] sm:$0xff]
        %v2025 = vld [vmem:[#allocation18 + $0x248] sm:$0xff]
        %v2026 = vld [vmem:[#allocation18 + $0x250] sm:$0xff]
        %v2027 = vld [vmem:[#allocation18 + $0x258] sm:$0xff]
        %v2028 = vld [vmem:[#allocation18 + $0x260] sm:$0xff]
        %v2029 = vld [vmem:[#allocation18 + $0x268] sm:$0xff]
        %v2030 = vld [vmem:[#allocation18 + $0x270] sm:$0xff]
        %v2031 = vld [vmem:[#allocation18 + $0x278] sm:$0xff]
        %v2032 = vld [vmem:[#allocation18 + $0x280] sm:$0xff]
        %v2033 = vld [vmem:[#allocation18 + $0x288] sm:$0xff]
        %v2034 = vld [vmem:[#allocation18 + $0x290] sm:$0xff]
        %v2035 = vld [vmem:[#allocation18 + $0x298] sm:$0xff]
        %v2036 = vld [vmem:[#allocation18 + $0x2a0] sm:$0xff]
        %v2037 = vld [vmem:[#allocation18 + $0x2a8] sm:$0xff]
        %v2038 = vld [vmem:[#allocation18 + $0x2b0] sm:$0xff]
        %v2039 = vld [vmem:[#allocation18 + $0x2b8] sm:$0xff]
        %v2040 = vld [vmem:[#allocation18 + $0x2c0] sm:$0xff]
        %v2041 = vld [vmem:[#allocation18 + $0x2c8] sm:$0xff]
        %v2042 = vld [vmem:[#allocation18 + $0x2d0] sm:$0xff]
        %v2043 = vld [vmem:[#allocation18 + $0x2d8] sm:$0xff]
        %v2044 = vld [vmem:[#allocation18 + $0x2e0] sm:$0xff]
        %v2045 = vld [vmem:[#allocation18 + $0x2e8] sm:$0xff]
        %v2046 = vld [vmem:[#allocation18 + $0x2f0] sm:$0xff]
        %v2047 = vld [vmem:[#allocation18 + $0x2f8] sm:$0xff]
        %v2048 = vld [vmem:[#allocation18 + $0x300] sm:$0xff]
        %v2049 = vld [vmem:[#allocation18 + $0x308] sm:$0xff]
        %v2050 = vld [vmem:[#allocation18 + $0x310] sm:$0xff]
        %v2051 = vld [vmem:[#allocation18 + $0x318] sm:$0xff]
        %v2052 = vld [vmem:[#allocation18 + $0x320] sm:$0xff]
        %v2053 = vld [vmem:[#allocation18 + $0x328] sm:$0xff]
        %v2054 = vld [vmem:[#allocation18 + $0x330] sm:$0xff]
        %v2055 = vld [vmem:[#allocation18 + $0x338] sm:$0xff]
        %v2056 = vld [vmem:[#allocation18 + $0x340] sm:$0xff]
        %v2057 = vld [vmem:[#allocation18 + $0x348] sm:$0xff]
        %v2058 = vld [vmem:[#allocation18 + $0x350] sm:$0xff]
        %v2059 = vld [vmem:[#allocation18 + $0x358] sm:$0xff]
        %v2060 = vld [vmem:[#allocation18 + $0x360] sm:$0xff]
        %v2061 = vld [vmem:[#allocation18 + $0x368] sm:$0xff]
        %v2062 = vld [vmem:[#allocation18 + $0x370] sm:$0xff]
        %v2063 = vld [vmem:[#allocation18 + $0x378] sm:$0xff]
        %v2064 = vld [vmem:[#allocation18 + $0x380] sm:$0xff]
        %v2065 = vld [vmem:[#allocation18 + $0x388] sm:$0xff]
        %v2066 = vld [vmem:[#allocation18 + $0x390] sm:$0xff]
        %v2067 = vld [vmem:[#allocation18 + $0x398] sm:$0xff]
        %v2068 = vld [vmem:[#allocation18 + $0x3a0] sm:$0xff]
        %v2069 = vld [vmem:[#allocation18 + $0x3a8] sm:$0xff]
        %v2070 = vld [vmem:[#allocation18 + $0x3b0] sm:$0xff]
        %v2071 = vld [vmem:[#allocation18 + $0x3b8] sm:$0xff]
        %v2072 = vld [vmem:[#allocation18 + $0x3c0] sm:$0xff]
        %v2073 = vld [vmem:[#allocation18 + $0x3c8] sm:$0xff]
        %v2074 = vld [vmem:[#allocation18 + $0x3d0] sm:$0xff]
        %v2075 = vld [vmem:[#allocation18 + $0x3d8] sm:$0xff]
        %v2076 = vld [vmem:[#allocation18 + $0x3e0] sm:$0xff]
        %v2077 = vld [vmem:[#allocation18 + $0x3e8] sm:$0xff]
        %v2078 = vld [vmem:[#allocation18 + $0x3f0] sm:$0xff]
        %v2079 = vld [vmem:[#allocation18 + $0x3f8] sm:$0xff]
        %v2208 = vunpack.c.l.b16 %v1952
        %v2209 = vunpack.c.h.b16 %v1952
        %v2210 = vunpack.c.l.b16 %v1953
        %v2211 = vunpack.c.h.b16 %v1953
        %v2212 = vunpack.c.l.b16 %v1954
        %v2213 = vunpack.c.h.b16 %v1954
        %v2214 = vunpack.c.l.b16 %v1955
        %v2215 = vunpack.c.h.b16 %v1955
        %v2216 = vunpack.c.l.b16 %v1956
        %v2217 = vunpack.c.h.b16 %v1956
        %v2218 = vunpack.c.l.b16 %v1957
        %v2219 = vunpack.c.h.b16 %v1957
        %v2220 = vunpack.c.l.b16 %v1958
        %v2221 = vunpack.c.h.b16 %v1958
        %v2222 = vunpack.c.l.b16 %v1959
        %v2223 = vunpack.c.h.b16 %v1959
        %v2224 = vunpack.c.l.b16 %v1960
        %v2225 = vunpack.c.h.b16 %v1960
        %v2226 = vunpack.c.l.b16 %v1961
        %v2227 = vunpack.c.h.b16 %v1961
        %v2228 = vunpack.c.l.b16 %v1962
        %v2229 = vunpack.c.h.b16 %v1962
        %v2230 = vunpack.c.l.b16 %v1963
        %v2231 = vunpack.c.h.b16 %v1963
        %v2232 = vunpack.c.l.b16 %v1964
        %v2233 = vunpack.c.h.b16 %v1964
        %v2234 = vunpack.c.l.b16 %v1965
        %v2235 = vunpack.c.h.b16 %v1965
        %v2236 = vunpack.c.l.b16 %v1966
        %v2237 = vunpack.c.h.b16 %v1966
        %v2238 = vunpack.c.l.b16 %v1967
        %v2239 = vunpack.c.h.b16 %v1967
        %v2240 = vunpack.c.l.b16 %v1968
        %v2241 = vunpack.c.h.b16 %v1968
        %v2242 = vunpack.c.l.b16 %v1969
        %v2243 = vunpack.c.h.b16 %v1969
        %v2244 = vunpack.c.l.b16 %v1970
        %v2245 = vunpack.c.h.b16 %v1970
        %v2246 = vunpack.c.l.b16 %v1971
        %v2247 = vunpack.c.h.b16 %v1971
        %v2248 = vunpack.c.l.b16 %v1972
        %v2249 = vunpack.c.h.b16 %v1972
        %v2250 = vunpack.c.l.b16 %v1973
        %v2251 = vunpack.c.h.b16 %v1973
        %v2252 = vunpack.c.l.b16 %v1974
        %v2253 = vunpack.c.h.b16 %v1974
        %v2254 = vunpack.c.l.b16 %v1975
        %v2255 = vunpack.c.h.b16 %v1975
        %v2256 = vunpack.c.l.b16 %v1976
        %v2257 = vunpack.c.h.b16 %v1976
        %v2258 = vunpack.c.l.b16 %v1977
        %v2259 = vunpack.c.h.b16 %v1977
        %v2260 = vunpack.c.l.b16 %v1978
        %v2261 = vunpack.c.h.b16 %v1978
        %v2262 = vunpack.c.l.b16 %v1979
        %v2263 = vunpack.c.h.b16 %v1979
        %v2264 = vunpack.c.l.b16 %v1980
        %v2265 = vunpack.c.h.b16 %v1980
        %v2266 = vunpack.c.l.b16 %v1981
        %v2267 = vunpack.c.h.b16 %v1981
        %v2268 = vunpack.c.l.b16 %v1982
        %v2269 = vunpack.c.h.b16 %v1982
        %v2270 = vunpack.c.l.b16 %v1983
        %v2271 = vunpack.c.h.b16 %v1983
        %v2272 = vunpack.c.l.b16 %v1984
        %v2273 = vunpack.c.h.b16 %v1984
        %v2274 = vunpack.c.l.b16 %v1985
        %v2275 = vunpack.c.h.b16 %v1985
        %v2276 = vunpack.c.l.b16 %v1986
        %v2277 = vunpack.c.h.b16 %v1986
        %v2278 = vunpack.c.l.b16 %v1987
        %v2279 = vunpack.c.h.b16 %v1987
        %v2280 = vunpack.c.l.b16 %v1988
        %v2281 = vunpack.c.h.b16 %v1988
        %v2282 = vunpack.c.l.b16 %v1989
        %v2283 = vunpack.c.h.b16 %v1989
        %v2284 = vunpack.c.l.b16 %v1990
        %v2285 = vunpack.c.h.b16 %v1990
        %v2286 = vunpack.c.l.b16 %v1991
        %v2287 = vunpack.c.h.b16 %v1991
        %v2288 = vunpack.c.l.b16 %v1992
        %v2289 = vunpack.c.h.b16 %v1992
        %v2290 = vunpack.c.l.b16 %v1993
        %v2291 = vunpack.c.h.b16 %v1993
        %v2292 = vunpack.c.l.b16 %v1994
        %v2293 = vunpack.c.h.b16 %v1994
        %v2294 = vunpack.c.l.b16 %v1995
        %v2295 = vunpack.c.h.b16 %v1995
        %v2296 = vunpack.c.l.b16 %v1996
        %v2297 = vunpack.c.h.b16 %v1996
        %v2298 = vunpack.c.l.b16 %v1997
        %v2299 = vunpack.c.h.b16 %v1997
        %v2300 = vunpack.c.l.b16 %v1998
        %v2301 = vunpack.c.h.b16 %v1998
        %v2302 = vunpack.c.l.b16 %v1999
        %v2303 = vunpack.c.h.b16 %v1999
        %v2304 = vunpack.c.l.b16 %v2000
        %v2305 = vunpack.c.h.b16 %v2000
        %v2306 = vunpack.c.l.b16 %v2001
        %v2307 = vunpack.c.h.b16 %v2001
        %v2308 = vunpack.c.l.b16 %v2002
        %v2309 = vunpack.c.h.b16 %v2002
        %v2310 = vunpack.c.l.b16 %v2003
        %v2311 = vunpack.c.h.b16 %v2003
        %v2312 = vunpack.c.l.b16 %v2004
        %v2313 = vunpack.c.h.b16 %v2004
        %v2314 = vunpack.c.l.b16 %v2005
        %v2315 = vunpack.c.h.b16 %v2005
        %v2316 = vunpack.c.l.b16 %v2006
        %v2317 = vunpack.c.h.b16 %v2006
        %v2318 = vunpack.c.l.b16 %v2007
        %v2319 = vunpack.c.h.b16 %v2007
        %v2320 = vunpack.c.l.b16 %v2008
        %v2321 = vunpack.c.h.b16 %v2008
        %v2322 = vunpack.c.l.b16 %v2009
        %v2323 = vunpack.c.h.b16 %v2009
        %v2324 = vunpack.c.l.b16 %v2010
        %v2325 = vunpack.c.h.b16 %v2010
        %v2326 = vunpack.c.l.b16 %v2011
        %v2327 = vunpack.c.h.b16 %v2011
        %v2328 = vunpack.c.l.b16 %v2012
        %v2329 = vunpack.c.h.b16 %v2012
        %v2330 = vunpack.c.l.b16 %v2013
        %v2331 = vunpack.c.h.b16 %v2013
        %v2332 = vunpack.c.l.b16 %v2014
        %v2333 = vunpack.c.h.b16 %v2014
        %v2334 = vunpack.c.l.b16 %v2015
        %v2335 = vunpack.c.h.b16 %v2015
        %v2336 = vunpack.c.l.b16 %v2016
        %v2337 = vunpack.c.h.b16 %v2016
        %v2338 = vunpack.c.l.b16 %v2017
        %v2339 = vunpack.c.h.b16 %v2017
        %v2340 = vunpack.c.l.b16 %v2018
        %v2341 = vunpack.c.h.b16 %v2018
        %v2342 = vunpack.c.l.b16 %v2019
        %v2343 = vunpack.c.h.b16 %v2019
        %v2344 = vunpack.c.l.b16 %v2020
        %v2345 = vunpack.c.h.b16 %v2020
        %v2346 = vunpack.c.l.b16 %v2021
        %v2347 = vunpack.c.h.b16 %v2021
        %v2348 = vunpack.c.l.b16 %v2022
        %v2349 = vunpack.c.h.b16 %v2022
        %v2350 = vunpack.c.l.b16 %v2023
        %v2351 = vunpack.c.h.b16 %v2023
        %v2352 = vunpack.c.l.b16 %v2024
        %v2353 = vunpack.c.h.b16 %v2024
        %v2354 = vunpack.c.l.b16 %v2025
        %v2355 = vunpack.c.h.b16 %v2025
        %v2356 = vunpack.c.l.b16 %v2026
        %v2357 = vunpack.c.h.b16 %v2026
        %v2358 = vunpack.c.l.b16 %v2027
        %v2359 = vunpack.c.h.b16 %v2027
        %v2360 = vunpack.c.l.b16 %v2028
        %v2361 = vunpack.c.h.b16 %v2028
        %v2362 = vunpack.c.l.b16 %v2029
        %v2363 = vunpack.c.h.b16 %v2029
        %v2364 = vunpack.c.l.b16 %v2030
        %v2365 = vunpack.c.h.b16 %v2030
        %v2366 = vunpack.c.l.b16 %v2031
        %v2367 = vunpack.c.h.b16 %v2031
        %v2368 = vunpack.c.l.b16 %v2032
        %v2369 = vunpack.c.h.b16 %v2032
        %v2370 = vunpack.c.l.b16 %v2033
        %v2371 = vunpack.c.h.b16 %v2033
        %v2372 = vunpack.c.l.b16 %v2034
        %v2373 = vunpack.c.h.b16 %v2034
        %v2374 = vunpack.c.l.b16 %v2035
        %v2375 = vunpack.c.h.b16 %v2035
        %v2376 = vunpack.c.l.b16 %v2036
        %v2377 = vunpack.c.h.b16 %v2036
        %v2378 = vunpack.c.l.b16 %v2037
        %v2379 = vunpack.c.h.b16 %v2037
        %v2380 = vunpack.c.l.b16 %v2038
        %v2381 = vunpack.c.h.b16 %v2038
        %v2382 = vunpack.c.l.b16 %v2039
        %v2383 = vunpack.c.h.b16 %v2039
        %v2384 = vunpack.c.l.b16 %v2040
        %v2385 = vunpack.c.h.b16 %v2040
        %v2386 = vunpack.c.l.b16 %v2041
        %v2387 = vunpack.c.h.b16 %v2041
        %v2388 = vunpack.c.l.b16 %v2042
        %v2389 = vunpack.c.h.b16 %v2042
        %v2390 = vunpack.c.l.b16 %v2043
        %v2391 = vunpack.c.h.b16 %v2043
        %v2392 = vunpack.c.l.b16 %v2044
        %v2393 = vunpack.c.h.b16 %v2044
        %v2394 = vunpack.c.l.b16 %v2045
        %v2395 = vunpack.c.h.b16 %v2045
        %v2396 = vunpack.c.l.b16 %v2046
        %v2397 = vunpack.c.h.b16 %v2046
        %v2398 = vunpack.c.l.b16 %v2047
        %v2399 = vunpack.c.h.b16 %v2047
        %v2400 = vunpack.c.l.b16 %v2048
        %v2401 = vunpack.c.h.b16 %v2048
        %v2402 = vunpack.c.l.b16 %v2049
        %v2403 = vunpack.c.h.b16 %v2049
        %v2404 = vunpack.c.l.b16 %v2050
        %v2405 = vunpack.c.h.b16 %v2050
        %v2406 = vunpack.c.l.b16 %v2051
        %v2407 = vunpack.c.h.b16 %v2051
        %v2408 = vunpack.c.l.b16 %v2052
        %v2409 = vunpack.c.h.b16 %v2052
        %v2410 = vunpack.c.l.b16 %v2053
        %v2411 = vunpack.c.h.b16 %v2053
        %v2412 = vunpack.c.l.b16 %v2054
        %v2413 = vunpack.c.h.b16 %v2054
        %v2414 = vunpack.c.l.b16 %v2055
        %v2415 = vunpack.c.h.b16 %v2055
        %v2416 = vunpack.c.l.b16 %v2056
        %v2417 = vunpack.c.h.b16 %v2056
        %v2418 = vunpack.c.l.b16 %v2057
        %v2419 = vunpack.c.h.b16 %v2057
        %v2420 = vunpack.c.l.b16 %v2058
        %v2421 = vunpack.c.h.b16 %v2058
        %v2422 = vunpack.c.l.b16 %v2059
        %v2423 = vunpack.c.h.b16 %v2059
        %v2424 = vunpack.c.l.b16 %v2060
        %v2425 = vunpack.c.h.b16 %v2060
        %v2426 = vunpack.c.l.b16 %v2061
        %v2427 = vunpack.c.h.b16 %v2061
        %v2428 = vunpack.c.l.b16 %v2062
        %v2429 = vunpack.c.h.b16 %v2062
        %v2430 = vunpack.c.l.b16 %v2063
        %v2431 = vunpack.c.h.b16 %v2063
        %v2432 = vunpack.c.l.b16 %v2064
        %v2433 = vunpack.c.h.b16 %v2064
        %v2434 = vunpack.c.l.b16 %v2065
        %v2435 = vunpack.c.h.b16 %v2065
        %v2436 = vunpack.c.l.b16 %v2066
        %v2437 = vunpack.c.h.b16 %v2066
        %v2438 = vunpack.c.l.b16 %v2067
        %v2439 = vunpack.c.h.b16 %v2067
        %v2440 = vunpack.c.l.b16 %v2068
        %v2441 = vunpack.c.h.b16 %v2068
        %v2442 = vunpack.c.l.b16 %v2069
        %v2443 = vunpack.c.h.b16 %v2069
        %v2444 = vunpack.c.l.b16 %v2070
        %v2445 = vunpack.c.h.b16 %v2070
        %v2446 = vunpack.c.l.b16 %v2071
        %v2447 = vunpack.c.h.b16 %v2071
        %v2448 = vunpack.c.l.b16 %v2072
        %v2449 = vunpack.c.h.b16 %v2072
        %v2450 = vunpack.c.l.b16 %v2073
        %v2451 = vunpack.c.h.b16 %v2073
        %v2452 = vunpack.c.l.b16 %v2074
        %v2453 = vunpack.c.h.b16 %v2074
        %v2454 = vunpack.c.l.b16 %v2075
        %v2455 = vunpack.c.h.b16 %v2075
        %v2456 = vunpack.c.l.b16 %v2076
        %v2457 = vunpack.c.h.b16 %v2076
        %v2458 = vunpack.c.l.b16 %v2077
        %v2459 = vunpack.c.h.b16 %v2077
        %v2460 = vunpack.c.l.b16 %v2078
        %v2461 = vunpack.c.h.b16 %v2078
        %v2462 = vunpack.c.l.b16 %v2079
        %v2463 = vunpack.c.h.b16 %v2079
        %v2464 = vpack.c.b16 %v2216, %v2208
        %v2465 = vpack.c.b16 %v2217, %v2209
        %v2466 = vpack.c.b16 %v2218, %v2210
        %v2467 = vpack.c.b16 %v2219, %v2211
        %v2468 = vpack.c.b16 %v2220, %v2212
        %v2469 = vpack.c.b16 %v2221, %v2213
        %v2470 = vpack.c.b16 %v2222, %v2214
        %v2471 = vpack.c.b16 %v2223, %v2215
        %v2472 = vpack.c.b16 %v2232, %v2224
        %v2473 = vpack.c.b16 %v2233, %v2225
        %v2474 = vpack.c.b16 %v2234, %v2226
        %v2475 = vpack.c.b16 %v2235, %v2227
        %v2476 = vpack.c.b16 %v2236, %v2228
        %v2477 = vpack.c.b16 %v2237, %v2229
        %v2478 = vpack.c.b16 %v2238, %v2230
        %v2479 = vpack.c.b16 %v2239, %v2231
        %v2480 = vpack.c.b16 %v2248, %v2240
        %v2481 = vpack.c.b16 %v2249, %v2241
        %v2482 = vpack.c.b16 %v2250, %v2242
        %v2483 = vpack.c.b16 %v2251, %v2243
        %v2484 = vpack.c.b16 %v2252, %v2244
        %v2485 = vpack.c.b16 %v2253, %v2245
        %v2486 = vpack.c.b16 %v2254, %v2246
        %v2487 = vpack.c.b16 %v2255, %v2247
        %v2488 = vpack.c.b16 %v2264, %v2256
        %v2489 = vpack.c.b16 %v2265, %v2257
        %v2490 = vpack.c.b16 %v2266, %v2258
        %v2491 = vpack.c.b16 %v2267, %v2259
        %v2492 = vpack.c.b16 %v2268, %v2260
        %v2493 = vpack.c.b16 %v2269, %v2261
        %v2494 = vpack.c.b16 %v2270, %v2262
        %v2495 = vpack.c.b16 %v2271, %v2263
        %v2496 = vpack.c.b16 %v2280, %v2272
        %v2497 = vpack.c.b16 %v2281, %v2273
        %v2498 = vpack.c.b16 %v2282, %v2274
        %v2499 = vpack.c.b16 %v2283, %v2275
        %v2500 = vpack.c.b16 %v2284, %v2276
        %v2501 = vpack.c.b16 %v2285, %v2277
        %v2502 = vpack.c.b16 %v2286, %v2278
        %v2503 = vpack.c.b16 %v2287, %v2279
        %v2504 = vpack.c.b16 %v2296, %v2288
        %v2505 = vpack.c.b16 %v2297, %v2289
        %v2506 = vpack.c.b16 %v2298, %v2290
        %v2507 = vpack.c.b16 %v2299, %v2291
        %v2508 = vpack.c.b16 %v2300, %v2292
        %v2509 = vpack.c.b16 %v2301, %v2293
        %v2510 = vpack.c.b16 %v2302, %v2294
        %v2511 = vpack.c.b16 %v2303, %v2295
        %v2512 = vpack.c.b16 %v2312, %v2304
        %v2513 = vpack.c.b16 %v2313, %v2305
        %v2514 = vpack.c.b16 %v2314, %v2306
        %v2515 = vpack.c.b16 %v2315, %v2307
        %v2516 = vpack.c.b16 %v2316, %v2308
        %v2517 = vpack.c.b16 %v2317, %v2309
        %v2518 = vpack.c.b16 %v2318, %v2310
        %v2519 = vpack.c.b16 %v2319, %v2311
        %v2520 = vpack.c.b16 %v2328, %v2320
        %v2521 = vpack.c.b16 %v2329, %v2321
        %v2522 = vpack.c.b16 %v2330, %v2322
        %v2523 = vpack.c.b16 %v2331, %v2323
        %v2524 = vpack.c.b16 %v2332, %v2324
        %v2525 = vpack.c.b16 %v2333, %v2325
        %v2526 = vpack.c.b16 %v2334, %v2326
        %v2527 = vpack.c.b16 %v2335, %v2327
        %v2528 = vpack.c.b16 %v2344, %v2336
        %v2529 = vpack.c.b16 %v2345, %v2337
        %v2530 = vpack.c.b16 %v2346, %v2338
        %v2531 = vpack.c.b16 %v2347, %v2339
        %v2532 = vpack.c.b16 %v2348, %v2340
        %v2533 = vpack.c.b16 %v2349, %v2341
        %v2534 = vpack.c.b16 %v2350, %v2342
        %v2535 = vpack.c.b16 %v2351, %v2343
        %v2536 = vpack.c.b16 %v2360, %v2352
        %v2537 = vpack.c.b16 %v2361, %v2353
        %v2538 = vpack.c.b16 %v2362, %v2354
        %v2539 = vpack.c.b16 %v2363, %v2355
        %v2540 = vpack.c.b16 %v2364, %v2356
        %v2541 = vpack.c.b16 %v2365, %v2357
        %v2542 = vpack.c.b16 %v2366, %v2358
        %v2543 = vpack.c.b16 %v2367, %v2359
        %v2544 = vpack.c.b16 %v2376, %v2368
        %v2545 = vpack.c.b16 %v2377, %v2369
        %v2546 = vpack.c.b16 %v2378, %v2370
        %v2547 = vpack.c.b16 %v2379, %v2371
        %v2548 = vpack.c.b16 %v2380, %v2372
        %v2549 = vpack.c.b16 %v2381, %v2373
        %v2550 = vpack.c.b16 %v2382, %v2374
        %v2551 = vpack.c.b16 %v2383, %v2375
        %v2552 = vpack.c.b16 %v2392, %v2384
        %v2553 = vpack.c.b16 %v2393, %v2385
        %v2554 = vpack.c.b16 %v2394, %v2386
        %v2555 = vpack.c.b16 %v2395, %v2387
        %v2556 = vpack.c.b16 %v2396, %v2388
        %v2557 = vpack.c.b16 %v2397, %v2389
        %v2558 = vpack.c.b16 %v2398, %v2390
        %v2559 = vpack.c.b16 %v2399, %v2391
        %v2560 = vpack.c.b16 %v2408, %v2400
        %v2561 = vpack.c.b16 %v2409, %v2401
        %v2562 = vpack.c.b16 %v2410, %v2402
        %v2563 = vpack.c.b16 %v2411, %v2403
        %v2564 = vpack.c.b16 %v2412, %v2404
        %v2565 = vpack.c.b16 %v2413, %v2405
        %v2566 = vpack.c.b16 %v2414, %v2406
        %v2567 = vpack.c.b16 %v2415, %v2407
        %v2568 = vpack.c.b16 %v2424, %v2416
        %v2569 = vpack.c.b16 %v2425, %v2417
        %v2570 = vpack.c.b16 %v2426, %v2418
        %v2571 = vpack.c.b16 %v2427, %v2419
        %v2572 = vpack.c.b16 %v2428, %v2420
        %v2573 = vpack.c.b16 %v2429, %v2421
        %v2574 = vpack.c.b16 %v2430, %v2422
        %v2575 = vpack.c.b16 %v2431, %v2423
        %v2576 = vpack.c.b16 %v2440, %v2432
        %v2577 = vpack.c.b16 %v2441, %v2433
        %v2578 = vpack.c.b16 %v2442, %v2434
        %v2579 = vpack.c.b16 %v2443, %v2435
        %v2580 = vpack.c.b16 %v2444, %v2436
        %v2581 = vpack.c.b16 %v2445, %v2437
        %v2582 = vpack.c.b16 %v2446, %v2438
        %v2583 = vpack.c.b16 %v2447, %v2439
        %v2584 = vpack.c.b16 %v2456, %v2448
        %v2585 = vpack.c.b16 %v2457, %v2449
        %v2586 = vpack.c.b16 %v2458, %v2450
        %v2587 = vpack.c.b16 %v2459, %v2451
        %v2588 = vpack.c.b16 %v2460, %v2452
        %v2589 = vpack.c.b16 %v2461, %v2453
        %v2590 = vpack.c.b16 %v2462, %v2454
        %v2591 = vpack.c.b16 %v2463, %v2455
        %2720 = vmatprep.subr.bf16.mxu0 %v2521
        %2721 = vmatpush1.bf16.msra.mxu0 %v2520
        %2722 = vmatprep.subr.bf16.mxu0 %v2513
        %2723 = vmatpush1.bf16.msra.mxu0 %v2512
        %2724 = vmatprep.subr.bf16.mxu0 %v2505
        %2725 = vmatpush1.bf16.msra.mxu0 %v2504
        %2726 = vmatprep.subr.bf16.mxu0 %v2497
        %2727 = vmatpush1.bf16.msra.mxu0 %v2496
        %2728 = vmatprep.subr.bf16.mxu0 %v2489
        %2729 = vmatpush1.bf16.msra.mxu0 %v2488
        %2730 = vmatprep.subr.bf16.mxu0 %v2481
        %2731 = vmatpush1.bf16.msra.mxu0 %v2480
        %2732 = vmatprep.subr.bf16.mxu0 %v2473
        %2733 = vmatpush1.bf16.msra.mxu0 %v2472
        %2734 = vmatprep.subr.bf16.mxu0 %v2465
        %2735 = vmatpush1.bf16.msra.mxu0 %v2464
        %2736 = vmatprep.subr.bf16.mxu0 %v2585
        %2737 = vmatpush2.bf16.msra.mxu0 %v2584
        %2738 = vmatprep.subr.bf16.mxu0 %v2577
        %2739 = vmatpush2.bf16.msra.mxu0 %v2576
        %2740 = vmatprep.subr.bf16.mxu0 %v2569
        %2741 = vmatpush2.bf16.msra.mxu0 %v2568
        %2742 = vmatprep.subr.bf16.mxu0 %v2561
        %2743 = vmatpush2.bf16.msra.mxu0 %v2560
        %2744 = vmatprep.subr.bf16.mxu0 %v2553
        %2745 = vmatpush2.bf16.msra.mxu0 %v2552
        %2746 = vmatprep.subr.bf16.mxu0 %v2545
        %2747 = vmatpush2.bf16.msra.mxu0 %v2544
        %2748 = vmatprep.subr.bf16.mxu0 %v2537
        %2749 = vmatpush2.bf16.msra.mxu0 %v2536
        %2750 = vmatprep.subr.bf16.mxu0 %v2529
        %2751 = vmatpush2.bf16.msra.mxu0 %v2528
        %2752 = vmatprep.mubr.bf16.mxu0 %v1951
        %2753 = vmatmul.mubr.bf16.gmra.mxu0 %v1950
        %v2754 = vpop.f32.mrf.mxu0
        %v2755 = vadd.f32 0.0, %v2754
        %v2756 = vpop.f32.mrf.mxu0
        %v2757 = vadd.f32 0.0, %v2756
        %v2758 = vpop.f32.mrf.mxu0
        %v2759 = vpop.f32.mrf.mxu0
        %2760 = vdwg.mxu0
        %2761 = vmatprep.subr.bf16.mxu0 %v2523
        %2762 = vmatpush1.bf16.msra.mxu0 %v2522
        %2763 = vmatprep.subr.bf16.mxu0 %v2515
        %2764 = vmatpush1.bf16.msra.mxu0 %v2514
        %2765 = vmatprep.subr.bf16.mxu0 %v2507
        %2766 = vmatpush1.bf16.msra.mxu0 %v2506
        %2767 = vmatprep.subr.bf16.mxu0 %v2499
        %2768 = vmatpush1.bf16.msra.mxu0 %v2498
        %2769 = vmatprep.subr.bf16.mxu0 %v2491
        %2770 = vmatpush1.bf16.msra.mxu0 %v2490
        %2771 = vmatprep.subr.bf16.mxu0 %v2483
        %2772 = vmatpush1.bf16.msra.mxu0 %v2482
        %2773 = vmatprep.subr.bf16.mxu0 %v2475
        %2774 = vmatpush1.bf16.msra.mxu0 %v2474
        %2775 = vmatprep.subr.bf16.mxu0 %v2467
        %2776 = vmatpush1.bf16.msra.mxu0 %v2466
        %2777 = vmatprep.subr.bf16.mxu0 %v2587
        %2778 = vmatpush2.bf16.msra.mxu0 %v2586
        %2779 = vmatprep.subr.bf16.mxu0 %v2579
        %2780 = vmatpush2.bf16.msra.mxu0 %v2578
        %2781 = vmatprep.subr.bf16.mxu0 %v2571
        %2782 = vmatpush2.bf16.msra.mxu0 %v2570
        %2783 = vmatprep.subr.bf16.mxu0 %v2563
        %2784 = vmatpush2.bf16.msra.mxu0 %v2562
        %2785 = vmatprep.subr.bf16.mxu0 %v2555
        %2786 = vmatpush2.bf16.msra.mxu0 %v2554
        %2787 = vmatprep.subr.bf16.mxu0 %v2547
        %2788 = vmatpush2.bf16.msra.mxu0 %v2546
        %2789 = vmatprep.subr.bf16.mxu0 %v2539
        %2790 = vmatpush2.bf16.msra.mxu0 %v2538
        %2791 = vmatprep.subr.bf16.mxu0 %v2531
        %2792 = vmatpush2.bf16.msra.mxu0 %v2530
        %2793 = vmatprep.mubr.bf16.mxu0 %v1951
        %2794 = vmatmul.mubr.bf16.gmra.mxu0 %v1950
        %v2795 = vpop.f32.mrf.mxu0
        %v2796 = vadd.f32 0.0, %v2795
        %v2797 = vpop.f32.mrf.mxu0
        %v2798 = vadd.f32 0.0, %v2797
        %v2799 = vpop.f32.mrf.mxu0
        %v2800 = vpop.f32.mrf.mxu0
        %2801 = vdwg.mxu0
        %2802 = vmatprep.subr.bf16.mxu0 %v2525
        %2803 = vmatpush1.bf16.msra.mxu0 %v2524
        %2804 = vmatprep.subr.bf16.mxu0 %v2517
        %2805 = vmatpush1.bf16.msra.mxu0 %v2516
        %2806 = vmatprep.subr.bf16.mxu0 %v2509
        %2807 = vmatpush1.bf16.msra.mxu0 %v2508
        %2808 = vmatprep.subr.bf16.mxu0 %v2501
        %2809 = vmatpush1.bf16.msra.mxu0 %v2500
        %2810 = vmatprep.subr.bf16.mxu0 %v2493
        %2811 = vmatpush1.bf16.msra.mxu0 %v2492
        %2812 = vmatprep.subr.bf16.mxu0 %v2485
        %2813 = vmatpush1.bf16.msra.mxu0 %v2484
        %2814 = vmatprep.subr.bf16.mxu0 %v2477
        %2815 = vmatpush1.bf16.msra.mxu0 %v2476
        %2816 = vmatprep.subr.bf16.mxu0 %v2469
        %2817 = vmatpush1.bf16.msra.mxu0 %v2468
        %2818 = vmatprep.subr.bf16.mxu0 %v2589
        %2819 = vmatpush2.bf16.msra.mxu0 %v2588
        %2820 = vmatprep.subr.bf16.mxu0 %v2581
        %2821 = vmatpush2.bf16.msra.mxu0 %v2580
        %2822 = vmatprep.subr.bf16.mxu0 %v2573
        %2823 = vmatpush2.bf16.msra.mxu0 %v2572
        %2824 = vmatprep.subr.bf16.mxu0 %v2565
        %2825 = vmatpush2.bf16.msra.mxu0 %v2564
        %2826 = vmatprep.subr.bf16.mxu0 %v2557
        %2827 = vmatpush2.bf16.msra.mxu0 %v2556
        %2828 = vmatprep.subr.bf16.mxu0 %v2549
        %2829 = vmatpush2.bf16.msra.mxu0 %v2548
        %2830 = vmatprep.subr.bf16.mxu0 %v2541
        %2831 = vmatpush2.bf16.msra.mxu0 %v2540
        %2832 = vmatprep.subr.bf16.mxu0 %v2533
        %2833 = vmatpush2.bf16.msra.mxu0 %v2532
        %2834 = vmatprep.mubr.bf16.mxu0 %v1951
        %2835 = vmatmul.mubr.bf16.gmra.mxu0 %v1950
        %v2836 = vpop.f32.mrf.mxu0
        %v2837 = vadd.f32 0.0, %v2836
        %v2838 = vpop.f32.mrf.mxu0
        %v2839 = vadd.f32 0.0, %v2838
        %v2840 = vpop.f32.mrf.mxu0
        %v2841 = vpop.f32.mrf.mxu0
        %2842 = vdwg.mxu0
        %2843 = vmatprep.subr.bf16.mxu0 %v2527
        %2844 = vmatpush1.bf16.msra.mxu0 %v2526
        %2845 = vmatprep.subr.bf16.mxu0 %v2519
        %2846 = vmatpush1.bf16.msra.mxu0 %v2518
        %2847 = vmatprep.subr.bf16.mxu0 %v2511
        %2848 = vmatpush1.bf16.msra.mxu0 %v2510
        %2849 = vmatprep.subr.bf16.mxu0 %v2503
        %2850 = vmatpush1.bf16.msra.mxu0 %v2502
        %2851 = vmatprep.subr.bf16.mxu0 %v2495
        %2852 = vmatpush1.bf16.msra.mxu0 %v2494
        %2853 = vmatprep.subr.bf16.mxu0 %v2487
        %2854 = vmatpush1.bf16.msra.mxu0 %v2486
        %2855 = vmatprep.subr.bf16.mxu0 %v2479
        %2856 = vmatpush1.bf16.msra.mxu0 %v2478
        %2857 = vmatprep.subr.bf16.mxu0 %v2471
        %2858 = vmatpush1.bf16.msra.mxu0 %v2470
        %2859 = vmatprep.subr.bf16.mxu0 %v2591
        %2860 = vmatpush2.bf16.msra.mxu0 %v2590
        %2861 = vmatprep.subr.bf16.mxu0 %v2583
        %2862 = vmatpush2.bf16.msra.mxu0 %v2582
        %2863 = vmatprep.subr.bf16.mxu0 %v2575
        %2864 = vmatpush2.bf16.msra.mxu0 %v2574
        %2865 = vmatprep.subr.bf16.mxu0 %v2567
        %2866 = vmatpush2.bf16.msra.mxu0 %v2566
        %2867 = vmatprep.subr.bf16.mxu0 %v2559
        %2868 = vmatpush2.bf16.msra.mxu0 %v2558
        %2869 = vmatprep.subr.bf16.mxu0 %v2551
        %2870 = vmatpush2.bf16.msra.mxu0 %v2550
        %2871 = vmatprep.subr.bf16.mxu0 %v2543
        %2872 = vmatpush2.bf16.msra.mxu0 %v2542
        %2873 = vmatprep.subr.bf16.mxu0 %v2535
        %2874 = vmatpush2.bf16.msra.mxu0 %v2534
        %2875 = vmatprep.mubr.bf16.mxu0 %v1951
        %2876 = vmatmul.mubr.bf16.gmra.mxu0 %v1950
        %v2877 = vpop.f32.mrf.mxu0
        %v2878 = vadd.f32 0.0, %v2877
        %v2879 = vpop.f32.mrf.mxu0
        %v2880 = vadd.f32 0.0, %v2879
        %v2881 = vpop.f32.mrf.mxu0
        %v2882 = vpop.f32.mrf.mxu0
        %2883 = vdwg.mxu0
        %v2884 = vsub.f32 0.0, %v2755
        %v2885 = vsub.f32 0.0, %v2757
        %v2886 = vsub.f32 0.0, %v2796
        %v2887 = vsub.f32 0.0, %v2798
        %v2888 = vmul.f32 %v2884, 1.442695
        %v2889 = vpow.pop %v2888
        %v2890 = vmul.f32 %v2885, 1.442695
        %v2891 = vpow.pop %v2890
        %v2892 = vmul.f32 %v2886, 1.442695
        %v2893 = vpow.pop %v2892
        %v2894 = vmul.f32 %v2887, 1.442695
        %v2895 = vpow.pop %v2894
        %v2896 = vadd.f32 %v2889, 1.0
        %v2897 = vadd.f32 %v2891, 1.0
        %v2898 = vadd.f32 %v2893, 1.0
        %v2899 = vadd.f32 %v2895, 1.0
        %v2900 = vrcp.pop %v2896
        %v2901 = vrcp.pop %v2897
        %v2902 = vrcp.pop %v2898
        %v2903 = vrcp.pop %v2899
        %v2904 = vmul.f32 %v2755, %v2900
        %v2905 = vmul.f32 %v2757, %v2901
        %v2906 = vmul.f32 %v2796, %v2902
        %v2907 = vmul.f32 %v2798, %v2903
        %v2908 = vmul.f32 %v2904, %v2837
        %v2909 = vmul.f32 %v2905, %v2839
        %v2910 = vmul.f32 %v2906, %v2878
        %v2911 = vmul.f32 %v2907, %v2880
        %v2912 = vpack.c.bf16 %v2908, %v2908
        %v2913 = vpack.c.bf16 %v2909, %v2909
        %v2914 = vpack.c.bf16 %v2910, %v2910
        %v2915 = vpack.c.bf16 %v2911, %v2911
        %v2916 = vld [vmem:[#allocation19] sm:$0xff]
        %v2917 = vld [vmem:[#allocation19 + $0x8] sm:$0xff]
        %v2918 = vld [vmem:[#allocation19 + $0x10] sm:$0xff]
        %v2919 = vld [vmem:[#allocation19 + $0x18] sm:$0xff]
        %v2920 = vld [vmem:[#allocation19 + $0x20] sm:$0xff]
        %v2921 = vld [vmem:[#allocation19 + $0x28] sm:$0xff]
        %v2922 = vld [vmem:[#allocation19 + $0x30] sm:$0xff]
        %v2923 = vld [vmem:[#allocation19 + $0x38] sm:$0xff]
        %v2924 = vld [vmem:[#allocation19 + $0x40] sm:$0xff]
        %v2925 = vld [vmem:[#allocation19 + $0x48] sm:$0xff]
        %v2926 = vld [vmem:[#allocation19 + $0x50] sm:$0xff]
        %v2927 = vld [vmem:[#allocation19 + $0x58] sm:$0xff]
        %v2928 = vld [vmem:[#allocation19 + $0x60] sm:$0xff]
        %v2929 = vld [vmem:[#allocation19 + $0x68] sm:$0xff]
        %v2930 = vld [vmem:[#allocation19 + $0x70] sm:$0xff]
        %v2931 = vld [vmem:[#allocation19 + $0x78] sm:$0xff]
        %v2932 = vld [vmem:[#allocation19 + $0x80] sm:$0xff]
        %v2933 = vld [vmem:[#allocation19 + $0x88] sm:$0xff]
        %v2934 = vld [vmem:[#allocation19 + $0x90] sm:$0xff]
        %v2935 = vld [vmem:[#allocation19 + $0x98] sm:$0xff]
        %v2936 = vld [vmem:[#allocation19 + $0xa0] sm:$0xff]
        %v2937 = vld [vmem:[#allocation19 + $0xa8] sm:$0xff]
        %v2938 = vld [vmem:[#allocation19 + $0xb0] sm:$0xff]
        %v2939 = vld [vmem:[#allocation19 + $0xb8] sm:$0xff]
        %v2940 = vld [vmem:[#allocation19 + $0xc0] sm:$0xff]
        %v2941 = vld [vmem:[#allocation19 + $0xc8] sm:$0xff]
        %v2942 = vld [vmem:[#allocation19 + $0xd0] sm:$0xff]
        %v2943 = vld [vmem:[#allocation19 + $0xd8] sm:$0xff]
        %v2944 = vld [vmem:[#allocation19 + $0xe0] sm:$0xff]
        %v2945 = vld [vmem:[#allocation19 + $0xe8] sm:$0xff]
        %v2946 = vld [vmem:[#allocation19 + $0xf0] sm:$0xff]
        %v2947 = vld [vmem:[#allocation19 + $0xf8] sm:$0xff]
        %v2948 = vld [vmem:[#allocation19 + $0x100] sm:$0xff]
        %v2949 = vld [vmem:[#allocation19 + $0x108] sm:$0xff]
        %v2950 = vld [vmem:[#allocation19 + $0x110] sm:$0xff]
        %v2951 = vld [vmem:[#allocation19 + $0x118] sm:$0xff]
        %v2952 = vld [vmem:[#allocation19 + $0x120] sm:$0xff]
        %v2953 = vld [vmem:[#allocation19 + $0x128] sm:$0xff]
        %v2954 = vld [vmem:[#allocation19 + $0x130] sm:$0xff]
        %v2955 = vld [vmem:[#allocation19 + $0x138] sm:$0xff]
        %v2956 = vld [vmem:[#allocation19 + $0x140] sm:$0xff]
        %v2957 = vld [vmem:[#allocation19 + $0x148] sm:$0xff]
        %v2958 = vld [vmem:[#allocation19 + $0x150] sm:$0xff]
        %v2959 = vld [vmem:[#allocation19 + $0x158] sm:$0xff]
        %v2960 = vld [vmem:[#allocation19 + $0x160] sm:$0xff]
        %v2961 = vld [vmem:[#allocation19 + $0x168] sm:$0xff]
        %v2962 = vld [vmem:[#allocation19 + $0x170] sm:$0xff]
        %v2963 = vld [vmem:[#allocation19 + $0x178] sm:$0xff]
        %v2964 = vld [vmem:[#allocation19 + $0x180] sm:$0xff]
        %v2965 = vld [vmem:[#allocation19 + $0x188] sm:$0xff]
        %v2966 = vld [vmem:[#allocation19 + $0x190] sm:$0xff]
        %v2967 = vld [vmem:[#allocation19 + $0x198] sm:$0xff]
        %v2968 = vld [vmem:[#allocation19 + $0x1a0] sm:$0xff]
        %v2969 = vld [vmem:[#allocation19 + $0x1a8] sm:$0xff]
        %v2970 = vld [vmem:[#allocation19 + $0x1b0] sm:$0xff]
        %v2971 = vld [vmem:[#allocation19 + $0x1b8] sm:$0xff]
        %v2972 = vld [vmem:[#allocation19 + $0x1c0] sm:$0xff]
        %v2973 = vld [vmem:[#allocation19 + $0x1c8] sm:$0xff]
        %v2974 = vld [vmem:[#allocation19 + $0x1d0] sm:$0xff]
        %v2975 = vld [vmem:[#allocation19 + $0x1d8] sm:$0xff]
        %v2976 = vld [vmem:[#allocation19 + $0x1e0] sm:$0xff]
        %v2977 = vld [vmem:[#allocation19 + $0x1e8] sm:$0xff]
        %v2978 = vld [vmem:[#allocation19 + $0x1f0] sm:$0xff]
        %v2979 = vld [vmem:[#allocation19 + $0x1f8] sm:$0xff]
        %v3044 = vunpack.c.l.b16 %v2916
        %v3045 = vunpack.c.h.b16 %v2916
        %v3046 = vunpack.c.l.b16 %v2917
        %v3047 = vunpack.c.h.b16 %v2917
        %v3048 = vunpack.c.l.b16 %v2918
        %v3049 = vunpack.c.h.b16 %v2918
        %v3050 = vunpack.c.l.b16 %v2919
        %v3051 = vunpack.c.h.b16 %v2919
        %v3052 = vunpack.c.l.b16 %v2920
        %v3053 = vunpack.c.h.b16 %v2920
        %v3054 = vunpack.c.l.b16 %v2921
        %v3055 = vunpack.c.h.b16 %v2921
        %v3056 = vunpack.c.l.b16 %v2922
        %v3057 = vunpack.c.h.b16 %v2922
        %v3058 = vunpack.c.l.b16 %v2923
        %v3059 = vunpack.c.h.b16 %v2923
        %v3060 = vunpack.c.l.b16 %v2924
        %v3061 = vunpack.c.h.b16 %v2924
        %v3062 = vunpack.c.l.b16 %v2925
        %v3063 = vunpack.c.h.b16 %v2925
        %v3064 = vunpack.c.l.b16 %v2926
        %v3065 = vunpack.c.h.b16 %v2926
        %v3066 = vunpack.c.l.b16 %v2927
        %v3067 = vunpack.c.h.b16 %v2927
        %v3068 = vunpack.c.l.b16 %v2928
        %v3069 = vunpack.c.h.b16 %v2928
        %v3070 = vunpack.c.l.b16 %v2929
        %v3071 = vunpack.c.h.b16 %v2929
        %v3072 = vunpack.c.l.b16 %v2930
        %v3073 = vunpack.c.h.b16 %v2930
        %v3074 = vunpack.c.l.b16 %v2931
        %v3075 = vunpack.c.h.b16 %v2931
        %v3076 = vunpack.c.l.b16 %v2932
        %v3077 = vunpack.c.h.b16 %v2932
        %v3078 = vunpack.c.l.b16 %v2933
        %v3079 = vunpack.c.h.b16 %v2933
        %v3080 = vunpack.c.l.b16 %v2934
        %v3081 = vunpack.c.h.b16 %v2934
        %v3082 = vunpack.c.l.b16 %v2935
        %v3083 = vunpack.c.h.b16 %v2935
        %v3084 = vunpack.c.l.b16 %v2936
        %v3085 = vunpack.c.h.b16 %v2936
        %v3086 = vunpack.c.l.b16 %v2937
        %v3087 = vunpack.c.h.b16 %v2937
        %v3088 = vunpack.c.l.b16 %v2938
        %v3089 = vunpack.c.h.b16 %v2938
        %v3090 = vunpack.c.l.b16 %v2939
        %v3091 = vunpack.c.h.b16 %v2939
        %v3092 = vunpack.c.l.b16 %v2940
        %v3093 = vunpack.c.h.b16 %v2940
        %v3094 = vunpack.c.l.b16 %v2941
        %v3095 = vunpack.c.h.b16 %v2941
        %v3096 = vunpack.c.l.b16 %v2942
        %v3097 = vunpack.c.h.b16 %v2942
        %v3098 = vunpack.c.l.b16 %v2943
        %v3099 = vunpack.c.h.b16 %v2943
        %v3100 = vunpack.c.l.b16 %v2944
        %v3101 = vunpack.c.h.b16 %v2944
        %v3102 = vunpack.c.l.b16 %v2945
        %v3103 = vunpack.c.h.b16 %v2945
        %v3104 = vunpack.c.l.b16 %v2946
        %v3105 = vunpack.c.h.b16 %v2946
        %v3106 = vunpack.c.l.b16 %v2947
        %v3107 = vunpack.c.h.b16 %v2947
        %v3108 = vunpack.c.l.b16 %v2948
        %v3109 = vunpack.c.h.b16 %v2948
        %v3110 = vunpack.c.l.b16 %v2949
        %v3111 = vunpack.c.h.b16 %v2949
        %v3112 = vunpack.c.l.b16 %v2950
        %v3113 = vunpack.c.h.b16 %v2950
        %v3114 = vunpack.c.l.b16 %v2951
        %v3115 = vunpack.c.h.b16 %v2951
        %v3116 = vunpack.c.l.b16 %v2952
        %v3117 = vunpack.c.h.b16 %v2952
        %v3118 = vunpack.c.l.b16 %v2953
        %v3119 = vunpack.c.h.b16 %v2953
        %v3120 = vunpack.c.l.b16 %v2954
        %v3121 = vunpack.c.h.b16 %v2954
        %v3122 = vunpack.c.l.b16 %v2955
        %v3123 = vunpack.c.h.b16 %v2955
        %v3124 = vunpack.c.l.b16 %v2956
        %v3125 = vunpack.c.h.b16 %v2956
        %v3126 = vunpack.c.l.b16 %v2957
        %v3127 = vunpack.c.h.b16 %v2957
        %v3128 = vunpack.c.l.b16 %v2958
        %v3129 = vunpack.c.h.b16 %v2958
        %v3130 = vunpack.c.l.b16 %v2959
        %v3131 = vunpack.c.h.b16 %v2959
        %v3132 = vunpack.c.l.b16 %v2960
        %v3133 = vunpack.c.h.b16 %v2960
        %v3134 = vunpack.c.l.b16 %v2961
        %v3135 = vunpack.c.h.b16 %v2961
        %v3136 = vunpack.c.l.b16 %v2962
        %v3137 = vunpack.c.h.b16 %v2962
        %v3138 = vunpack.c.l.b16 %v2963
        %v3139 = vunpack.c.h.b16 %v2963
        %v3140 = vunpack.c.l.b16 %v2964
        %v3141 = vunpack.c.h.b16 %v2964
        %v3142 = vunpack.c.l.b16 %v2965
        %v3143 = vunpack.c.h.b16 %v2965
        %v3144 = vunpack.c.l.b16 %v2966
        %v3145 = vunpack.c.h.b16 %v2966
        %v3146 = vunpack.c.l.b16 %v2967
        %v3147 = vunpack.c.h.b16 %v2967
        %v3148 = vunpack.c.l.b16 %v2968
        %v3149 = vunpack.c.h.b16 %v2968
        %v3150 = vunpack.c.l.b16 %v2969
        %v3151 = vunpack.c.h.b16 %v2969
        %v3152 = vunpack.c.l.b16 %v2970
        %v3153 = vunpack.c.h.b16 %v2970
        %v3154 = vunpack.c.l.b16 %v2971
        %v3155 = vunpack.c.h.b16 %v2971
        %v3156 = vunpack.c.l.b16 %v2972
        %v3157 = vunpack.c.h.b16 %v2972
        %v3158 = vunpack.c.l.b16 %v2973
        %v3159 = vunpack.c.h.b16 %v2973
        %v3160 = vunpack.c.l.b16 %v2974
        %v3161 = vunpack.c.h.b16 %v2974
        %v3162 = vunpack.c.l.b16 %v2975
        %v3163 = vunpack.c.h.b16 %v2975
        %v3164 = vunpack.c.l.b16 %v2976
        %v3165 = vunpack.c.h.b16 %v2976
        %v3166 = vunpack.c.l.b16 %v2977
        %v3167 = vunpack.c.h.b16 %v2977
        %v3168 = vunpack.c.l.b16 %v2978
        %v3169 = vunpack.c.h.b16 %v2978
        %v3170 = vunpack.c.l.b16 %v2979
        %v3171 = vunpack.c.h.b16 %v2979
        %v3172 = vpack.c.b16 %v3046, %v3044
        %v3173 = vpack.c.b16 %v3047, %v3045
        %v3174 = vpack.c.b16 %v3050, %v3048
        %v3175 = vpack.c.b16 %v3051, %v3049
        %v3176 = vpack.c.b16 %v3054, %v3052
        %v3177 = vpack.c.b16 %v3055, %v3053
        %v3178 = vpack.c.b16 %v3058, %v3056
        %v3179 = vpack.c.b16 %v3059, %v3057
        %v3180 = vpack.c.b16 %v3062, %v3060
        %v3181 = vpack.c.b16 %v3063, %v3061
        %v3182 = vpack.c.b16 %v3066, %v3064
        %v3183 = vpack.c.b16 %v3067, %v3065
        %v3184 = vpack.c.b16 %v3070, %v3068
        %v3185 = vpack.c.b16 %v3071, %v3069
        %v3186 = vpack.c.b16 %v3074, %v3072
        %v3187 = vpack.c.b16 %v3075, %v3073
        %v3188 = vpack.c.b16 %v3078, %v3076
        %v3189 = vpack.c.b16 %v3079, %v3077
        %v3190 = vpack.c.b16 %v3082, %v3080
        %v3191 = vpack.c.b16 %v3083, %v3081
        %v3192 = vpack.c.b16 %v3086, %v3084
        %v3193 = vpack.c.b16 %v3087, %v3085
        %v3194 = vpack.c.b16 %v3090, %v3088
        %v3195 = vpack.c.b16 %v3091, %v3089
        %v3196 = vpack.c.b16 %v3094, %v3092
        %v3197 = vpack.c.b16 %v3095, %v3093
        %v3198 = vpack.c.b16 %v3098, %v3096
        %v3199 = vpack.c.b16 %v3099, %v3097
        %v3200 = vpack.c.b16 %v3102, %v3100
        %v3201 = vpack.c.b16 %v3103, %v3101
        %v3202 = vpack.c.b16 %v3106, %v3104
        %v3203 = vpack.c.b16 %v3107, %v3105
        %v3204 = vpack.c.b16 %v3110, %v3108
        %v3205 = vpack.c.b16 %v3111, %v3109
        %v3206 = vpack.c.b16 %v3114, %v3112
        %v3207 = vpack.c.b16 %v3115, %v3113
        %v3208 = vpack.c.b16 %v3118, %v3116
        %v3209 = vpack.c.b16 %v3119, %v3117
        %v3210 = vpack.c.b16 %v3122, %v3120
        %v3211 = vpack.c.b16 %v3123, %v3121
        %v3212 = vpack.c.b16 %v3126, %v3124
        %v3213 = vpack.c.b16 %v3127, %v3125
        %v3214 = vpack.c.b16 %v3130, %v3128
        %v3215 = vpack.c.b16 %v3131, %v3129
        %v3216 = vpack.c.b16 %v3134, %v3132
        %v3217 = vpack.c.b16 %v3135, %v3133
        %v3218 = vpack.c.b16 %v3138, %v3136
        %v3219 = vpack.c.b16 %v3139, %v3137
        %v3220 = vpack.c.b16 %v3142, %v3140
        %v3221 = vpack.c.b16 %v3143, %v3141
        %v3222 = vpack.c.b16 %v3146, %v3144
        %v3223 = vpack.c.b16 %v3147, %v3145
        %v3224 = vpack.c.b16 %v3150, %v3148
        %v3225 = vpack.c.b16 %v3151, %v3149
        %v3226 = vpack.c.b16 %v3154, %v3152
        %v3227 = vpack.c.b16 %v3155, %v3153
        %v3228 = vpack.c.b16 %v3158, %v3156
        %v3229 = vpack.c.b16 %v3159, %v3157
        %v3230 = vpack.c.b16 %v3162, %v3160
        %v3231 = vpack.c.b16 %v3163, %v3161
        %v3232 = vpack.c.b16 %v3166, %v3164
        %v3233 = vpack.c.b16 %v3167, %v3165
        %v3234 = vpack.c.b16 %v3170, %v3168
        %v3235 = vpack.c.b16 %v3171, %v3169
        %3300 = vmatprep.subr.bf16.mxu0 %v3187
        %3301 = vmatpush1.bf16.msra.mxu0 %v3186
        %3302 = vmatprep.subr.bf16.mxu0 %v3185
        %3303 = vmatpush1.bf16.msra.mxu0 %v3184
        %3304 = vmatprep.subr.bf16.mxu0 %v3183
        %3305 = vmatpush1.bf16.msra.mxu0 %v3182
        %3306 = vmatprep.subr.bf16.mxu0 %v3181
        %3307 = vmatpush1.bf16.msra.mxu0 %v3180
        %3308 = vmatprep.subr.bf16.mxu0 %v3179
        %3309 = vmatpush1.bf16.msra.mxu0 %v3178
        %3310 = vmatprep.subr.bf16.mxu0 %v3177
        %3311 = vmatpush1.bf16.msra.mxu0 %v3176
        %3312 = vmatprep.subr.bf16.mxu0 %v3175
        %3313 = vmatpush1.bf16.msra.mxu0 %v3174
        %3314 = vmatprep.subr.bf16.mxu0 %v3173
        %3315 = vmatpush1.bf16.msra.mxu0 %v3172
        %3316 = vmatprep.subr.bf16.mxu0 %v3203
        %3317 = vmatpush2.bf16.msra.mxu0 %v3202
        %3318 = vmatprep.subr.bf16.mxu0 %v3201
        %3319 = vmatpush2.bf16.msra.mxu0 %v3200
        %3320 = vmatprep.subr.bf16.mxu0 %v3199
        %3321 = vmatpush2.bf16.msra.mxu0 %v3198
        %3322 = vmatprep.subr.bf16.mxu0 %v3197
        %3323 = vmatpush2.bf16.msra.mxu0 %v3196
        %3324 = vmatprep.subr.bf16.mxu0 %v3195
        %3325 = vmatpush2.bf16.msra.mxu0 %v3194
        %3326 = vmatprep.subr.bf16.mxu0 %v3193
        %3327 = vmatpush2.bf16.msra.mxu0 %v3192
        %3328 = vmatprep.subr.bf16.mxu0 %v3191
        %3329 = vmatpush2.bf16.msra.mxu0 %v3190
        %3330 = vmatprep.subr.bf16.mxu0 %v3189
        %3331 = vmatpush2.bf16.msra.mxu0 %v3188
        %3332 = vmatprep.mubr.bf16.mxu0 %v2913
        %3333 = vmatmul.mubr.bf16.gmra.mxu0 %v2912
        %v3334 = vpop.f32.mrf.mxu0
        %v3335 = vadd.f32 0.0, %v3334
        %v3336 = vpop.f32.mrf.mxu0
        %v3337 = vadd.f32 0.0, %v3336
        %v3338 = vpop.f32.mrf.mxu0
        %v3339 = vpop.f32.mrf.mxu0
        %3340 = vdwg.mxu0
        %3341 = vmatprep.subr.bf16.mxu0 %v3219
        %3342 = vmatpush1.bf16.msra.mxu0 %v3218
        %3343 = vmatprep.subr.bf16.mxu0 %v3217
        %3344 = vmatpush1.bf16.msra.mxu0 %v3216
        %3345 = vmatprep.subr.bf16.mxu0 %v3215
        %3346 = vmatpush1.bf16.msra.mxu0 %v3214
        %3347 = vmatprep.subr.bf16.mxu0 %v3213
        %3348 = vmatpush1.bf16.msra.mxu0 %v3212
        %3349 = vmatprep.subr.bf16.mxu0 %v3211
        %3350 = vmatpush1.bf16.msra.mxu0 %v3210
        %3351 = vmatprep.subr.bf16.mxu0 %v3209
        %3352 = vmatpush1.bf16.msra.mxu0 %v3208
        %3353 = vmatprep.subr.bf16.mxu0 %v3207
        %3354 = vmatpush1.bf16.msra.mxu0 %v3206
        %3355 = vmatprep.subr.bf16.mxu0 %v3205
        %3356 = vmatpush1.bf16.msra.mxu0 %v3204
        %3357 = vmatprep.subr.bf16.mxu0 %v3235
        %3358 = vmatpush2.bf16.msra.mxu0 %v3234
        %3359 = vmatprep.subr.bf16.mxu0 %v3233
        %3360 = vmatpush2.bf16.msra.mxu0 %v3232
        %3361 = vmatprep.subr.bf16.mxu0 %v3231
        %3362 = vmatpush2.bf16.msra.mxu0 %v3230
        %3363 = vmatprep.subr.bf16.mxu0 %v3229
        %3364 = vmatpush2.bf16.msra.mxu0 %v3228
        %3365 = vmatprep.subr.bf16.mxu0 %v3227
        %3366 = vmatpush2.bf16.msra.mxu0 %v3226
        %3367 = vmatprep.subr.bf16.mxu0 %v3225
        %3368 = vmatpush2.bf16.msra.mxu0 %v3224
        %3369 = vmatprep.subr.bf16.mxu0 %v3223
        %3370 = vmatpush2.bf16.msra.mxu0 %v3222
        %3371 = vmatprep.subr.bf16.mxu0 %v3221
        %3372 = vmatpush2.bf16.msra.mxu0 %v3220
        %3373 = vmatprep.mubr.bf16.mxu0 %v2915
        %3374 = vmatmul.mubr.bf16.gmra.mxu0 %v2914
        %v3375 = vpop.f32.mrf.mxu0
        %v3376 = vadd.f32 %v3335, %v3375
        %v3377 = vpop.f32.mrf.mxu0
        %v3378 = vadd.f32 %v3337, %v3377
        %v3379 = vpop.f32.mrf.mxu0
        %v3380 = vpop.f32.mrf.mxu0
        %3381 = vdwg.mxu0
        %v3382 = vadd.f32 %v1924, %v3376
        %v3383 = vadd.f32 %v1925, %v3378
        %3384 = vst [vmem:[%s662] sm:$0xff] %v3382
        %3385 = vst [vmem:[%s662 + $0x8] sm:$0xff] %v3383
        %s3386 = sand.u32 %s319, 1
        %s3387 = scalar_lea.sflag [#allocation6], %s3386
        %s3388 = sand.u32 %s319, 1
        %s3389 = smul.addr %s3388, 16
        %s3390 = scalar_lea.vmem [#allocation21], %s3389
        %s3391 = sand.u32 %s44, 1
        %s3392 = scalar_lea.sflag [#allocation23], %s3391
        %s3393 = sand.u32 %s345, 1
        %s3394 = smul.addr %s3393, 16
        %s3395 = scalar_lea.vmem [#allocation22], %s3394
        %s3396 = sand.u32 %s44, 1
        %s3397 = scalar_lea.sflag [#allocation23], %s3396
        %s3398 = sand.u32 %s371, 1
        %s3399 = smul.addr %s3398, 16
        %s3400 = scalar_lea.vmem [#allocation24], %s3399
        // Predicated region
        $region109: #{tpu_custom_call.1} parent=67 // pred_check
          %p3401 = pneg %p329
        $region110: #{tpu_custom_call.1} parent=67 // pred_check_branch
          %3403 = sbr.rel (%p3401) target = $region112
        $region111: #{tpu_custom_call.1} parent=67 // pred_region
          %s3405 = ssub.s32 256, 256
          %3406 = vsyncadd %s3387, %s3405
          %s3407 = smul.addr %s44, 2
          %s3408 = smul.addr %s3407, 128
          %s3409 = scalar_lea.hbm %s13, %s3408
          %s3411 = sshll.u32 %s3390, 4
          %s3412 = int_to_ptr.vmem [resolvable:$true] %s3411
          %3414 = dma.vmem_to_hbm [thread:$0]  %s3412, 256, %s3409, %s3387
        $region112: #{tpu_custom_call.1} parent=67 // pred_fallthru
          _
        // Predicated region
        $region113: #{tpu_custom_call.1} parent=67 // pred_check
          %p3415 = pneg %p355
        $region114: #{tpu_custom_call.1} parent=67 // pred_check_branch
          %3417 = sbr.rel (%p3415) target = $region116
        $region115: #{tpu_custom_call.1} parent=67 // pred_region
          %s3419 = ssub.s32 256, 256
          %3420 = vsyncadd %s3392, %s3419
          %s3421 = smul.addr %s44, 2
          %s3422 = smul.addr %s3421, 128
          %s3423 = scalar_lea.hbm %s14, %s3422
          %s3424 = sshll.u32 %s3395, 4
          %s3425 = int_to_ptr.vmem [resolvable:$true] %s3424
          %3430 = dma.vmem_to_hbm [thread:$0]  %s3425, 256, %s3423, %s3392, 128, 128, 8
        $region116: #{tpu_custom_call.1} parent=67 // pred_fallthru
          _
        // Predicated region
        $region117: #{tpu_custom_call.1} parent=67 // pred_check
          %p3431 = pneg %p381
        $region118: #{tpu_custom_call.1} parent=67 // pred_check_branch
          %3433 = sbr.rel (%p3431) target = $region120
        $region119: #{tpu_custom_call.1} parent=67 // pred_region
          %s3435 = ssub.s32 256, 256
          %3436 = vsyncadd %s3397, %s3435
          %s3437 = smul.addr %s44, 2
          %s3438 = smul.addr %s3437, 128
          %s3439 = scalar_lea.hbm %s15, %s3438
          %s3440 = sshll.u32 %s3400, 4
          %s3441 = int_to_ptr.vmem [resolvable:$true] %s3440
          %3446 = dma.vmem_to_hbm [thread:$0]  %s3441, 256, %s3439, %s3397, 128, 128, 8
        $region120: #{tpu_custom_call.1} parent=67 // pred_fallthru
          _
      $region68: #{tpu_custom_call.1} parent=5 // pred_fallthru
        _
      %p3447 = scmp.le.s32.totalorder 2, %s39
      // Predicated region
      $region121: #{tpu_custom_call.1} parent=5 // pred_check
        %p3448 = pneg %p3447
      $region122: #{tpu_custom_call.1} parent=5 // pred_check_branch
        %3450 = sbr.rel (%p3448) target = $region124
      $region123: #{tpu_custom_call.1} parent=5 // pred_region
        %s3451 = ssub.s32 %s39, 2
        // Predicated region
        $region125: #{tpu_custom_call.1} parent=123 // pred_check
          %p3452 = pneg %p335
        $region126: #{tpu_custom_call.1} parent=123 // pred_check_branch
          %3454 = sbr.rel (%p3452) target = $region128
        $region127: #{tpu_custom_call.1} parent=123 // pred_region
          %s3455 = sand.u32 %s320, 1
          %s3456 = scalar_lea.sflag [#allocation6], %s3455
          %s3457 = sand.u32 %s320, 1
          %s3458 = smul.addr %s3457, 16
          %s3459 = scalar_lea.vmem [#allocation21], %s3458
          %3460 = dma.done %s3456, 256
        $region128: #{tpu_custom_call.1} parent=123 // pred_fallthru
          _
        // Predicated region
        $region129: #{tpu_custom_call.1} parent=123 // pred_check
          %p3461 = pneg %p361
        $region130: #{tpu_custom_call.1} parent=123 // pred_check_branch
          %3463 = sbr.rel (%p3461) target = $region132
        $region131: #{tpu_custom_call.1} parent=123 // pred_region
          %s3464 = sand.u32 %s45, 1
          %s3465 = scalar_lea.sflag [#allocation23], %s3464
          %s3466 = sand.u32 %s346, 1
          %s3467 = smul.addr %s3466, 16
          %s3468 = scalar_lea.vmem [#allocation22], %s3467
          %3469 = dma.done %s3465, 256
        $region132: #{tpu_custom_call.1} parent=123 // pred_fallthru
          _
        // Predicated region
        $region133: #{tpu_custom_call.1} parent=123 // pred_check
          %p3470 = pneg %p387
        $region134: #{tpu_custom_call.1} parent=123 // pred_check_branch
          %3472 = sbr.rel (%p3470) target = $region136
        $region135: #{tpu_custom_call.1} parent=123 // pred_region
          %s3473 = sand.u32 %s45, 1
          %s3474 = scalar_lea.sflag [#allocation23], %s3473
          %s3475 = sand.u32 %s372, 1
          %s3476 = smul.addr %s3475, 16
          %s3477 = scalar_lea.vmem [#allocation24], %s3476
          %3478 = dma.done %s3474, 256
        $region136: #{tpu_custom_call.1} parent=123 // pred_fallthru
          _
      $region124: #{tpu_custom_call.1} parent=5 // pred_fallthru
        _
    $region6: #{tpu_custom_call.1} parent=1 // loop_footer
      %s43 = sadd.s32 1, %s39
    $region7: #{tpu_custom_call.1} parent=1 // loop_footer_branch
      %38 = sbr.rel target = $region3
    $region8: #{tpu_custom_call.1} parent=1 // loop_exit
      _
    %3479 = vsyncpa [#allocation5], 1
    %s3480 = scalar_lea.sflag [#allocation5], 1
    %3481 = vsyncpa %s3480, 1
    %3482 = vsyncpa [#allocation8], 1
    %s3483 = scalar_lea.sflag [#allocation8], 1
    %3484 = vsyncpa %s3483, 1
    %3485 = vsyncpa [#allocation11], 1
    %3486 = vsyncpa [#allocation14], 1
    %3487 = vsyncpa [#allocation17], 1
    %3488 = vsyncpa [#allocation20], 1
    %3489 = vsyncpa [#allocation6], 1
    %s3490 = scalar_lea.sflag [#allocation6], 1
    %3491 = vsyncpa %s3490, 1
    %3492 = vsyncpa [#allocation23], 1
    %s3493 = scalar_lea.sflag [#allocation23], 1
    %3494 = vsyncpa %s3493, 1

</llo_original>
